<compile_context>
chip_gen: v6e
topology: v6e:2x2x1
jax: 0.10.0
libtpu: 0.0.40
codegen_flags: <defaults>
</compile_context>

<pallas_src>
import functools

import jax
import jax.numpy as jnp
from jax.experimental import pallas as pl
from jax.experimental.pallas import tpu as pltpu


def generator_kernel(z_ref, w1_ref, b1_ref, w2_ref, b2_ref, w3_ref, b3_ref, o_ref):
    # z / weights arrive as bf16 (fast MXU path); accumulate in f32.
    h1 = jnp.dot(z_ref[...], w1_ref[...], preferred_element_type=jnp.float32)
    h1 = jnp.maximum(h1 + b1_ref[...], 0.0)                      # ReLU (f32 epilogue)
    h2 = jnp.dot(h1.astype(jnp.bfloat16), w2_ref[...],
                 preferred_element_type=jnp.float32)
    h2 = jnp.maximum(h2 + b2_ref[...], 0.0)                      # ReLU (f32 epilogue)
    h3 = jnp.dot(h2.astype(jnp.bfloat16), w3_ref[...],
                 preferred_element_type=jnp.float32)
    o_ref[...] = jnp.tanh(h3 + b3_ref[...]).astype(o_ref.dtype)  # Tanh (f32, EUP)


def _round_up(x, m):
    return (x + m - 1) // m * m


@functools.partial(jax.jit, static_argnames=("tm",))
def generator_forward(z, params, *, tm=None):
    """z: [N, latent_dim] float32. Returns [N, output_dim] float32."""
    w1, b1, w2, b2, w3, b3 = params
    n, latent_dim = z.shape
    out_dim = w3.shape[1]

    # Batch tile: big tiles when N is large (kernel is overhead/mem-bound);
    # for N > 512 this also yields >= 2 grid steps so v7x's 2nd TC is used.
    if tm is None:
        tm = 512 if n > 512 else max(8, _round_up(n, 8))
    tm = max(8, _round_up(tm, 8))

    n_pad = _round_up(n, tm)                       # pad batch to the tile
    out_pad = _round_up(max(out_dim, 128), 128)    # lane-dense output slab

    # Zero-pad the last layer to the lane-dense width (zeros -> tanh(bias) in the
    # padded columns, which are sliced off below; rows beyond N are zero-padded z).
    w3p = jnp.zeros((w3.shape[0], out_pad), w3.dtype).at[:, :out_dim].set(w3)
    b3p = jnp.zeros((1, out_pad), b3.dtype).at[:, :out_dim].set(b3)

    # bf16 MXU operands; biases stay f32 for the f32 epilogue.
    zb = z if n_pad == n else jnp.pad(z, ((0, n_pad - n), (0, 0)))
    zb = zb.astype(jnp.bfloat16)
    w1b = w1.astype(jnp.bfloat16)
    w2b = w2.astype(jnp.bfloat16)
    w3b = w3p.astype(jnp.bfloat16)

    grid = (n_pad // tm,)

    flops = 2 * n_pad * (latent_dim * 256 + 256 * 512 + 512 * out_pad)
    bytes_accessed = (
        zb.size * 2 + w1b.size * 2 + w2b.size * 2 + w3b.size * 2
        + b1.size * 4 + b2.size * 4 + b3p.size * 4 + n_pad * out_pad * 4
    )
    cost = pl.CostEstimate(
        flops=flops,
        transcendentals=n_pad * out_pad,   # tanh
        bytes_accessed=bytes_accessed,
    )

    def full(i):  # whole-array block, resident in VMEM across the grid
        return (0, 0)

    out = pl.pallas_call(
        generator_kernel,
        out_shape=jax.ShapeDtypeStruct((n_pad, out_pad), jnp.float32),
        grid_spec=pltpu.PrefetchScalarGridSpec(
            num_scalar_prefetch=0,
            grid=grid,
            in_specs=[
                pl.BlockSpec((tm, latent_dim), lambda i: (i, 0)),   # z tile (bf16)
                pl.BlockSpec(w1b.shape, full),                      # W1 (bf16)
                pl.BlockSpec(b1.shape, full),                       # b1 (f32)
                pl.BlockSpec(w2b.shape, full),                      # W2 (bf16)
                pl.BlockSpec(b2.shape, full),                       # b2 (f32)
                pl.BlockSpec(w3b.shape, full),                      # W3 padded (bf16)
                pl.BlockSpec(b3p.shape, full),                      # b3 padded (f32)
            ],
            out_specs=pl.BlockSpec((tm, out_pad), lambda i: (i, 0)),
        ),
        compiler_params=pltpu.CompilerParams(
            dimension_semantics=("parallel",),
        ),
        cost_estimate=cost,
    )(zb, w1b, b1, w2b, b2, w3b, b3p)

    # Drop batch and lane padding (fused into the jitted graph).
    return out[:n, :out_dim]


def init_params(key, latent_dim, output_dim):
    """Deterministic synthetic init (shapes match the PyTorch module)."""
    ks = jax.random.split(key, 6)

    def lin(kw, kb, fan_in, fan_out):
        # Kaiming-uniform-ish bound like torch.nn.Linear default init.
        bound = 1.0 / jnp.sqrt(fan_in)
        w = jax.random.uniform(kw, (fan_in, fan_out), jnp.float32, -bound, bound)
        b = jax.random.uniform(kb, (1, fan_out), jnp.float32, -bound, bound)
        return w, b

    w1, b1 = lin(ks[0], ks[1], latent_dim, 256)
    w2, b2 = lin(ks[2], ks[3], 256, 512)
    w3, b3 = lin(ks[4], ks[5], 512, output_dim)
    return (w1, b1, w2, b2, w3, b3)


def _ref_forward_bf16(z, params):
    """Pure-JAX reference with the same numerics as the kernel
    (bf16 matmul operands, f32 accumulation, f32 epilogue)."""
    w1, b1, w2, b2, w3, b3 = params
    zb = z.astype(jnp.bfloat16)
    h1 = jnp.dot(zb, w1.astype(jnp.bfloat16), preferred_element_type=jnp.float32)
    h1 = jnp.maximum(h1 + b1, 0.0)
    h2 = jnp.dot(h1.astype(jnp.bfloat16), w2.astype(jnp.bfloat16),
                 preferred_element_type=jnp.float32)
    h2 = jnp.maximum(h2 + b2, 0.0)
    h3 = jnp.dot(h2.astype(jnp.bfloat16), w3.astype(jnp.bfloat16),
                 preferred_element_type=jnp.float32)
    return jnp.tanh(h3 + b3)


if __name__ == "__main__":
    latent_dim = 32       # matches latent_dim in the reference script
    output_dim = 16       # stand-in for df.shape[1] (input_dim == output_dim)
    n_rows = 1000         # matches num_generated_rows (not a multiple of the tile)

    key = jax.random.PRNGKey(0)
    kz, kp = jax.random.split(key)
    z = jax.random.normal(kz, (n_rows, latent_dim), dtype=jnp.float32)
    params = init_params(kp, latent_dim, output_dim)

    out = generator_forward(z, params)
    jax.block_until_ready(out)
    assert out.shape == (n_rows, output_dim)
    assert bool(jnp.all(jnp.isfinite(out)))

    # Reference with matched (bf16-matmul / f32-accumulate) numerics: tight check.
    ref_bf16 = _ref_forward_bf16(z, params)
    assert jnp.allclose(out, ref_bf16, atol=1e-2, rtol=1e-2)

    # Full-f32 reference (the PyTorch module's numerics): loose check, since the
    # kernel uses bf16 MXU operands.
    w1, b1, w2, b2, w3, b3 = params
    ref_f32 = jnp.tanh(
        jnp.maximum(jnp.maximum(z @ w1 + b1, 0.0) @ w2 + b2, 0.0) @ w3 + b3
    )
    assert jnp.allclose(out, ref_f32, atol=6e-2, rtol=6e-2)

    print("KERNEL_OK")
</pallas_src>

<mosaic_0001>
module attributes {stable_mosaic.version = 11 : i64} {
  func.func @generator_kernel(%arg0: i32, %arg1: memref<512x32xbf16, #tpu.memory_space<vmem>>, %arg2: memref<32x256xbf16, #tpu.memory_space<vmem>>, %arg3: memref<1x256xf32, #tpu.memory_space<vmem>>, %arg4: memref<256x512xbf16, #tpu.memory_space<vmem>>, %arg5: memref<1x512xf32, #tpu.memory_space<vmem>>, %arg6: memref<512x128xbf16, #tpu.memory_space<vmem>>, %arg7: memref<1x128xf32, #tpu.memory_space<vmem>>, %arg8: memref<512x128xf32, #tpu.memory_space<vmem>>) attributes {dimension_semantics = [#tpu.dimension_semantics<parallel>], iteration_bounds = array<i64: 2>, scalar_prefetch = 0 : i64, scratch_operands = 0 : i64, tpu.core_type = #tpu.core_type<tc>, window_params = [{transform_indices = @transform_0, window_bounds = array<i64: 512, 32>}, {pipeline_mode = #tpu.pipeline_mode<synchronous>, transform_indices = @transform_1, window_bounds = array<i64: 32, 256>}, {pipeline_mode = #tpu.pipeline_mode<synchronous>, transform_indices = @transform_2, window_bounds = array<i64: 1, 256>}, {pipeline_mode = #tpu.pipeline_mode<synchronous>, transform_indices = @transform_3, window_bounds = array<i64: 256, 512>}, {pipeline_mode = #tpu.pipeline_mode<synchronous>, transform_indices = @transform_4, window_bounds = array<i64: 1, 512>}, {pipeline_mode = #tpu.pipeline_mode<synchronous>, transform_indices = @transform_5, window_bounds = array<i64: 512, 128>}, {pipeline_mode = #tpu.pipeline_mode<synchronous>, transform_indices = @transform_6, window_bounds = array<i64: 1, 128>}, {transform_indices = @transform_7, window_bounds = array<i64: 512, 128>}]} {
    %c0 = arith.constant 0 : index
    %c0_0 = arith.constant 0 : index
    %0 = vector.load %arg1[%c0, %c0_0] : memref<512x32xbf16, #tpu.memory_space<vmem>>, vector<512x32xbf16>
    %c0_1 = arith.constant 0 : index
    %c0_2 = arith.constant 0 : index
    %1 = vector.load %arg2[%c0_1, %c0_2] : memref<32x256xbf16, #tpu.memory_space<vmem>>, vector<32x256xbf16>
    %cst = arith.constant dense<0.000000e+00> : vector<512x256xf32>
    %2 = tpu.matmul %0, %1, %cst {dimension_numbers = #tpu.dot_dimension_numbers<[1], [0], [0], [1], [0, 0, 1, 1], [], []>} : vector<512x32xbf16>, vector<32x256xbf16>, vector<512x256xf32> -> vector<512x256xf32>
    %c0_3 = arith.constant 0 : index
    %c0_4 = arith.constant 0 : index
    %3 = vector.load %arg3[%c0_3, %c0_4] : memref<1x256xf32, #tpu.memory_space<vmem>>, vector<1x256xf32>
    %4 = vector.broadcast %3 : vector<1x256xf32> to vector<512x256xf32>
    %5 = arith.addf %2, %4 : vector<512x256xf32>
    %cst_5 = arith.constant 0.000000e+00 : f32
    %6 = vector.broadcast %cst_5 : f32 to vector<512x256xf32>
    %7 = arith.maximumf %5, %6 : vector<512x256xf32>
    %8 = arith.truncf %7 : vector<512x256xf32> to vector<512x256xbf16>
    %c0_6 = arith.constant 0 : index
    %c0_7 = arith.constant 0 : index
    %9 = vector.load %arg4[%c0_6, %c0_7] : memref<256x512xbf16, #tpu.memory_space<vmem>>, vector<256x512xbf16>
    %cst_8 = arith.constant dense<0.000000e+00> : vector<512x512xf32>
    %10 = tpu.matmul %8, %9, %cst_8 {dimension_numbers = #tpu.dot_dimension_numbers<[1], [0], [0], [1], [0, 0, 1, 1], [], []>} : vector<512x256xbf16>, vector<256x512xbf16>, vector<512x512xf32> -> vector<512x512xf32>
    %c0_9 = arith.constant 0 : index
    %c0_10 = arith.constant 0 : index
    %11 = vector.load %arg5[%c0_9, %c0_10] : memref<1x512xf32, #tpu.memory_space<vmem>>, vector<1x512xf32>
    %12 = vector.broadcast %11 : vector<1x512xf32> to vector<512x512xf32>
    %13 = arith.addf %10, %12 : vector<512x512xf32>
    %cst_11 = arith.constant 0.000000e+00 : f32
    %14 = vector.broadcast %cst_11 : f32 to vector<512x512xf32>
    %15 = arith.maximumf %13, %14 : vector<512x512xf32>
    %16 = arith.truncf %15 : vector<512x512xf32> to vector<512x512xbf16>
    %c0_12 = arith.constant 0 : index
    %c0_13 = arith.constant 0 : index
    %17 = vector.load %arg6[%c0_12, %c0_13] : memref<512x128xbf16, #tpu.memory_space<vmem>>, vector<512x128xbf16>
    %cst_14 = arith.constant dense<0.000000e+00> : vector<512x128xf32>
    %18 = tpu.matmul %16, %17, %cst_14 {dimension_numbers = #tpu.dot_dimension_numbers<[1], [0], [0], [1], [0, 0, 1, 1], [], []>} : vector<512x512xbf16>, vector<512x128xbf16>, vector<512x128xf32> -> vector<512x128xf32>
    %c0_15 = arith.constant 0 : index
    %c0_16 = arith.constant 0 : index
    %19 = vector.load %arg7[%c0_15, %c0_16] : memref<1x128xf32, #tpu.memory_space<vmem>>, vector<1x128xf32>
    %20 = vector.broadcast %19 : vector<1x128xf32> to vector<512x128xf32>
    %21 = arith.addf %18, %20 : vector<512x128xf32>
    %22 = math.tanh %21 : vector<512x128xf32>
    %c0_17 = arith.constant 0 : index
    %c0_18 = arith.constant 0 : index
    %23 = vector.load %arg8[%c0_17, %c0_18] : memref<512x128xf32, #tpu.memory_space<vmem>>, vector<512x128xf32>
    tpu.vector_store %arg8[%c0_17, %c0_18], %22 {strides = array<i32>} : memref<512x128xf32, #tpu.memory_space<vmem>>, vector<512x128xf32>,
    return
  }
  func.func @transform_0(%arg0: i32) -> (i32, i32) {
    %c0_i32 = arith.constant 0 : i32
    %c0_i32_0 = arith.constant 0 : i32
    return %arg0, %c0_i32 : i32, i32
  }
  func.func @transform_1(%arg0: i32) -> (i32, i32) {
    %c0_i32 = arith.constant 0 : i32
    %c0_i32_0 = arith.constant 0 : i32
    %c0_i32_1 = arith.constant 0 : i32
    return %c0_i32, %c0_i32_0 : i32, i32
  }
  func.func @transform_2(%arg0: i32) -> (i32, i32) {
    %c0_i32 = arith.constant 0 : i32
    %c0_i32_0 = arith.constant 0 : i32
    %c0_i32_1 = arith.constant 0 : i32
    return %c0_i32, %c0_i32_0 : i32, i32
  }
  func.func @transform_3(%arg0: i32) -> (i32, i32) {
    %c0_i32 = arith.constant 0 : i32
    %c0_i32_0 = arith.constant 0 : i32
    %c0_i32_1 = arith.constant 0 : i32
    return %c0_i32, %c0_i32_0 : i32, i32
  }
  func.func @transform_4(%arg0: i32) -> (i32, i32) {
    %c0_i32 = arith.constant 0 : i32
    %c0_i32_0 = arith.constant 0 : i32
    %c0_i32_1 = arith.constant 0 : i32
    return %c0_i32, %c0_i32_0 : i32, i32
  }
  func.func @transform_5(%arg0: i32) -> (i32, i32) {
    %c0_i32 = arith.constant 0 : i32
    %c0_i32_0 = arith.constant 0 : i32
    %c0_i32_1 = arith.constant 0 : i32
    return %c0_i32, %c0_i32_0 : i32, i32
  }
  func.func @transform_6(%arg0: i32) -> (i32, i32) {
    %c0_i32 = arith.constant 0 : i32
    %c0_i32_0 = arith.constant 0 : i32
    %c0_i32_1 = arith.constant 0 : i32
    return %c0_i32, %c0_i32_0 : i32, i32
  }
  func.func @transform_7(%arg0: i32) -> (i32, i32) {
    %c0_i32 = arith.constant 0 : i32
    %c0_i32_0 = arith.constant 0 : i32
    return %arg0, %c0_i32 : i32, i32
  }
}

</mosaic_0001>

<llo_original>
// kernel: generator_forward.1
$region0: #{generator_forward.1}
  #allocation0 [shape = 'u32[]', space=smem, size = 0x4, offset = 0x4, fixed_abs, tag = 'smem constant byte address 0x4 - core index']
  #allocation1 [shape = 'u32[144,128]{1,0:T(1,128)}', space=vmem, size = 0x12000, scoped, tag = 'internal scratch']
  %s0 = inlined_call_operand.vmem [shape: bf16[1024,32], index: 0, kind: input, shape index: {}]
  %s1 = inlined_call_operand.vmem [shape: bf16[32,256], index: 1, kind: input, shape index: {}]
  %s2 = inlined_call_operand.vmem [shape: f32[1,256], index: 2, kind: input, shape index: {}]
  %s3 = inlined_call_operand.vmem [shape: bf16[256,512], index: 3, kind: input, shape index: {}]
  %s4 = inlined_call_operand.vmem [shape: f32[1,512], index: 4, kind: input, shape index: {}]
  %s5 = inlined_call_operand.vmem [shape: bf16[512,128], index: 5, kind: input, shape index: {}]
  %s6 = inlined_call_operand.vmem [shape: f32[1,128], index: 6, kind: input, shape index: {}]
  %s7 = inlined_call_operand.vmem [shape: f32[1024,128], index: 7, kind: output, shape index: {}]
  %s8 = sld [smem:[#allocation0]]
  $region61: #{generator_forward.1} parent=0
    _
  %s10 = ssub.s32 1, %s8
  %s11 = scalar_select 0, %s10, %s8
  loop: start=0, step=1, limit=4
  $region2: #{generator_forward.1} parent=0 // loop_pre_header
    _
  $region3: #{generator_forward.1} parent=0 // loop_header
    %s13 = sphi 0, %s17
    %p14 = scmp.ge.s32.totalorder %s13, 4
    %s23 = sphi 0, %s25
    %s26 = sphi 0, %s23
    %s27 = sphi 0, %s26
    %s43 = sphi 0, %s27
    %s47 = sphi 0, %s47
    %s49 = sphi 0, %s47
    %s50 = sphi 0, %s49
    %s64 = sphi 0, %s50
    %s68 = sphi 0, %s68
    %s70 = sphi 0, %s68
    %s71 = sphi 0, %s70
    %s85 = sphi 0, %s71
    %s89 = sphi 0, %s89
    %s91 = sphi 0, %s89
    %s92 = sphi 0, %s91
    %s106 = sphi 0, %s92
    %s110 = sphi 0, %s110
    %s112 = sphi 0, %s110
    %s113 = sphi 0, %s112
    %s127 = sphi 0, %s113
    %s131 = sphi 0, %s131
    %s133 = sphi 0, %s131
    %s134 = sphi 0, %s133
    %s148 = sphi 0, %s134
    %s152 = sphi 0, %s152
    %s154 = sphi 0, %s152
    %s155 = sphi 0, %s154
    %s169 = sphi 0, %s155
    %s175 = sphi 0, %s177
    %s178 = sphi 0, %s175
    %s179 = sphi 0, %s178
    %s195 = sphi 0, %s179
  $region4: #{generator_forward.1} parent=0 // loop_header_branch
    %16 = sbr.rel (%p14) target = $region8
  $region5: #{generator_forward.1} parent=0 // loop_body
    %s18 = ssub.s32 %s13, 1
    %s19 = ssub.s32 %s13, 2
    %s20 = sadd.s32 %s13, 1
    %s21 = ssub.s32 %s13, %s20
    %p22 = scmp.eq.s32.totalorder %s21, 0
    %s24 = sadd.s32 %s23, 1
    %s25 = scalar_select %p22, %s23, %s24
    %p28 = pneg %p22
    %p29 = scmp.eq.s32.totalorder %s13, 1
    %p30 = por %p28, %p29
    %p31 = scmp.ne.s32.totalorder %s23, %s26
    %p32 = scmp.eq.s32.totalorder %s13, 0
    %p33 = por %p31, %p32
    %p34 = scmp.ne.s32.totalorder %s23, %s26
    %p35 = scmp.eq.s32.totalorder %s18, 1
    %p36 = por %p34, %p35
    %p37 = scmp.ne.s32.totalorder %s26, %s27
    %p38 = scmp.eq.s32.totalorder %s18, 0
    %p39 = por %p37, %p38
    %p40 = scmp.ne.s32.totalorder %s26, %s27
    %p41 = scmp.eq.s32.totalorder %s19, 1
    %p42 = por %p40, %p41
    %p44 = scmp.ne.s32.totalorder %s27, %s43
    %p45 = scmp.eq.s32.totalorder %s19, 0
    %p46 = por %p44, %p45
    %s48 = sadd.s32 %s47, 1
    %p51 = scmp.eq.s32.totalorder %s13, 1
    %p52 = scmp.ne.s32.totalorder %s47, %s49
    %p53 = scmp.eq.s32.totalorder %s13, 0
    %p54 = por %p52, %p53
    %p55 = scmp.ne.s32.totalorder %s47, %s49
    %p56 = scmp.eq.s32.totalorder %s18, 1
    %p57 = por %p55, %p56
    %p58 = scmp.ne.s32.totalorder %s49, %s50
    %p59 = scmp.eq.s32.totalorder %s18, 0
    %p60 = por %p58, %p59
    %p61 = scmp.ne.s32.totalorder %s49, %s50
    %p62 = scmp.eq.s32.totalorder %s19, 1
    %p63 = por %p61, %p62
    %p65 = scmp.ne.s32.totalorder %s50, %s64
    %p66 = scmp.eq.s32.totalorder %s19, 0
    %p67 = por %p65, %p66
    %s69 = sadd.s32 %s68, 1
    %p72 = scmp.eq.s32.totalorder %s13, 1
    %p73 = scmp.ne.s32.totalorder %s68, %s70
    %p74 = scmp.eq.s32.totalorder %s13, 0
    %p75 = por %p73, %p74
    %p76 = scmp.ne.s32.totalorder %s68, %s70
    %p77 = scmp.eq.s32.totalorder %s18, 1
    %p78 = por %p76, %p77
    %p79 = scmp.ne.s32.totalorder %s70, %s71
    %p80 = scmp.eq.s32.totalorder %s18, 0
    %p81 = por %p79, %p80
    %p82 = scmp.ne.s32.totalorder %s70, %s71
    %p83 = scmp.eq.s32.totalorder %s19, 1
    %p84 = por %p82, %p83
    %p86 = scmp.ne.s32.totalorder %s71, %s85
    %p87 = scmp.eq.s32.totalorder %s19, 0
    %p88 = por %p86, %p87
    %s90 = sadd.s32 %s89, 1
    %p93 = scmp.eq.s32.totalorder %s13, 1
    %p94 = scmp.ne.s32.totalorder %s89, %s91
    %p95 = scmp.eq.s32.totalorder %s13, 0
    %p96 = por %p94, %p95
    %p97 = scmp.ne.s32.totalorder %s89, %s91
    %p98 = scmp.eq.s32.totalorder %s18, 1
    %p99 = por %p97, %p98
    %p100 = scmp.ne.s32.totalorder %s91, %s92
    %p101 = scmp.eq.s32.totalorder %s18, 0
    %p102 = por %p100, %p101
    %p103 = scmp.ne.s32.totalorder %s91, %s92
    %p104 = scmp.eq.s32.totalorder %s19, 1
    %p105 = por %p103, %p104
    %p107 = scmp.ne.s32.totalorder %s92, %s106
    %p108 = scmp.eq.s32.totalorder %s19, 0
    %p109 = por %p107, %p108
    %s111 = sadd.s32 %s110, 1
    %p114 = scmp.eq.s32.totalorder %s13, 1
    %p115 = scmp.ne.s32.totalorder %s110, %s112
    %p116 = scmp.eq.s32.totalorder %s13, 0
    %p117 = por %p115, %p116
    %p118 = scmp.ne.s32.totalorder %s110, %s112
    %p119 = scmp.eq.s32.totalorder %s18, 1
    %p120 = por %p118, %p119
    %p121 = scmp.ne.s32.totalorder %s112, %s113
    %p122 = scmp.eq.s32.totalorder %s18, 0
    %p123 = por %p121, %p122
    %p124 = scmp.ne.s32.totalorder %s112, %s113
    %p125 = scmp.eq.s32.totalorder %s19, 1
    %p126 = por %p124, %p125
    %p128 = scmp.ne.s32.totalorder %s113, %s127
    %p129 = scmp.eq.s32.totalorder %s19, 0
    %p130 = por %p128, %p129
    %s132 = sadd.s32 %s131, 1
    %p135 = scmp.eq.s32.totalorder %s13, 1
    %p136 = scmp.ne.s32.totalorder %s131, %s133
    %p137 = scmp.eq.s32.totalorder %s13, 0
    %p138 = por %p136, %p137
    %p139 = scmp.ne.s32.totalorder %s131, %s133
    %p140 = scmp.eq.s32.totalorder %s18, 1
    %p141 = por %p139, %p140
    %p142 = scmp.ne.s32.totalorder %s133, %s134
    %p143 = scmp.eq.s32.totalorder %s18, 0
    %p144 = por %p142, %p143
    %p145 = scmp.ne.s32.totalorder %s133, %s134
    %p146 = scmp.eq.s32.totalorder %s19, 1
    %p147 = por %p145, %p146
    %p149 = scmp.ne.s32.totalorder %s134, %s148
    %p150 = scmp.eq.s32.totalorder %s19, 0
    %p151 = por %p149, %p150
    %s153 = sadd.s32 %s152, 1
    %p156 = scmp.eq.s32.totalorder %s13, 1
    %p157 = scmp.ne.s32.totalorder %s152, %s154
    %p158 = scmp.eq.s32.totalorder %s13, 0
    %p159 = por %p157, %p158
    %p160 = scmp.ne.s32.totalorder %s152, %s154
    %p161 = scmp.eq.s32.totalorder %s18, 1
    %p162 = por %p160, %p161
    %p163 = scmp.ne.s32.totalorder %s154, %s155
    %p164 = scmp.eq.s32.totalorder %s18, 0
    %p165 = por %p163, %p164
    %p166 = scmp.ne.s32.totalorder %s154, %s155
    %p167 = scmp.eq.s32.totalorder %s19, 1
    %p168 = por %p166, %p167
    %p170 = scmp.ne.s32.totalorder %s155, %s169
    %p171 = scmp.eq.s32.totalorder %s19, 0
    %p172 = por %p170, %p171
    %s173 = ssub.s32 %s13, %s20
    %p174 = scmp.eq.s32.totalorder %s173, 0
    %s176 = sadd.s32 %s175, 1
    %s177 = scalar_select %p174, %s175, %s176
    %p180 = pneg %p174
    %p181 = scmp.eq.s32.totalorder %s13, 1
    %p182 = por %p180, %p181
    %p183 = scmp.ne.s32.totalorder %s175, %s178
    %p184 = scmp.eq.s32.totalorder %s13, 0
    %p185 = por %p183, %p184
    %p186 = scmp.ne.s32.totalorder %s175, %s178
    %p187 = scmp.eq.s32.totalorder %s18, 1
    %p188 = por %p186, %p187
    %p189 = scmp.ne.s32.totalorder %s178, %s179
    %p190 = scmp.eq.s32.totalorder %s18, 0
    %p191 = por %p189, %p190
    %p192 = scmp.ne.s32.totalorder %s178, %s179
    %p193 = scmp.eq.s32.totalorder %s19, 1
    %p194 = por %p192, %p193
    %p196 = scmp.ne.s32.totalorder %s179, %s195
    %p197 = scmp.eq.s32.totalorder %s19, 0
    %p198 = por %p196, %p197
    %p199 = scmp.le.s32.totalorder 1, %s13
    %p200 = scmp.lt.s32.totalorder %s13, 3
    %p201 = pnand %p199, %p200
    %p202 = pneg %p201
    // Predicated region
    $region9: #{generator_forward.1} parent=5 // pred_check
      _
    $region10: #{generator_forward.1} parent=5 // pred_check_branch
      %204 = sbr.rel (%p201) target = $region12
    $region11: #{generator_forward.1} parent=5 // pred_region
      %s205 = ssub.s32 %s13, 1
      // Predicated region
      $region13: #{generator_forward.1} parent=11 // pred_check
        %p206 = pneg %p60
      $region14: #{generator_forward.1} parent=11 // pred_check_branch
        %208 = sbr.rel (%p206) target = $region16
      $region15: #{generator_forward.1} parent=11 // pred_region
        _
      $region16: #{generator_forward.1} parent=11 // pred_fallthru
        _
      // Predicated region
      $region17: #{generator_forward.1} parent=11 // pred_check
        %p209 = pneg %p81
      $region18: #{generator_forward.1} parent=11 // pred_check_branch
        %211 = sbr.rel (%p209) target = $region20
      $region19: #{generator_forward.1} parent=11 // pred_region
        _
      $region20: #{generator_forward.1} parent=11 // pred_fallthru
        _
      // Predicated region
      $region21: #{generator_forward.1} parent=11 // pred_check
        %p212 = pneg %p102
      $region22: #{generator_forward.1} parent=11 // pred_check_branch
        %214 = sbr.rel (%p212) target = $region24
      $region23: #{generator_forward.1} parent=11 // pred_region
        _
      $region24: #{generator_forward.1} parent=11 // pred_fallthru
        _
      // Predicated region
      $region25: #{generator_forward.1} parent=11 // pred_check
        %p215 = pneg %p123
      $region26: #{generator_forward.1} parent=11 // pred_check_branch
        %217 = sbr.rel (%p215) target = $region28
      $region27: #{generator_forward.1} parent=11 // pred_region
        _
      $region28: #{generator_forward.1} parent=11 // pred_fallthru
        _
      // Predicated region
      $region29: #{generator_forward.1} parent=11 // pred_check
        %p218 = pneg %p144
      $region30: #{generator_forward.1} parent=11 // pred_check_branch
        %220 = sbr.rel (%p218) target = $region32
      $region31: #{generator_forward.1} parent=11 // pred_region
        _
      $region32: #{generator_forward.1} parent=11 // pred_fallthru
        _
      // Predicated region
      $region33: #{generator_forward.1} parent=11 // pred_check
        %p221 = pneg %p165
      $region34: #{generator_forward.1} parent=11 // pred_check_branch
        %223 = sbr.rel (%p221) target = $region36
      $region35: #{generator_forward.1} parent=11 // pred_region
        _
      $region36: #{generator_forward.1} parent=11 // pred_fallthru
        _
    $region12: #{generator_forward.1} parent=5 // pred_fallthru
      _
    %p224 = scmp.lt.s32.totalorder %s13, 2
    // Predicated region
    $region37: #{generator_forward.1} parent=5 // pred_check
      %p225 = pneg %p224
    $region38: #{generator_forward.1} parent=5 // pred_check_branch
      %227 = sbr.rel (%p225) target = $region40
    $region39: #{generator_forward.1} parent=5 // pred_region
      // Predicated region
      $region41: #{generator_forward.1} parent=39 // pred_check
        %p228 = pneg %p33
      $region42: #{generator_forward.1} parent=39 // pred_check_branch
        %230 = sbr.rel (%p228) target = $region44
      $region43: #{generator_forward.1} parent=39 // pred_region
        %s231 = smul.u32 64, %s13
        %p232 = scmp.lt.s32.totalorder %s231, 127
        %s233 = scalar_select %p232, %s231, 127
        %s234 = smul.addr %s233, 4
        %s235 = scalar_lea.vmem %s0, %s234
        %s236 = smul.u32 64, %s13
      $region44: #{generator_forward.1} parent=39 // pred_fallthru
        _
    $region40: #{generator_forward.1} parent=5 // pred_fallthru
      _
    %p237 = scmp.le.s32.totalorder 1, %s13
    %p238 = scmp.lt.s32.totalorder %s13, 3
    %p239 = pnand %p237, %p238
    %p240 = pneg %p239
    // Predicated region
    $region45: #{generator_forward.1} parent=5 // pred_check
      _
    $region46: #{generator_forward.1} parent=5 // pred_check_branch
      %242 = sbr.rel (%p239) target = $region48
    $region47: #{generator_forward.1} parent=5 // pred_region
      %s243 = ssub.s32 %s13, 1
      %s244 = smul.u32 64, %s18
      %p245 = scmp.lt.s32.totalorder %s244, 127
      %s246 = scalar_select %p245, %s244, 127
      %s247 = smul.addr %s246, 4
      %s248 = scalar_lea.vmem %s0, %s247
      %p249 = pneg %p39
      %p250 = pneg %p36
      %p251 = pneg %p60
      %p252 = pneg %p57
      %p253 = pneg %p81
      %p254 = pneg %p78
      %p255 = pneg %p102
      %p256 = pneg %p99
      %p257 = pneg %p123
      %p258 = pneg %p120
      %p259 = pneg %p144
      %p260 = pneg %p141
      %p261 = pneg %p165
      %p262 = pneg %p162
      %p263 = pneg %p191
      %p264 = pneg %p188
      %s265 = smul.u32 64, %s18
      %p266 = scmp.lt.s32.totalorder %s265, 127
      %s267 = scalar_select %p266, %s265, 127
      %s268 = smul.addr %s267, 8
      %s269 = scalar_lea.vmem %s7, %s268
      %s270 = smul.u32 64, %s18
      %p271 = scmp.lt.s32.totalorder %s270, 127
      %s272 = scalar_select %p271, %s270, 127
      %s273 = smul.addr %s272, 4
      %s274 = scalar_lea.vmem %s0, %s273
      %s275 = smul.u32 64, %s18
      %s276 = smul.u32 64, %s18
      %p277 = scmp.lt.s32.totalorder %s276, 127
      %s278 = scalar_select %p277, %s276, 127
      %s279 = smul.addr %s278, 8
      %s280 = scalar_lea.vmem %s7, %s279
      %s281 = smul.u32 64, %s18
      %v283 = vld [vmem:[%s274] sm:$0xf]
      %v284 = vld [vmem:[%s274 + $0x4] sm:$0xf]
      %v285 = vld [vmem:[%s274 + $0x8] sm:$0xf]
      %v286 = vld [vmem:[%s274 + $0xc] sm:$0xf]
      %v287 = vld [vmem:[%s274 + $0x10] sm:$0xf]
      %v288 = vld [vmem:[%s274 + $0x14] sm:$0xf]
      %v289 = vld [vmem:[%s274 + $0x18] sm:$0xf]
      %v290 = vld [vmem:[%s274 + $0x1c] sm:$0xf]
      %v291 = vld [vmem:[%s274 + $0x20] sm:$0xf]
      %v292 = vld [vmem:[%s274 + $0x24] sm:$0xf]
      %v293 = vld [vmem:[%s274 + $0x28] sm:$0xf]
      %v294 = vld [vmem:[%s274 + $0x2c] sm:$0xf]
      %v295 = vld [vmem:[%s274 + $0x30] sm:$0xf]
      %v296 = vld [vmem:[%s274 + $0x34] sm:$0xf]
      %v297 = vld [vmem:[%s274 + $0x38] sm:$0xf]
      %v298 = vld [vmem:[%s274 + $0x3c] sm:$0xf]
      %v299 = vld [vmem:[%s274 + $0x40] sm:$0xf]
      %v300 = vld [vmem:[%s274 + $0x44] sm:$0xf]
      %v301 = vld [vmem:[%s274 + $0x48] sm:$0xf]
      %v302 = vld [vmem:[%s274 + $0x4c] sm:$0xf]
      %v303 = vld [vmem:[%s274 + $0x50] sm:$0xf]
      %v304 = vld [vmem:[%s274 + $0x54] sm:$0xf]
      %v305 = vld [vmem:[%s274 + $0x58] sm:$0xf]
      %v306 = vld [vmem:[%s274 + $0x5c] sm:$0xf]
      %v307 = vld [vmem:[%s274 + $0x60] sm:$0xf]
      %v308 = vld [vmem:[%s274 + $0x64] sm:$0xf]
      %v309 = vld [vmem:[%s274 + $0x68] sm:$0xf]
      %v310 = vld [vmem:[%s274 + $0x6c] sm:$0xf]
      %v311 = vld [vmem:[%s274 + $0x70] sm:$0xf]
      %v312 = vld [vmem:[%s274 + $0x74] sm:$0xf]
      %v313 = vld [vmem:[%s274 + $0x78] sm:$0xf]
      %v314 = vld [vmem:[%s274 + $0x7c] sm:$0xf]
      %v315 = vld [vmem:[%s274 + $0x80] sm:$0xf]
      %v316 = vld [vmem:[%s274 + $0x84] sm:$0xf]
      %v317 = vld [vmem:[%s274 + $0x88] sm:$0xf]
      %v318 = vld [vmem:[%s274 + $0x8c] sm:$0xf]
      %v319 = vld [vmem:[%s274 + $0x90] sm:$0xf]
      %v320 = vld [vmem:[%s274 + $0x94] sm:$0xf]
      %v321 = vld [vmem:[%s274 + $0x98] sm:$0xf]
      %v322 = vld [vmem:[%s274 + $0x9c] sm:$0xf]
      %v323 = vld [vmem:[%s274 + $0xa0] sm:$0xf]
      %v324 = vld [vmem:[%s274 + $0xa4] sm:$0xf]
      %v325 = vld [vmem:[%s274 + $0xa8] sm:$0xf]
      %v326 = vld [vmem:[%s274 + $0xac] sm:$0xf]
      %v327 = vld [vmem:[%s274 + $0xb0] sm:$0xf]
      %v328 = vld [vmem:[%s274 + $0xb4] sm:$0xf]
      %v329 = vld [vmem:[%s274 + $0xb8] sm:$0xf]
      %v330 = vld [vmem:[%s274 + $0xbc] sm:$0xf]
      %v331 = vld [vmem:[%s274 + $0xc0] sm:$0xf]
      %v332 = vld [vmem:[%s274 + $0xc4] sm:$0xf]
      %v333 = vld [vmem:[%s274 + $0xc8] sm:$0xf]
      %v334 = vld [vmem:[%s274 + $0xcc] sm:$0xf]
      %v335 = vld [vmem:[%s274 + $0xd0] sm:$0xf]
      %v336 = vld [vmem:[%s274 + $0xd4] sm:$0xf]
      %v337 = vld [vmem:[%s274 + $0xd8] sm:$0xf]
      %v338 = vld [vmem:[%s274 + $0xdc] sm:$0xf]
      %v339 = vld [vmem:[%s274 + $0xe0] sm:$0xf]
      %v340 = vld [vmem:[%s274 + $0xe4] sm:$0xf]
      %v341 = vld [vmem:[%s274 + $0xe8] sm:$0xf]
      %v342 = vld [vmem:[%s274 + $0xec] sm:$0xf]
      %v343 = vld [vmem:[%s274 + $0xf0] sm:$0xf]
      %v344 = vld [vmem:[%s274 + $0xf4] sm:$0xf]
      %v345 = vld [vmem:[%s274 + $0xf8] sm:$0xf]
      %v346 = vld [vmem:[%s274 + $0xfc] sm:$0xf]
      %v347 = vld [vmem:[%s1] sm:$0xff]
      %v348 = vld [vmem:[%s1 + $0x8] sm:$0xff]
      %v349 = vld [vmem:[%s1 + $0x10] sm:$0xff]
      %v350 = vld [vmem:[%s1 + $0x18] sm:$0xff]
      %v351 = vld [vmem:[%s2] sm:$0x3]
      %v353 = vlaneseq
      %v354 = vshrl.u32 %v353, 7
      %v355 = vsub.s32 0, %v354
      %v356 = vrot.slane %v351, %v355
      %v357 = vlaneseq
      %v358 = vshrl.u32 %v357, 7
      %v359 = vsub.s32 1, %v358
      %v360 = vrot.slane %v351, %v359
      %v427 = vunpack.c.l.b16 %v283
      %v428 = vunpack.c.l.b16 %v284
      %v429 = vunpack.c.l.b16 %v285
      %v430 = vunpack.c.l.b16 %v286
      %v431 = vunpack.c.l.b16 %v287
      %v432 = vunpack.c.l.b16 %v288
      %v433 = vunpack.c.l.b16 %v289
      %v434 = vunpack.c.l.b16 %v290
      %v435 = vunpack.c.l.b16 %v291
      %v436 = vunpack.c.l.b16 %v292
      %v437 = vunpack.c.l.b16 %v293
      %v438 = vunpack.c.l.b16 %v294
      %v439 = vunpack.c.l.b16 %v295
      %v440 = vunpack.c.l.b16 %v296
      %v441 = vunpack.c.l.b16 %v297
      %v442 = vunpack.c.l.b16 %v298
      %v443 = vunpack.c.l.b16 %v299
      %v444 = vunpack.c.l.b16 %v300
      %v445 = vunpack.c.l.b16 %v301
      %v446 = vunpack.c.l.b16 %v302
      %v447 = vunpack.c.l.b16 %v303
      %v448 = vunpack.c.l.b16 %v304
      %v449 = vunpack.c.l.b16 %v305
      %v450 = vunpack.c.l.b16 %v306
      %v451 = vunpack.c.l.b16 %v307
      %v452 = vunpack.c.l.b16 %v308
      %v453 = vunpack.c.l.b16 %v309
      %v454 = vunpack.c.l.b16 %v310
      %v455 = vunpack.c.l.b16 %v311
      %v456 = vunpack.c.l.b16 %v312
      %v457 = vunpack.c.l.b16 %v313
      %v458 = vunpack.c.l.b16 %v314
      %v459 = vunpack.c.l.b16 %v315
      %v460 = vunpack.c.l.b16 %v316
      %v461 = vunpack.c.l.b16 %v317
      %v462 = vunpack.c.l.b16 %v318
      %v463 = vunpack.c.l.b16 %v319
      %v464 = vunpack.c.l.b16 %v320
      %v465 = vunpack.c.l.b16 %v321
      %v466 = vunpack.c.l.b16 %v322
      %v467 = vunpack.c.l.b16 %v323
      %v468 = vunpack.c.l.b16 %v324
      %v469 = vunpack.c.l.b16 %v325
      %v470 = vunpack.c.l.b16 %v326
      %v471 = vunpack.c.l.b16 %v327
      %v472 = vunpack.c.l.b16 %v328
      %v473 = vunpack.c.l.b16 %v329
      %v474 = vunpack.c.l.b16 %v330
      %v475 = vunpack.c.l.b16 %v331
      %v476 = vunpack.c.l.b16 %v332
      %v477 = vunpack.c.l.b16 %v333
      %v478 = vunpack.c.l.b16 %v334
      %v479 = vunpack.c.l.b16 %v335
      %v480 = vunpack.c.l.b16 %v336
      %v481 = vunpack.c.l.b16 %v337
      %v482 = vunpack.c.l.b16 %v338
      %v483 = vunpack.c.l.b16 %v339
      %v484 = vunpack.c.l.b16 %v340
      %v485 = vunpack.c.l.b16 %v341
      %v486 = vunpack.c.l.b16 %v342
      %v487 = vunpack.c.l.b16 %v343
      %v488 = vunpack.c.l.b16 %v344
      %v489 = vunpack.c.l.b16 %v345
      %v490 = vunpack.c.l.b16 %v346
      %v491 = vpack.c.b16 %v428, %v427
      %v492 = vpack.c.b16 %v430, %v429
      %v493 = vpack.c.b16 %v432, %v431
      %v494 = vpack.c.b16 %v434, %v433
      %v495 = vpack.c.b16 %v436, %v435
      %v496 = vpack.c.b16 %v438, %v437
      %v497 = vpack.c.b16 %v440, %v439
      %v498 = vpack.c.b16 %v442, %v441
      %v499 = vpack.c.b16 %v444, %v443
      %v500 = vpack.c.b16 %v446, %v445
      %v501 = vpack.c.b16 %v448, %v447
      %v502 = vpack.c.b16 %v450, %v449
      %v503 = vpack.c.b16 %v452, %v451
      %v504 = vpack.c.b16 %v454, %v453
      %v505 = vpack.c.b16 %v456, %v455
      %v506 = vpack.c.b16 %v458, %v457
      %v507 = vpack.c.b16 %v460, %v459
      %v508 = vpack.c.b16 %v462, %v461
      %v509 = vpack.c.b16 %v464, %v463
      %v510 = vpack.c.b16 %v466, %v465
      %v511 = vpack.c.b16 %v468, %v467
      %v512 = vpack.c.b16 %v470, %v469
      %v513 = vpack.c.b16 %v472, %v471
      %v514 = vpack.c.b16 %v474, %v473
      %v515 = vpack.c.b16 %v476, %v475
      %v516 = vpack.c.b16 %v478, %v477
      %v517 = vpack.c.b16 %v480, %v479
      %v518 = vpack.c.b16 %v482, %v481
      %v519 = vpack.c.b16 %v484, %v483
      %v520 = vpack.c.b16 %v486, %v485
      %v521 = vpack.c.b16 %v488, %v487
      %v522 = vpack.c.b16 %v490, %v489
      %v527 = vunpack.c.l.b16 %v347
      %v528 = vunpack.c.h.b16 %v347
      %v529 = vunpack.c.l.b16 %v348
      %v530 = vunpack.c.h.b16 %v348
      %v531 = vunpack.c.l.b16 %v349
      %v532 = vunpack.c.h.b16 %v349
      %v533 = vunpack.c.l.b16 %v350
      %v534 = vunpack.c.h.b16 %v350
      %v535 = vpack.c.b16 %v529, %v527
      %v536 = vpack.c.b16 %v530, %v528
      %v537 = vpack.c.b16 %v533, %v531
      %v538 = vpack.c.b16 %v534, %v532
      %vm543 = vcmask 261120
      %v545 = vsel %vm543, %v491, 0
      %v548 = vsel %vm543, %v492, 0
      %v551 = vsel %vm543, %v493, 0
      %v554 = vsel %vm543, %v494, 0
      %v557 = vsel %vm543, %v495, 0
      %v560 = vsel %vm543, %v496, 0
      %v563 = vsel %vm543, %v497, 0
      %v566 = vsel %vm543, %v498, 0
      %v569 = vsel %vm543, %v499, 0
      %v572 = vsel %vm543, %v500, 0
      %v575 = vsel %vm543, %v501, 0
      %v578 = vsel %vm543, %v502, 0
      %v581 = vsel %vm543, %v503, 0
      %v584 = vsel %vm543, %v504, 0
      %v587 = vsel %vm543, %v505, 0
      %v590 = vsel %vm543, %v506, 0
      %v593 = vsel %vm543, %v507, 0
      %v596 = vsel %vm543, %v508, 0
      %v599 = vsel %vm543, %v509, 0
      %v602 = vsel %vm543, %v510, 0
      %v605 = vsel %vm543, %v511, 0
      %v608 = vsel %vm543, %v512, 0
      %v611 = vsel %vm543, %v513, 0
      %v614 = vsel %vm543, %v514, 0
      %v617 = vsel %vm543, %v515, 0
      %v620 = vsel %vm543, %v516, 0
      %v623 = vsel %vm543, %v517, 0
      %v626 = vsel %vm543, %v518, 0
      %v629 = vsel %vm543, %v519, 0
      %v632 = vsel %vm543, %v520, 0
      %v635 = vsel %vm543, %v521, 0
      %v638 = vsel %vm543, %v522, 0
      %640 = vmatprep.subr.bf16.mxu0 0
      %641 = vmatpush1.bf16.msra.mxu0 0
      %642 = vmatprep.subr.bf16.mxu0 0
      %643 = vmatpush1.bf16.msra.mxu0 0
      %644 = vmatprep.subr.bf16.mxu0 0
      %645 = vmatpush1.bf16.msra.mxu0 0
      %646 = vmatprep.subr.bf16.mxu0 0
      %647 = vmatpush1.bf16.msra.mxu0 0
      %648 = vmatprep.subr.bf16.mxu0 0
      %649 = vmatpush1.bf16.msra.mxu0 0
      %650 = vmatprep.subr.bf16.mxu0 0
      %651 = vmatpush1.bf16.msra.mxu0 0
      %652 = vmatprep.subr.bf16.mxu0 %v538
      %653 = vmatpush1.bf16.msra.mxu0 %v537
      %654 = vmatprep.subr.bf16.mxu0 %v536
      %655 = vmatpush1.bf16.msra.mxu0 %v535
      %656 = vmatprep.subr.bf16.mxu0 0
      %657 = vmatpush2.bf16.msra.mxu0 0
      %658 = vmatprep.subr.bf16.mxu0 0
      %659 = vmatpush2.bf16.msra.mxu0 0
      %660 = vmatprep.subr.bf16.mxu0 0
      %661 = vmatpush2.bf16.msra.mxu0 0
      %662 = vmatprep.subr.bf16.mxu0 0
      %663 = vmatpush2.bf16.msra.mxu0 0
      %664 = vmatprep.subr.bf16.mxu0 0
      %665 = vmatpush2.bf16.msra.mxu0 0
      %666 = vmatprep.subr.bf16.mxu0 0
      %667 = vmatpush2.bf16.msra.mxu0 0
      %668 = vmatprep.subr.bf16.mxu0 0
      %669 = vmatpush2.bf16.msra.mxu0 0
      %670 = vmatprep.subr.bf16.mxu0 0
      %671 = vmatpush2.bf16.msra.mxu0 0
      %672 = vmatprep.mubr.bf16.mxu0 0
      %673 = vmatmul.mubr.bf16.gmra.mxu0 %v545
      %v674 = vpop.f32.mrf.mxu0
      %v675 = vadd.f32 %v356, %v674
      %v676 = vpop.f32.mrf.mxu0
      %v677 = vadd.f32 %v360, %v676
      %v678 = vpop.f32.mrf.mxu0
      %v679 = vadd.f32 %v356, %v678
      %v680 = vpop.f32.mrf.mxu0
      %v681 = vadd.f32 %v360, %v680
      %682 = vmatprep.mubr.bf16.mxu0 0
      %683 = vmatmul.mubr.bf16.gmra.mxu0 %v548
      %v684 = vpop.f32.mrf.mxu0
      %v685 = vadd.f32 %v356, %v684
      %v686 = vpop.f32.mrf.mxu0
      %v687 = vadd.f32 %v360, %v686
      %v688 = vpop.f32.mrf.mxu0
      %v689 = vadd.f32 %v356, %v688
      %v690 = vpop.f32.mrf.mxu0
      %v691 = vadd.f32 %v360, %v690
      %692 = vmatprep.mubr.bf16.mxu0 0
      %693 = vmatmul.mubr.bf16.gmra.mxu0 %v551
      %v694 = vpop.f32.mrf.mxu0
      %v695 = vadd.f32 %v356, %v694
      %v696 = vpop.f32.mrf.mxu0
      %v697 = vadd.f32 %v360, %v696
      %v698 = vpop.f32.mrf.mxu0
      %v699 = vadd.f32 %v356, %v698
      %v700 = vpop.f32.mrf.mxu0
      %v701 = vadd.f32 %v360, %v700
      %702 = vmatprep.mubr.bf16.mxu0 0
      %703 = vmatmul.mubr.bf16.gmra.mxu0 %v554
      %v704 = vpop.f32.mrf.mxu0
      %v705 = vadd.f32 %v356, %v704
      %v706 = vpop.f32.mrf.mxu0
      %v707 = vadd.f32 %v360, %v706
      %v708 = vpop.f32.mrf.mxu0
      %v709 = vadd.f32 %v356, %v708
      %v710 = vpop.f32.mrf.mxu0
      %v711 = vadd.f32 %v360, %v710
      %712 = vmatprep.mubr.bf16.mxu0 0
      %713 = vmatmul.mubr.bf16.gmra.mxu0 %v557
      %v714 = vpop.f32.mrf.mxu0
      %v715 = vadd.f32 %v356, %v714
      %v716 = vpop.f32.mrf.mxu0
      %v717 = vadd.f32 %v360, %v716
      %v718 = vpop.f32.mrf.mxu0
      %v719 = vadd.f32 %v356, %v718
      %v720 = vpop.f32.mrf.mxu0
      %v721 = vadd.f32 %v360, %v720
      %722 = vmatprep.mubr.bf16.mxu0 0
      %723 = vmatmul.mubr.bf16.gmra.mxu0 %v560
      %v724 = vpop.f32.mrf.mxu0
      %v725 = vadd.f32 %v356, %v724
      %v726 = vpop.f32.mrf.mxu0
      %v727 = vadd.f32 %v360, %v726
      %v728 = vpop.f32.mrf.mxu0
      %v729 = vadd.f32 %v356, %v728
      %v730 = vpop.f32.mrf.mxu0
      %v731 = vadd.f32 %v360, %v730
      %732 = vmatprep.mubr.bf16.mxu0 0
      %733 = vmatmul.mubr.bf16.gmra.mxu0 %v563
      %v734 = vpop.f32.mrf.mxu0
      %v735 = vadd.f32 %v356, %v734
      %v736 = vpop.f32.mrf.mxu0
      %v737 = vadd.f32 %v360, %v736
      %v738 = vpop.f32.mrf.mxu0
      %v739 = vadd.f32 %v356, %v738
      %v740 = vpop.f32.mrf.mxu0
      %v741 = vadd.f32 %v360, %v740
      %742 = vmatprep.mubr.bf16.mxu0 0
      %743 = vmatmul.mubr.bf16.gmra.mxu0 %v566
      %v744 = vpop.f32.mrf.mxu0
      %v745 = vadd.f32 %v356, %v744
      %v746 = vpop.f32.mrf.mxu0
      %v747 = vadd.f32 %v360, %v746
      %v748 = vpop.f32.mrf.mxu0
      %v749 = vadd.f32 %v356, %v748
      %v750 = vpop.f32.mrf.mxu0
      %v751 = vadd.f32 %v360, %v750
      %752 = vmatprep.mubr.bf16.mxu0 0
      %753 = vmatmul.mubr.bf16.gmra.mxu0 %v569
      %v754 = vpop.f32.mrf.mxu0
      %v755 = vadd.f32 %v356, %v754
      %v756 = vpop.f32.mrf.mxu0
      %v757 = vadd.f32 %v360, %v756
      %v758 = vpop.f32.mrf.mxu0
      %v759 = vadd.f32 %v356, %v758
      %v760 = vpop.f32.mrf.mxu0
      %v761 = vadd.f32 %v360, %v760
      %762 = vmatprep.mubr.bf16.mxu0 0
      %763 = vmatmul.mubr.bf16.gmra.mxu0 %v572
      %v764 = vpop.f32.mrf.mxu0
      %v765 = vadd.f32 %v356, %v764
      %v766 = vpop.f32.mrf.mxu0
      %v767 = vadd.f32 %v360, %v766
      %v768 = vpop.f32.mrf.mxu0
      %v769 = vadd.f32 %v356, %v768
      %v770 = vpop.f32.mrf.mxu0
      %v771 = vadd.f32 %v360, %v770
      %772 = vmatprep.mubr.bf16.mxu0 0
      %773 = vmatmul.mubr.bf16.gmra.mxu0 %v575
      %v774 = vpop.f32.mrf.mxu0
      %v775 = vadd.f32 %v356, %v774
      %v776 = vpop.f32.mrf.mxu0
      %v777 = vadd.f32 %v360, %v776
      %v778 = vpop.f32.mrf.mxu0
      %v779 = vadd.f32 %v356, %v778
      %v780 = vpop.f32.mrf.mxu0
      %v781 = vadd.f32 %v360, %v780
      %782 = vmatprep.mubr.bf16.mxu0 0
      %783 = vmatmul.mubr.bf16.gmra.mxu0 %v578
      %v784 = vpop.f32.mrf.mxu0
      %v785 = vadd.f32 %v356, %v784
      %v786 = vpop.f32.mrf.mxu0
      %v787 = vadd.f32 %v360, %v786
      %v788 = vpop.f32.mrf.mxu0
      %v789 = vadd.f32 %v356, %v788
      %v790 = vpop.f32.mrf.mxu0
      %v791 = vadd.f32 %v360, %v790
      %792 = vmatprep.mubr.bf16.mxu0 0
      %793 = vmatmul.mubr.bf16.gmra.mxu0 %v581
      %v794 = vpop.f32.mrf.mxu0
      %v795 = vadd.f32 %v356, %v794
      %v796 = vpop.f32.mrf.mxu0
      %v797 = vadd.f32 %v360, %v796
      %v798 = vpop.f32.mrf.mxu0
      %v799 = vadd.f32 %v356, %v798
      %v800 = vpop.f32.mrf.mxu0
      %v801 = vadd.f32 %v360, %v800
      %802 = vmatprep.mubr.bf16.mxu0 0
      %803 = vmatmul.mubr.bf16.gmra.mxu0 %v584
      %v804 = vpop.f32.mrf.mxu0
      %v805 = vadd.f32 %v356, %v804
      %v806 = vpop.f32.mrf.mxu0
      %v807 = vadd.f32 %v360, %v806
      %v808 = vpop.f32.mrf.mxu0
      %v809 = vadd.f32 %v356, %v808
      %v810 = vpop.f32.mrf.mxu0
      %v811 = vadd.f32 %v360, %v810
      %812 = vmatprep.mubr.bf16.mxu0 0
      %813 = vmatmul.mubr.bf16.gmra.mxu0 %v587
      %v814 = vpop.f32.mrf.mxu0
      %v815 = vadd.f32 %v356, %v814
      %v816 = vpop.f32.mrf.mxu0
      %v817 = vadd.f32 %v360, %v816
      %v818 = vpop.f32.mrf.mxu0
      %v819 = vadd.f32 %v356, %v818
      %v820 = vpop.f32.mrf.mxu0
      %v821 = vadd.f32 %v360, %v820
      %822 = vmatprep.mubr.bf16.mxu0 0
      %823 = vmatmul.mubr.bf16.gmra.mxu0 %v590
      %v824 = vpop.f32.mrf.mxu0
      %v825 = vadd.f32 %v356, %v824
      %v826 = vpop.f32.mrf.mxu0
      %v827 = vadd.f32 %v360, %v826
      %v828 = vpop.f32.mrf.mxu0
      %v829 = vadd.f32 %v356, %v828
      %v830 = vpop.f32.mrf.mxu0
      %v831 = vadd.f32 %v360, %v830
      %832 = vmatprep.mubr.bf16.mxu0 0
      %833 = vmatmul.mubr.bf16.gmra.mxu0 %v593
      %v834 = vpop.f32.mrf.mxu0
      %v835 = vadd.f32 %v356, %v834
      %v836 = vpop.f32.mrf.mxu0
      %v837 = vadd.f32 %v360, %v836
      %v838 = vpop.f32.mrf.mxu0
      %v839 = vadd.f32 %v356, %v838
      %v840 = vpop.f32.mrf.mxu0
      %v841 = vadd.f32 %v360, %v840
      %842 = vmatprep.mubr.bf16.mxu0 0
      %843 = vmatmul.mubr.bf16.gmra.mxu0 %v596
      %v844 = vpop.f32.mrf.mxu0
      %v845 = vadd.f32 %v356, %v844
      %v846 = vpop.f32.mrf.mxu0
      %v847 = vadd.f32 %v360, %v846
      %v848 = vpop.f32.mrf.mxu0
      %v849 = vadd.f32 %v356, %v848
      %v850 = vpop.f32.mrf.mxu0
      %v851 = vadd.f32 %v360, %v850
      %852 = vmatprep.mubr.bf16.mxu0 0
      %853 = vmatmul.mubr.bf16.gmra.mxu0 %v599
      %v854 = vpop.f32.mrf.mxu0
      %v855 = vadd.f32 %v356, %v854
      %v856 = vpop.f32.mrf.mxu0
      %v857 = vadd.f32 %v360, %v856
      %v858 = vpop.f32.mrf.mxu0
      %v859 = vadd.f32 %v356, %v858
      %v860 = vpop.f32.mrf.mxu0
      %v861 = vadd.f32 %v360, %v860
      %862 = vmatprep.mubr.bf16.mxu0 0
      %863 = vmatmul.mubr.bf16.gmra.mxu0 %v602
      %v864 = vpop.f32.mrf.mxu0
      %v865 = vadd.f32 %v356, %v864
      %v866 = vpop.f32.mrf.mxu0
      %v867 = vadd.f32 %v360, %v866
      %v868 = vpop.f32.mrf.mxu0
      %v869 = vadd.f32 %v356, %v868
      %v870 = vpop.f32.mrf.mxu0
      %v871 = vadd.f32 %v360, %v870
      %872 = vmatprep.mubr.bf16.mxu0 0
      %873 = vmatmul.mubr.bf16.gmra.mxu0 %v605
      %v874 = vpop.f32.mrf.mxu0
      %v875 = vadd.f32 %v356, %v874
      %v876 = vpop.f32.mrf.mxu0
      %v877 = vadd.f32 %v360, %v876
      %v878 = vpop.f32.mrf.mxu0
      %v879 = vadd.f32 %v356, %v878
      %v880 = vpop.f32.mrf.mxu0
      %v881 = vadd.f32 %v360, %v880
      %882 = vmatprep.mubr.bf16.mxu0 0
      %883 = vmatmul.mubr.bf16.gmra.mxu0 %v608
      %v884 = vpop.f32.mrf.mxu0
      %v885 = vadd.f32 %v356, %v884
      %v886 = vpop.f32.mrf.mxu0
      %v887 = vadd.f32 %v360, %v886
      %v888 = vpop.f32.mrf.mxu0
      %v889 = vadd.f32 %v356, %v888
      %v890 = vpop.f32.mrf.mxu0
      %v891 = vadd.f32 %v360, %v890
      %892 = vmatprep.mubr.bf16.mxu0 0
      %893 = vmatmul.mubr.bf16.gmra.mxu0 %v611
      %v894 = vpop.f32.mrf.mxu0
      %v895 = vadd.f32 %v356, %v894
      %v896 = vpop.f32.mrf.mxu0
      %v897 = vadd.f32 %v360, %v896
      %v898 = vpop.f32.mrf.mxu0
      %v899 = vadd.f32 %v356, %v898
      %v900 = vpop.f32.mrf.mxu0
      %v901 = vadd.f32 %v360, %v900
      %902 = vmatprep.mubr.bf16.mxu0 0
      %903 = vmatmul.mubr.bf16.gmra.mxu0 %v614
      %v904 = vpop.f32.mrf.mxu0
      %v905 = vadd.f32 %v356, %v904
      %v906 = vpop.f32.mrf.mxu0
      %v907 = vadd.f32 %v360, %v906
      %v908 = vpop.f32.mrf.mxu0
      %v909 = vadd.f32 %v356, %v908
      %v910 = vpop.f32.mrf.mxu0
      %v911 = vadd.f32 %v360, %v910
      %912 = vmatprep.mubr.bf16.mxu0 0
      %913 = vmatmul.mubr.bf16.gmra.mxu0 %v617
      %v914 = vpop.f32.mrf.mxu0
      %v915 = vadd.f32 %v356, %v914
      %v916 = vpop.f32.mrf.mxu0
      %v917 = vadd.f32 %v360, %v916
      %v918 = vpop.f32.mrf.mxu0
      %v919 = vadd.f32 %v356, %v918
      %v920 = vpop.f32.mrf.mxu0
      %v921 = vadd.f32 %v360, %v920
      %922 = vmatprep.mubr.bf16.mxu0 0
      %923 = vmatmul.mubr.bf16.gmra.mxu0 %v620
      %v924 = vpop.f32.mrf.mxu0
      %v925 = vadd.f32 %v356, %v924
      %v926 = vpop.f32.mrf.mxu0
      %v927 = vadd.f32 %v360, %v926
      %v928 = vpop.f32.mrf.mxu0
      %v929 = vadd.f32 %v356, %v928
      %v930 = vpop.f32.mrf.mxu0
      %v931 = vadd.f32 %v360, %v930
      %932 = vmatprep.mubr.bf16.mxu0 0
      %933 = vmatmul.mubr.bf16.gmra.mxu0 %v623
      %v934 = vpop.f32.mrf.mxu0
      %v935 = vadd.f32 %v356, %v934
      %v936 = vpop.f32.mrf.mxu0
      %v937 = vadd.f32 %v360, %v936
      %v938 = vpop.f32.mrf.mxu0
      %v939 = vadd.f32 %v356, %v938
      %v940 = vpop.f32.mrf.mxu0
      %v941 = vadd.f32 %v360, %v940
      %942 = vmatprep.mubr.bf16.mxu0 0
      %943 = vmatmul.mubr.bf16.gmra.mxu0 %v626
      %v944 = vpop.f32.mrf.mxu0
      %v945 = vadd.f32 %v356, %v944
      %v946 = vpop.f32.mrf.mxu0
      %v947 = vadd.f32 %v360, %v946
      %v948 = vpop.f32.mrf.mxu0
      %v949 = vadd.f32 %v356, %v948
      %v950 = vpop.f32.mrf.mxu0
      %v951 = vadd.f32 %v360, %v950
      %952 = vmatprep.mubr.bf16.mxu0 0
      %953 = vmatmul.mubr.bf16.gmra.mxu0 %v629
      %v954 = vpop.f32.mrf.mxu0
      %v955 = vadd.f32 %v356, %v954
      %v956 = vpop.f32.mrf.mxu0
      %v957 = vadd.f32 %v360, %v956
      %v958 = vpop.f32.mrf.mxu0
      %v959 = vadd.f32 %v356, %v958
      %v960 = vpop.f32.mrf.mxu0
      %v961 = vadd.f32 %v360, %v960
      %962 = vmatprep.mubr.bf16.mxu0 0
      %963 = vmatmul.mubr.bf16.gmra.mxu0 %v632
      %v964 = vpop.f32.mrf.mxu0
      %v965 = vadd.f32 %v356, %v964
      %v966 = vpop.f32.mrf.mxu0
      %v967 = vadd.f32 %v360, %v966
      %v968 = vpop.f32.mrf.mxu0
      %v969 = vadd.f32 %v356, %v968
      %v970 = vpop.f32.mrf.mxu0
      %v971 = vadd.f32 %v360, %v970
      %972 = vmatprep.mubr.bf16.mxu0 0
      %973 = vmatmul.mubr.bf16.gmra.mxu0 %v635
      %v974 = vpop.f32.mrf.mxu0
      %v975 = vadd.f32 %v356, %v974
      %v976 = vpop.f32.mrf.mxu0
      %v977 = vadd.f32 %v360, %v976
      %v978 = vpop.f32.mrf.mxu0
      %v979 = vadd.f32 %v356, %v978
      %v980 = vpop.f32.mrf.mxu0
      %v981 = vadd.f32 %v360, %v980
      %982 = vmatprep.mubr.bf16.mxu0 0
      %983 = vmatmul.mubr.bf16.gmra.mxu0 %v638
      %v984 = vpop.f32.mrf.mxu0
      %v985 = vadd.f32 %v356, %v984
      %v986 = vpop.f32.mrf.mxu0
      %v987 = vadd.f32 %v360, %v986
      %v988 = vpop.f32.mrf.mxu0
      %v989 = vadd.f32 %v356, %v988
      %v990 = vpop.f32.mrf.mxu0
      %v991 = vadd.f32 %v360, %v990
      %992 = vdwg.mxu0
      %v993 = vmax.f32 %v675, 0.0
      %v994 = vmax.f32 %v677, 0.0
      %v995 = vmax.f32 %v679, 0.0
      %v996 = vmax.f32 %v681, 0.0
      %v997 = vmax.f32 %v685, 0.0
      %v998 = vmax.f32 %v687, 0.0
      %v999 = vmax.f32 %v689, 0.0
      %v1000 = vmax.f32 %v691, 0.0
      %v1001 = vmax.f32 %v695, 0.0
      %v1002 = vmax.f32 %v697, 0.0
      %v1003 = vmax.f32 %v699, 0.0
      %v1004 = vmax.f32 %v701, 0.0
      %v1005 = vmax.f32 %v705, 0.0
      %v1006 = vmax.f32 %v707, 0.0
      %v1007 = vmax.f32 %v709, 0.0
      %v1008 = vmax.f32 %v711, 0.0
      %v1009 = vmax.f32 %v715, 0.0
      %v1010 = vmax.f32 %v717, 0.0
      %v1011 = vmax.f32 %v719, 0.0
      %v1012 = vmax.f32 %v721, 0.0
      %v1013 = vmax.f32 %v725, 0.0
      %v1014 = vmax.f32 %v727, 0.0
      %v1015 = vmax.f32 %v729, 0.0
      %v1016 = vmax.f32 %v731, 0.0
      %v1017 = vmax.f32 %v735, 0.0
      %v1018 = vmax.f32 %v737, 0.0
      %v1019 = vmax.f32 %v739, 0.0
      %v1020 = vmax.f32 %v741, 0.0
      %v1021 = vmax.f32 %v745, 0.0
      %v1022 = vmax.f32 %v747, 0.0
      %v1023 = vmax.f32 %v749, 0.0
      %v1024 = vmax.f32 %v751, 0.0
      %v1025 = vmax.f32 %v755, 0.0
      %v1026 = vmax.f32 %v757, 0.0
      %v1027 = vmax.f32 %v759, 0.0
      %v1028 = vmax.f32 %v761, 0.0
      %v1029 = vmax.f32 %v765, 0.0
      %v1030 = vmax.f32 %v767, 0.0
      %v1031 = vmax.f32 %v769, 0.0
      %v1032 = vmax.f32 %v771, 0.0
      %v1033 = vmax.f32 %v775, 0.0
      %v1034 = vmax.f32 %v777, 0.0
      %v1035 = vmax.f32 %v779, 0.0
      %v1036 = vmax.f32 %v781, 0.0
      %v1037 = vmax.f32 %v785, 0.0
      %v1038 = vmax.f32 %v787, 0.0
      %v1039 = vmax.f32 %v789, 0.0
      %v1040 = vmax.f32 %v791, 0.0
      %v1041 = vmax.f32 %v795, 0.0
      %v1042 = vmax.f32 %v797, 0.0
      %v1043 = vmax.f32 %v799, 0.0
      %v1044 = vmax.f32 %v801, 0.0
      %v1045 = vmax.f32 %v805, 0.0
      %v1046 = vmax.f32 %v807, 0.0
      %v1047 = vmax.f32 %v809, 0.0
      %v1048 = vmax.f32 %v811, 0.0
      %v1049 = vmax.f32 %v815, 0.0
      %v1050 = vmax.f32 %v817, 0.0
      %v1051 = vmax.f32 %v819, 0.0
      %v1052 = vmax.f32 %v821, 0.0
      %v1053 = vmax.f32 %v825, 0.0
      %v1054 = vmax.f32 %v827, 0.0
      %v1055 = vmax.f32 %v829, 0.0
      %v1056 = vmax.f32 %v831, 0.0
      %v1057 = vmax.f32 %v835, 0.0
      %v1058 = vmax.f32 %v837, 0.0
      %v1059 = vmax.f32 %v839, 0.0
      %v1060 = vmax.f32 %v841, 0.0
      %v1061 = vmax.f32 %v845, 0.0
      %v1062 = vmax.f32 %v847, 0.0
      %v1063 = vmax.f32 %v849, 0.0
      %v1064 = vmax.f32 %v851, 0.0
      %v1065 = vmax.f32 %v855, 0.0
      %v1066 = vmax.f32 %v857, 0.0
      %v1067 = vmax.f32 %v859, 0.0
      %v1068 = vmax.f32 %v861, 0.0
      %v1069 = vmax.f32 %v865, 0.0
      %v1070 = vmax.f32 %v867, 0.0
      %v1071 = vmax.f32 %v869, 0.0
      %v1072 = vmax.f32 %v871, 0.0
      %v1073 = vmax.f32 %v875, 0.0
      %v1074 = vmax.f32 %v877, 0.0
      %v1075 = vmax.f32 %v879, 0.0
      %v1076 = vmax.f32 %v881, 0.0
      %v1077 = vmax.f32 %v885, 0.0
      %v1078 = vmax.f32 %v887, 0.0
      %v1079 = vmax.f32 %v889, 0.0
      %v1080 = vmax.f32 %v891, 0.0
      %v1081 = vmax.f32 %v895, 0.0
      %v1082 = vmax.f32 %v897, 0.0
      %v1083 = vmax.f32 %v899, 0.0
      %v1084 = vmax.f32 %v901, 0.0
      %v1085 = vmax.f32 %v905, 0.0
      %v1086 = vmax.f32 %v907, 0.0
      %v1087 = vmax.f32 %v909, 0.0
      %v1088 = vmax.f32 %v911, 0.0
      %v1089 = vmax.f32 %v915, 0.0
      %v1090 = vmax.f32 %v917, 0.0
      %v1091 = vmax.f32 %v919, 0.0
      %v1092 = vmax.f32 %v921, 0.0
      %v1093 = vmax.f32 %v925, 0.0
      %v1094 = vmax.f32 %v927, 0.0
      %v1095 = vmax.f32 %v929, 0.0
      %v1096 = vmax.f32 %v931, 0.0
      %v1097 = vmax.f32 %v935, 0.0
      %v1098 = vmax.f32 %v937, 0.0
      %v1099 = vmax.f32 %v939, 0.0
      %v1100 = vmax.f32 %v941, 0.0
      %v1101 = vmax.f32 %v945, 0.0
      %v1102 = vmax.f32 %v947, 0.0
      %v1103 = vmax.f32 %v949, 0.0
      %v1104 = vmax.f32 %v951, 0.0
      %v1105 = vmax.f32 %v955, 0.0
      %v1106 = vmax.f32 %v957, 0.0
      %v1107 = vmax.f32 %v959, 0.0
      %v1108 = vmax.f32 %v961, 0.0
      %v1109 = vmax.f32 %v965, 0.0
      %v1110 = vmax.f32 %v967, 0.0
      %v1111 = vmax.f32 %v969, 0.0
      %v1112 = vmax.f32 %v971, 0.0
      %v1113 = vmax.f32 %v975, 0.0
      %v1114 = vmax.f32 %v977, 0.0
      %v1115 = vmax.f32 %v979, 0.0
      %v1116 = vmax.f32 %v981, 0.0
      %v1117 = vmax.f32 %v985, 0.0
      %v1118 = vmax.f32 %v987, 0.0
      %v1119 = vmax.f32 %v989, 0.0
      %v1120 = vmax.f32 %v991, 0.0
      %v1121 = vpack.c.bf16 %v995, %v993
      %v1122 = vpack.c.bf16 %v996, %v994
      %v1123 = vpack.c.bf16 %v999, %v997
      %v1124 = vpack.c.bf16 %v1000, %v998
      %v1125 = vpack.c.bf16 %v1003, %v1001
      %v1126 = vpack.c.bf16 %v1004, %v1002
      %v1127 = vpack.c.bf16 %v1007, %v1005
      %v1128 = vpack.c.bf16 %v1008, %v1006
      %v1129 = vpack.c.bf16 %v1011, %v1009
      %v1130 = vpack.c.bf16 %v1012, %v1010
      %v1131 = vpack.c.bf16 %v1015, %v1013
      %v1132 = vpack.c.bf16 %v1016, %v1014
      %v1133 = vpack.c.bf16 %v1019, %v1017
      %v1134 = vpack.c.bf16 %v1020, %v1018
      %v1135 = vpack.c.bf16 %v1023, %v1021
      %v1136 = vpack.c.bf16 %v1024, %v1022
      %v1137 = vpack.c.bf16 %v1027, %v1025
      %v1138 = vpack.c.bf16 %v1028, %v1026
      %v1139 = vpack.c.bf16 %v1031, %v1029
      %v1140 = vpack.c.bf16 %v1032, %v1030
      %v1141 = vpack.c.bf16 %v1035, %v1033
      %v1142 = vpack.c.bf16 %v1036, %v1034
      %v1143 = vpack.c.bf16 %v1039, %v1037
      %v1144 = vpack.c.bf16 %v1040, %v1038
      %v1145 = vpack.c.bf16 %v1043, %v1041
      %v1146 = vpack.c.bf16 %v1044, %v1042
      %v1147 = vpack.c.bf16 %v1047, %v1045
      %v1148 = vpack.c.bf16 %v1048, %v1046
      %v1149 = vpack.c.bf16 %v1051, %v1049
      %v1150 = vpack.c.bf16 %v1052, %v1050
      %v1151 = vpack.c.bf16 %v1055, %v1053
      %v1152 = vpack.c.bf16 %v1056, %v1054
      %v1153 = vpack.c.bf16 %v1059, %v1057
      %v1154 = vpack.c.bf16 %v1060, %v1058
      %v1155 = vpack.c.bf16 %v1063, %v1061
      %v1156 = vpack.c.bf16 %v1064, %v1062
      %v1157 = vpack.c.bf16 %v1067, %v1065
      %v1158 = vpack.c.bf16 %v1068, %v1066
      %v1159 = vpack.c.bf16 %v1071, %v1069
      %v1160 = vpack.c.bf16 %v1072, %v1070
      %v1161 = vpack.c.bf16 %v1075, %v1073
      %v1162 = vpack.c.bf16 %v1076, %v1074
      %v1163 = vpack.c.bf16 %v1079, %v1077
      %v1164 = vpack.c.bf16 %v1080, %v1078
      %v1165 = vpack.c.bf16 %v1083, %v1081
      %v1166 = vpack.c.bf16 %v1084, %v1082
      %v1167 = vpack.c.bf16 %v1087, %v1085
      %v1168 = vpack.c.bf16 %v1088, %v1086
      %v1169 = vpack.c.bf16 %v1091, %v1089
      %v1170 = vpack.c.bf16 %v1092, %v1090
      %v1171 = vpack.c.bf16 %v1095, %v1093
      %v1172 = vpack.c.bf16 %v1096, %v1094
      %v1173 = vpack.c.bf16 %v1099, %v1097
      %v1174 = vpack.c.bf16 %v1100, %v1098
      %v1175 = vpack.c.bf16 %v1103, %v1101
      %v1176 = vpack.c.bf16 %v1104, %v1102
      %v1177 = vpack.c.bf16 %v1107, %v1105
      %v1178 = vpack.c.bf16 %v1108, %v1106
      %v1179 = vpack.c.bf16 %v1111, %v1109
      %v1180 = vpack.c.bf16 %v1112, %v1110
      %v1181 = vpack.c.bf16 %v1115, %v1113
      %v1182 = vpack.c.bf16 %v1116, %v1114
      %v1183 = vpack.c.bf16 %v1119, %v1117
      %v1184 = vpack.c.bf16 %v1120, %v1118
      %v1185 = vld [vmem:[%s3] sm:$0xff]
      %v1186 = vld [vmem:[%s3 + $0x8] sm:$0xff]
      %v1187 = vld [vmem:[%s3 + $0x10] sm:$0xff]
      %v1188 = vld [vmem:[%s3 + $0x18] sm:$0xff]
      %v1189 = vld [vmem:[%s3 + $0x20] sm:$0xff]
      %v1190 = vld [vmem:[%s3 + $0x28] sm:$0xff]
      %v1191 = vld [vmem:[%s3 + $0x30] sm:$0xff]
      %v1192 = vld [vmem:[%s3 + $0x38] sm:$0xff]
      %v1193 = vld [vmem:[%s3 + $0x40] sm:$0xff]
      %v1194 = vld [vmem:[%s3 + $0x48] sm:$0xff]
      %v1195 = vld [vmem:[%s3 + $0x50] sm:$0xff]
      %v1196 = vld [vmem:[%s3 + $0x58] sm:$0xff]
      %v1197 = vld [vmem:[%s3 + $0x60] sm:$0xff]
      %v1198 = vld [vmem:[%s3 + $0x68] sm:$0xff]
      %v1199 = vld [vmem:[%s3 + $0x70] sm:$0xff]
      %v1200 = vld [vmem:[%s3 + $0x78] sm:$0xff]
      %v1201 = vld [vmem:[%s3 + $0x80] sm:$0xff]
      %v1202 = vld [vmem:[%s3 + $0x88] sm:$0xff]
      %v1203 = vld [vmem:[%s3 + $0x90] sm:$0xff]
      %v1204 = vld [vmem:[%s3 + $0x98] sm:$0xff]
      %v1205 = vld [vmem:[%s3 + $0xa0] sm:$0xff]
      %v1206 = vld [vmem:[%s3 + $0xa8] sm:$0xff]
      %v1207 = vld [vmem:[%s3 + $0xb0] sm:$0xff]
      %v1208 = vld [vmem:[%s3 + $0xb8] sm:$0xff]
      %v1209 = vld [vmem:[%s3 + $0xc0] sm:$0xff]
      %v1210 = vld [vmem:[%s3 + $0xc8] sm:$0xff]
      %v1211 = vld [vmem:[%s3 + $0xd0] sm:$0xff]
      %v1212 = vld [vmem:[%s3 + $0xd8] sm:$0xff]
      %v1213 = vld [vmem:[%s3 + $0xe0] sm:$0xff]
      %v1214 = vld [vmem:[%s3 + $0xe8] sm:$0xff]
      %v1215 = vld [vmem:[%s3 + $0xf0] sm:$0xff]
      %v1216 = vld [vmem:[%s3 + $0xf8] sm:$0xff]
      %v1217 = vld [vmem:[%s3 + $0x100] sm:$0xff]
      %v1218 = vld [vmem:[%s3 + $0x108] sm:$0xff]
      %v1219 = vld [vmem:[%s3 + $0x110] sm:$0xff]
      %v1220 = vld [vmem:[%s3 + $0x118] sm:$0xff]
      %v1221 = vld [vmem:[%s3 + $0x120] sm:$0xff]
      %v1222 = vld [vmem:[%s3 + $0x128] sm:$0xff]
      %v1223 = vld [vmem:[%s3 + $0x130] sm:$0xff]
      %v1224 = vld [vmem:[%s3 + $0x138] sm:$0xff]
      %v1225 = vld [vmem:[%s3 + $0x140] sm:$0xff]
      %v1226 = vld [vmem:[%s3 + $0x148] sm:$0xff]
      %v1227 = vld [vmem:[%s3 + $0x150] sm:$0xff]
      %v1228 = vld [vmem:[%s3 + $0x158] sm:$0xff]
      %v1229 = vld [vmem:[%s3 + $0x160] sm:$0xff]
      %v1230 = vld [vmem:[%s3 + $0x168] sm:$0xff]
      %v1231 = vld [vmem:[%s3 + $0x170] sm:$0xff]
      %v1232 = vld [vmem:[%s3 + $0x178] sm:$0xff]
      %v1233 = vld [vmem:[%s3 + $0x180] sm:$0xff]
      %v1234 = vld [vmem:[%s3 + $0x188] sm:$0xff]
      %v1235 = vld [vmem:[%s3 + $0x190] sm:$0xff]
      %v1236 = vld [vmem:[%s3 + $0x198] sm:$0xff]
      %v1237 = vld [vmem:[%s3 + $0x1a0] sm:$0xff]
      %v1238 = vld [vmem:[%s3 + $0x1a8] sm:$0xff]
      %v1239 = vld [vmem:[%s3 + $0x1b0] sm:$0xff]
      %v1240 = vld [vmem:[%s3 + $0x1b8] sm:$0xff]
      %v1241 = vld [vmem:[%s3 + $0x1c0] sm:$0xff]
      %v1242 = vld [vmem:[%s3 + $0x1c8] sm:$0xff]
      %v1243 = vld [vmem:[%s3 + $0x1d0] sm:$0xff]
      %v1244 = vld [vmem:[%s3 + $0x1d8] sm:$0xff]
      %v1245 = vld [vmem:[%s3 + $0x1e0] sm:$0xff]
      %v1246 = vld [vmem:[%s3 + $0x1e8] sm:$0xff]
      %v1247 = vld [vmem:[%s3 + $0x1f0] sm:$0xff]
      %v1248 = vld [vmem:[%s3 + $0x1f8] sm:$0xff]
      %v1249 = vld [vmem:[%s4] sm:$0xf]
      %v1251 = vlaneseq
      %v1252 = vshrl.u32 %v1251, 7
      %v1253 = vsub.s32 0, %v1252
      %v1254 = vrot.slane %v1249, %v1253
      %v1255 = vlaneseq
      %v1256 = vshrl.u32 %v1255, 7
      %v1257 = vsub.s32 1, %v1256
      %v1258 = vrot.slane %v1249, %v1257
      %v1259 = vlaneseq
      %v1260 = vshrl.u32 %v1259, 7
      %v1261 = vsub.s32 2, %v1260
      %v1262 = vrot.slane %v1249, %v1261
      %v1263 = vlaneseq
      %v1264 = vshrl.u32 %v1263, 7
      %v1265 = vsub.s32 3, %v1264
      %v1266 = vrot.slane %v1249, %v1265
      %v1335 = vunpack.c.l.b16 %v1185
      %v1336 = vunpack.c.h.b16 %v1185
      %v1337 = vunpack.c.l.b16 %v1186
      %v1338 = vunpack.c.h.b16 %v1186
      %v1339 = vunpack.c.l.b16 %v1187
      %v1340 = vunpack.c.h.b16 %v1187
      %v1341 = vunpack.c.l.b16 %v1188
      %v1342 = vunpack.c.h.b16 %v1188
      %v1343 = vunpack.c.l.b16 %v1189
      %v1344 = vunpack.c.h.b16 %v1189
      %v1345 = vunpack.c.l.b16 %v1190
      %v1346 = vunpack.c.h.b16 %v1190
      %v1347 = vunpack.c.l.b16 %v1191
      %v1348 = vunpack.c.h.b16 %v1191
      %v1349 = vunpack.c.l.b16 %v1192
      %v1350 = vunpack.c.h.b16 %v1192
      %v1351 = vunpack.c.l.b16 %v1193
      %v1352 = vunpack.c.h.b16 %v1193
      %v1353 = vunpack.c.l.b16 %v1194
      %v1354 = vunpack.c.h.b16 %v1194
      %v1355 = vunpack.c.l.b16 %v1195
      %v1356 = vunpack.c.h.b16 %v1195
      %v1357 = vunpack.c.l.b16 %v1196
      %v1358 = vunpack.c.h.b16 %v1196
      %v1359 = vunpack.c.l.b16 %v1197
      %v1360 = vunpack.c.h.b16 %v1197
      %v1361 = vunpack.c.l.b16 %v1198
      %v1362 = vunpack.c.h.b16 %v1198
      %v1363 = vunpack.c.l.b16 %v1199
      %v1364 = vunpack.c.h.b16 %v1199
      %v1365 = vunpack.c.l.b16 %v1200
      %v1366 = vunpack.c.h.b16 %v1200
      %v1367 = vunpack.c.l.b16 %v1201
      %v1368 = vunpack.c.h.b16 %v1201
      %v1369 = vunpack.c.l.b16 %v1202
      %v1370 = vunpack.c.h.b16 %v1202
      %v1371 = vunpack.c.l.b16 %v1203
      %v1372 = vunpack.c.h.b16 %v1203
      %v1373 = vunpack.c.l.b16 %v1204
      %v1374 = vunpack.c.h.b16 %v1204
      %v1375 = vunpack.c.l.b16 %v1205
      %v1376 = vunpack.c.h.b16 %v1205
      %v1377 = vunpack.c.l.b16 %v1206
      %v1378 = vunpack.c.h.b16 %v1206
      %v1379 = vunpack.c.l.b16 %v1207
      %v1380 = vunpack.c.h.b16 %v1207
      %v1381 = vunpack.c.l.b16 %v1208
      %v1382 = vunpack.c.h.b16 %v1208
      %v1383 = vunpack.c.l.b16 %v1209
      %v1384 = vunpack.c.h.b16 %v1209
      %v1385 = vunpack.c.l.b16 %v1210
      %v1386 = vunpack.c.h.b16 %v1210
      %v1387 = vunpack.c.l.b16 %v1211
      %v1388 = vunpack.c.h.b16 %v1211
      %v1389 = vunpack.c.l.b16 %v1212
      %v1390 = vunpack.c.h.b16 %v1212
      %v1391 = vunpack.c.l.b16 %v1213
      %v1392 = vunpack.c.h.b16 %v1213
      %v1393 = vunpack.c.l.b16 %v1214
      %v1394 = vunpack.c.h.b16 %v1214
      %v1395 = vunpack.c.l.b16 %v1215
      %v1396 = vunpack.c.h.b16 %v1215
      %v1397 = vunpack.c.l.b16 %v1216
      %v1398 = vunpack.c.h.b16 %v1216
      %v1399 = vunpack.c.l.b16 %v1217
      %v1400 = vunpack.c.h.b16 %v1217
      %v1401 = vunpack.c.l.b16 %v1218
      %v1402 = vunpack.c.h.b16 %v1218
      %v1403 = vunpack.c.l.b16 %v1219
      %v1404 = vunpack.c.h.b16 %v1219
      %v1405 = vunpack.c.l.b16 %v1220
      %v1406 = vunpack.c.h.b16 %v1220
      %v1407 = vunpack.c.l.b16 %v1221
      %v1408 = vunpack.c.h.b16 %v1221
      %v1409 = vunpack.c.l.b16 %v1222
      %v1410 = vunpack.c.h.b16 %v1222
      %v1411 = vunpack.c.l.b16 %v1223
      %v1412 = vunpack.c.h.b16 %v1223
      %v1413 = vunpack.c.l.b16 %v1224
      %v1414 = vunpack.c.h.b16 %v1224
      %v1415 = vunpack.c.l.b16 %v1225
      %v1416 = vunpack.c.h.b16 %v1225
      %v1417 = vunpack.c.l.b16 %v1226
      %v1418 = vunpack.c.h.b16 %v1226
      %v1419 = vunpack.c.l.b16 %v1227
      %v1420 = vunpack.c.h.b16 %v1227
      %v1421 = vunpack.c.l.b16 %v1228
      %v1422 = vunpack.c.h.b16 %v1228
      %v1423 = vunpack.c.l.b16 %v1229
      %v1424 = vunpack.c.h.b16 %v1229
      %v1425 = vunpack.c.l.b16 %v1230
      %v1426 = vunpack.c.h.b16 %v1230
      %v1427 = vunpack.c.l.b16 %v1231
      %v1428 = vunpack.c.h.b16 %v1231
      %v1429 = vunpack.c.l.b16 %v1232
      %v1430 = vunpack.c.h.b16 %v1232
      %v1431 = vunpack.c.l.b16 %v1233
      %v1432 = vunpack.c.h.b16 %v1233
      %v1433 = vunpack.c.l.b16 %v1234
      %v1434 = vunpack.c.h.b16 %v1234
      %v1435 = vunpack.c.l.b16 %v1235
      %v1436 = vunpack.c.h.b16 %v1235
      %v1437 = vunpack.c.l.b16 %v1236
      %v1438 = vunpack.c.h.b16 %v1236
      %v1439 = vunpack.c.l.b16 %v1237
      %v1440 = vunpack.c.h.b16 %v1237
      %v1441 = vunpack.c.l.b16 %v1238
      %v1442 = vunpack.c.h.b16 %v1238
      %v1443 = vunpack.c.l.b16 %v1239
      %v1444 = vunpack.c.h.b16 %v1239
      %v1445 = vunpack.c.l.b16 %v1240
      %v1446 = vunpack.c.h.b16 %v1240
      %v1447 = vunpack.c.l.b16 %v1241
      %v1448 = vunpack.c.h.b16 %v1241
      %v1449 = vunpack.c.l.b16 %v1242
      %v1450 = vunpack.c.h.b16 %v1242
      %v1451 = vunpack.c.l.b16 %v1243
      %v1452 = vunpack.c.h.b16 %v1243
      %v1453 = vunpack.c.l.b16 %v1244
      %v1454 = vunpack.c.h.b16 %v1244
      %v1455 = vunpack.c.l.b16 %v1245
      %v1456 = vunpack.c.h.b16 %v1245
      %v1457 = vunpack.c.l.b16 %v1246
      %v1458 = vunpack.c.h.b16 %v1246
      %v1459 = vunpack.c.l.b16 %v1247
      %v1460 = vunpack.c.h.b16 %v1247
      %v1461 = vunpack.c.l.b16 %v1248
      %v1462 = vunpack.c.h.b16 %v1248
      %v1463 = vpack.c.b16 %v1339, %v1335
      %v1464 = vpack.c.b16 %v1340, %v1336
      %v1465 = vpack.c.b16 %v1341, %v1337
      %v1466 = vpack.c.b16 %v1342, %v1338
      %v1467 = vpack.c.b16 %v1347, %v1343
      %v1468 = vpack.c.b16 %v1348, %v1344
      %v1469 = vpack.c.b16 %v1349, %v1345
      %v1470 = vpack.c.b16 %v1350, %v1346
      %v1471 = vpack.c.b16 %v1355, %v1351
      %v1472 = vpack.c.b16 %v1356, %v1352
      %v1473 = vpack.c.b16 %v1357, %v1353
      %v1474 = vpack.c.b16 %v1358, %v1354
      %v1475 = vpack.c.b16 %v1363, %v1359
      %v1476 = vpack.c.b16 %v1364, %v1360
      %v1477 = vpack.c.b16 %v1365, %v1361
      %v1478 = vpack.c.b16 %v1366, %v1362
      %v1479 = vpack.c.b16 %v1371, %v1367
      %v1480 = vpack.c.b16 %v1372, %v1368
      %v1481 = vpack.c.b16 %v1373, %v1369
      %v1482 = vpack.c.b16 %v1374, %v1370
      %v1483 = vpack.c.b16 %v1379, %v1375
      %v1484 = vpack.c.b16 %v1380, %v1376
      %v1485 = vpack.c.b16 %v1381, %v1377
      %v1486 = vpack.c.b16 %v1382, %v1378
      %v1487 = vpack.c.b16 %v1387, %v1383
      %v1488 = vpack.c.b16 %v1388, %v1384
      %v1489 = vpack.c.b16 %v1389, %v1385
      %v1490 = vpack.c.b16 %v1390, %v1386
      %v1491 = vpack.c.b16 %v1395, %v1391
      %v1492 = vpack.c.b16 %v1396, %v1392
      %v1493 = vpack.c.b16 %v1397, %v1393
      %v1494 = vpack.c.b16 %v1398, %v1394
      %v1495 = vpack.c.b16 %v1403, %v1399
      %v1496 = vpack.c.b16 %v1404, %v1400
      %v1497 = vpack.c.b16 %v1405, %v1401
      %v1498 = vpack.c.b16 %v1406, %v1402
      %v1499 = vpack.c.b16 %v1411, %v1407
      %v1500 = vpack.c.b16 %v1412, %v1408
      %v1501 = vpack.c.b16 %v1413, %v1409
      %v1502 = vpack.c.b16 %v1414, %v1410
      %v1503 = vpack.c.b16 %v1419, %v1415
      %v1504 = vpack.c.b16 %v1420, %v1416
      %v1505 = vpack.c.b16 %v1421, %v1417
      %v1506 = vpack.c.b16 %v1422, %v1418
      %v1507 = vpack.c.b16 %v1427, %v1423
      %v1508 = vpack.c.b16 %v1428, %v1424
      %v1509 = vpack.c.b16 %v1429, %v1425
      %v1510 = vpack.c.b16 %v1430, %v1426
      %v1511 = vpack.c.b16 %v1435, %v1431
      %v1512 = vpack.c.b16 %v1436, %v1432
      %v1513 = vpack.c.b16 %v1437, %v1433
      %v1514 = vpack.c.b16 %v1438, %v1434
      %v1515 = vpack.c.b16 %v1443, %v1439
      %v1516 = vpack.c.b16 %v1444, %v1440
      %v1517 = vpack.c.b16 %v1445, %v1441
      %v1518 = vpack.c.b16 %v1446, %v1442
      %v1519 = vpack.c.b16 %v1451, %v1447
      %v1520 = vpack.c.b16 %v1452, %v1448
      %v1521 = vpack.c.b16 %v1453, %v1449
      %v1522 = vpack.c.b16 %v1454, %v1450
      %v1523 = vpack.c.b16 %v1459, %v1455
      %v1524 = vpack.c.b16 %v1460, %v1456
      %v1525 = vpack.c.b16 %v1461, %v1457
      %v1526 = vpack.c.b16 %v1462, %v1458
      %1591 = vmatprep.subr.bf16.mxu0 %v1492
      %1592 = vmatpush1.bf16.msra.mxu0 %v1491
      %1593 = vmatprep.subr.bf16.mxu0 %v1488
      %1594 = vmatpush1.bf16.msra.mxu0 %v1487
      %1595 = vmatprep.subr.bf16.mxu0 %v1484
      %1596 = vmatpush1.bf16.msra.mxu0 %v1483
      %1597 = vmatprep.subr.bf16.mxu0 %v1480
      %1598 = vmatpush1.bf16.msra.mxu0 %v1479
      %1599 = vmatprep.subr.bf16.mxu0 %v1476
      %1600 = vmatpush1.bf16.msra.mxu0 %v1475
      %1601 = vmatprep.subr.bf16.mxu0 %v1472
      %1602 = vmatpush1.bf16.msra.mxu0 %v1471
      %1603 = vmatprep.subr.bf16.mxu0 %v1468
      %1604 = vmatpush1.bf16.msra.mxu0 %v1467
      %1605 = vmatprep.subr.bf16.mxu0 %v1464
      %1606 = vmatpush1.bf16.msra.mxu0 %v1463
      %1607 = vmatprep.subr.bf16.mxu0 %v1524
      %1608 = vmatpush2.bf16.msra.mxu0 %v1523
      %1609 = vmatprep.subr.bf16.mxu0 %v1520
      %1610 = vmatpush2.bf16.msra.mxu0 %v1519
      %1611 = vmatprep.subr.bf16.mxu0 %v1516
      %1612 = vmatpush2.bf16.msra.mxu0 %v1515
      %1613 = vmatprep.subr.bf16.mxu0 %v1512
      %1614 = vmatpush2.bf16.msra.mxu0 %v1511
      %1615 = vmatprep.subr.bf16.mxu0 %v1508
      %1616 = vmatpush2.bf16.msra.mxu0 %v1507
      %1617 = vmatprep.subr.bf16.mxu0 %v1504
      %1618 = vmatpush2.bf16.msra.mxu0 %v1503
      %1619 = vmatprep.subr.bf16.mxu0 %v1500
      %1620 = vmatpush2.bf16.msra.mxu0 %v1499
      %1621 = vmatprep.subr.bf16.mxu0 %v1496
      %1622 = vmatpush2.bf16.msra.mxu0 %v1495
      %1623 = vmatprep.mubr.bf16.mxu0 %v1122
      %1624 = vmatmul.mubr.bf16.gmra.mxu0 %v1121
      %v1625 = vpop.f32.mrf.mxu0
      %v1626 = vadd.f32 %v1254, %v1625
      %v1627 = vpop.f32.mrf.mxu0
      %v1628 = vadd.f32 %v1258, %v1627
      %v1629 = vpop.f32.mrf.mxu0
      %v1630 = vadd.f32 %v1254, %v1629
      %v1631 = vpop.f32.mrf.mxu0
      %v1632 = vadd.f32 %v1258, %v1631
      %1633 = vmatprep.mubr.bf16.mxu0 %v1124
      %1634 = vmatmul.mubr.bf16.gmra.mxu0 %v1123
      %v1635 = vpop.f32.mrf.mxu0
      %v1636 = vadd.f32 %v1254, %v1635
      %v1637 = vpop.f32.mrf.mxu0
      %v1638 = vadd.f32 %v1258, %v1637
      %v1639 = vpop.f32.mrf.mxu0
      %v1640 = vadd.f32 %v1254, %v1639
      %v1641 = vpop.f32.mrf.mxu0
      %v1642 = vadd.f32 %v1258, %v1641
      %1643 = vmatprep.mubr.bf16.mxu0 %v1126
      %1644 = vmatmul.mubr.bf16.gmra.mxu0 %v1125
      %v1645 = vpop.f32.mrf.mxu0
      %v1646 = vadd.f32 %v1254, %v1645
      %v1647 = vpop.f32.mrf.mxu0
      %v1648 = vadd.f32 %v1258, %v1647
      %v1649 = vpop.f32.mrf.mxu0
      %v1650 = vadd.f32 %v1254, %v1649
      %v1651 = vpop.f32.mrf.mxu0
      %v1652 = vadd.f32 %v1258, %v1651
      %1653 = vmatprep.mubr.bf16.mxu0 %v1128
      %1654 = vmatmul.mubr.bf16.gmra.mxu0 %v1127
      %v1655 = vpop.f32.mrf.mxu0
      %v1656 = vadd.f32 %v1254, %v1655
      %v1657 = vpop.f32.mrf.mxu0
      %v1658 = vadd.f32 %v1258, %v1657
      %v1659 = vpop.f32.mrf.mxu0
      %v1660 = vadd.f32 %v1254, %v1659
      %v1661 = vpop.f32.mrf.mxu0
      %v1662 = vadd.f32 %v1258, %v1661
      %1663 = vmatprep.mubr.bf16.mxu0 %v1130
      %1664 = vmatmul.mubr.bf16.gmra.mxu0 %v1129
      %v1665 = vpop.f32.mrf.mxu0
      %v1666 = vadd.f32 %v1254, %v1665
      %v1667 = vpop.f32.mrf.mxu0
      %v1668 = vadd.f32 %v1258, %v1667
      %v1669 = vpop.f32.mrf.mxu0
      %v1670 = vadd.f32 %v1254, %v1669
      %v1671 = vpop.f32.mrf.mxu0
      %v1672 = vadd.f32 %v1258, %v1671
      %1673 = vmatprep.mubr.bf16.mxu0 %v1132
      %1674 = vmatmul.mubr.bf16.gmra.mxu0 %v1131
      %v1675 = vpop.f32.mrf.mxu0
      %v1676 = vadd.f32 %v1254, %v1675
      %v1677 = vpop.f32.mrf.mxu0
      %v1678 = vadd.f32 %v1258, %v1677
      %v1679 = vpop.f32.mrf.mxu0
      %v1680 = vadd.f32 %v1254, %v1679
      %v1681 = vpop.f32.mrf.mxu0
      %v1682 = vadd.f32 %v1258, %v1681
      %1683 = vmatprep.mubr.bf16.mxu0 %v1134
      %1684 = vmatmul.mubr.bf16.gmra.mxu0 %v1133
      %v1685 = vpop.f32.mrf.mxu0
      %v1686 = vadd.f32 %v1254, %v1685
      %v1687 = vpop.f32.mrf.mxu0
      %v1688 = vadd.f32 %v1258, %v1687
      %v1689 = vpop.f32.mrf.mxu0
      %v1690 = vadd.f32 %v1254, %v1689
      %v1691 = vpop.f32.mrf.mxu0
      %v1692 = vadd.f32 %v1258, %v1691
      %1693 = vmatprep.mubr.bf16.mxu0 %v1136
      %1694 = vmatmul.mubr.bf16.gmra.mxu0 %v1135
      %v1695 = vpop.f32.mrf.mxu0
      %v1696 = vadd.f32 %v1254, %v1695
      %v1697 = vpop.f32.mrf.mxu0
      %v1698 = vadd.f32 %v1258, %v1697
      %v1699 = vpop.f32.mrf.mxu0
      %v1700 = vadd.f32 %v1254, %v1699
      %v1701 = vpop.f32.mrf.mxu0
      %v1702 = vadd.f32 %v1258, %v1701
      %1703 = vmatprep.mubr.bf16.mxu0 %v1138
      %1704 = vmatmul.mubr.bf16.gmra.mxu0 %v1137
      %v1705 = vpop.f32.mrf.mxu0
      %v1706 = vadd.f32 %v1254, %v1705
      %v1707 = vpop.f32.mrf.mxu0
      %v1708 = vadd.f32 %v1258, %v1707
      %v1709 = vpop.f32.mrf.mxu0
      %v1710 = vadd.f32 %v1254, %v1709
      %v1711 = vpop.f32.mrf.mxu0
      %v1712 = vadd.f32 %v1258, %v1711
      %1713 = vmatprep.mubr.bf16.mxu0 %v1140
      %1714 = vmatmul.mubr.bf16.gmra.mxu0 %v1139
      %v1715 = vpop.f32.mrf.mxu0
      %v1716 = vadd.f32 %v1254, %v1715
      %v1717 = vpop.f32.mrf.mxu0
      %v1718 = vadd.f32 %v1258, %v1717
      %v1719 = vpop.f32.mrf.mxu0
      %v1720 = vadd.f32 %v1254, %v1719
      %v1721 = vpop.f32.mrf.mxu0
      %v1722 = vadd.f32 %v1258, %v1721
      %1723 = vmatprep.mubr.bf16.mxu0 %v1142
      %1724 = vmatmul.mubr.bf16.gmra.mxu0 %v1141
      %v1725 = vpop.f32.mrf.mxu0
      %v1726 = vadd.f32 %v1254, %v1725
      %v1727 = vpop.f32.mrf.mxu0
      %v1728 = vadd.f32 %v1258, %v1727
      %v1729 = vpop.f32.mrf.mxu0
      %v1730 = vadd.f32 %v1254, %v1729
      %v1731 = vpop.f32.mrf.mxu0
      %v1732 = vadd.f32 %v1258, %v1731
      %1733 = vmatprep.mubr.bf16.mxu0 %v1144
      %1734 = vmatmul.mubr.bf16.gmra.mxu0 %v1143
      %v1735 = vpop.f32.mrf.mxu0
      %v1736 = vadd.f32 %v1254, %v1735
      %v1737 = vpop.f32.mrf.mxu0
      %v1738 = vadd.f32 %v1258, %v1737
      %v1739 = vpop.f32.mrf.mxu0
      %v1740 = vadd.f32 %v1254, %v1739
      %v1741 = vpop.f32.mrf.mxu0
      %v1742 = vadd.f32 %v1258, %v1741
      %1743 = vmatprep.mubr.bf16.mxu0 %v1146
      %1744 = vmatmul.mubr.bf16.gmra.mxu0 %v1145
      %v1745 = vpop.f32.mrf.mxu0
      %v1746 = vadd.f32 %v1254, %v1745
      %v1747 = vpop.f32.mrf.mxu0
      %v1748 = vadd.f32 %v1258, %v1747
      %v1749 = vpop.f32.mrf.mxu0
      %v1750 = vadd.f32 %v1254, %v1749
      %v1751 = vpop.f32.mrf.mxu0
      %v1752 = vadd.f32 %v1258, %v1751
      %1753 = vmatprep.mubr.bf16.mxu0 %v1148
      %1754 = vmatmul.mubr.bf16.gmra.mxu0 %v1147
      %v1755 = vpop.f32.mrf.mxu0
      %v1756 = vadd.f32 %v1254, %v1755
      %v1757 = vpop.f32.mrf.mxu0
      %v1758 = vadd.f32 %v1258, %v1757
      %v1759 = vpop.f32.mrf.mxu0
      %v1760 = vadd.f32 %v1254, %v1759
      %v1761 = vpop.f32.mrf.mxu0
      %v1762 = vadd.f32 %v1258, %v1761
      %1763 = vmatprep.mubr.bf16.mxu0 %v1150
      %1764 = vmatmul.mubr.bf16.gmra.mxu0 %v1149
      %v1765 = vpop.f32.mrf.mxu0
      %v1766 = vadd.f32 %v1254, %v1765
      %v1767 = vpop.f32.mrf.mxu0
      %v1768 = vadd.f32 %v1258, %v1767
      %v1769 = vpop.f32.mrf.mxu0
      %v1770 = vadd.f32 %v1254, %v1769
      %v1771 = vpop.f32.mrf.mxu0
      %v1772 = vadd.f32 %v1258, %v1771
      %1773 = vmatprep.mubr.bf16.mxu0 %v1152
      %1774 = vmatmul.mubr.bf16.gmra.mxu0 %v1151
      %v1775 = vpop.f32.mrf.mxu0
      %v1776 = vadd.f32 %v1254, %v1775
      %v1777 = vpop.f32.mrf.mxu0
      %v1778 = vadd.f32 %v1258, %v1777
      %v1779 = vpop.f32.mrf.mxu0
      %v1780 = vadd.f32 %v1254, %v1779
      %v1781 = vpop.f32.mrf.mxu0
      %v1782 = vadd.f32 %v1258, %v1781
      %1783 = vmatprep.mubr.bf16.mxu0 %v1154
      %1784 = vmatmul.mubr.bf16.gmra.mxu0 %v1153
      %v1785 = vpop.f32.mrf.mxu0
      %v1786 = vadd.f32 %v1254, %v1785
      %v1787 = vpop.f32.mrf.mxu0
      %v1788 = vadd.f32 %v1258, %v1787
      %v1789 = vpop.f32.mrf.mxu0
      %v1790 = vadd.f32 %v1254, %v1789
      %v1791 = vpop.f32.mrf.mxu0
      %v1792 = vadd.f32 %v1258, %v1791
      %1793 = vmatprep.mubr.bf16.mxu0 %v1156
      %1794 = vmatmul.mubr.bf16.gmra.mxu0 %v1155
      %v1795 = vpop.f32.mrf.mxu0
      %v1796 = vadd.f32 %v1254, %v1795
      %v1797 = vpop.f32.mrf.mxu0
      %v1798 = vadd.f32 %v1258, %v1797
      %v1799 = vpop.f32.mrf.mxu0
      %v1800 = vadd.f32 %v1254, %v1799
      %v1801 = vpop.f32.mrf.mxu0
      %v1802 = vadd.f32 %v1258, %v1801
      %1803 = vmatprep.mubr.bf16.mxu0 %v1158
      %1804 = vmatmul.mubr.bf16.gmra.mxu0 %v1157
      %v1805 = vpop.f32.mrf.mxu0
      %v1806 = vadd.f32 %v1254, %v1805
      %v1807 = vpop.f32.mrf.mxu0
      %v1808 = vadd.f32 %v1258, %v1807
      %v1809 = vpop.f32.mrf.mxu0
      %v1810 = vadd.f32 %v1254, %v1809
      %v1811 = vpop.f32.mrf.mxu0
      %v1812 = vadd.f32 %v1258, %v1811
      %1813 = vmatprep.mubr.bf16.mxu0 %v1160
      %1814 = vmatmul.mubr.bf16.gmra.mxu0 %v1159
      %v1815 = vpop.f32.mrf.mxu0
      %v1816 = vadd.f32 %v1254, %v1815
      %v1817 = vpop.f32.mrf.mxu0
      %v1818 = vadd.f32 %v1258, %v1817
      %v1819 = vpop.f32.mrf.mxu0
      %v1820 = vadd.f32 %v1254, %v1819
      %v1821 = vpop.f32.mrf.mxu0
      %v1822 = vadd.f32 %v1258, %v1821
      %1823 = vmatprep.mubr.bf16.mxu0 %v1162
      %1824 = vmatmul.mubr.bf16.gmra.mxu0 %v1161
      %v1825 = vpop.f32.mrf.mxu0
      %v1826 = vadd.f32 %v1254, %v1825
      %v1827 = vpop.f32.mrf.mxu0
      %v1828 = vadd.f32 %v1258, %v1827
      %v1829 = vpop.f32.mrf.mxu0
      %v1830 = vadd.f32 %v1254, %v1829
      %v1831 = vpop.f32.mrf.mxu0
      %v1832 = vadd.f32 %v1258, %v1831
      %1833 = vmatprep.mubr.bf16.mxu0 %v1164
      %1834 = vmatmul.mubr.bf16.gmra.mxu0 %v1163
      %v1835 = vpop.f32.mrf.mxu0
      %v1836 = vadd.f32 %v1254, %v1835
      %v1837 = vpop.f32.mrf.mxu0
      %v1838 = vadd.f32 %v1258, %v1837
      %v1839 = vpop.f32.mrf.mxu0
      %v1840 = vadd.f32 %v1254, %v1839
      %v1841 = vpop.f32.mrf.mxu0
      %v1842 = vadd.f32 %v1258, %v1841
      %1843 = vmatprep.mubr.bf16.mxu0 %v1166
      %1844 = vmatmul.mubr.bf16.gmra.mxu0 %v1165
      %v1845 = vpop.f32.mrf.mxu0
      %v1846 = vadd.f32 %v1254, %v1845
      %v1847 = vpop.f32.mrf.mxu0
      %v1848 = vadd.f32 %v1258, %v1847
      %v1849 = vpop.f32.mrf.mxu0
      %v1850 = vadd.f32 %v1254, %v1849
      %v1851 = vpop.f32.mrf.mxu0
      %v1852 = vadd.f32 %v1258, %v1851
      %1853 = vmatprep.mubr.bf16.mxu0 %v1168
      %1854 = vmatmul.mubr.bf16.gmra.mxu0 %v1167
      %v1855 = vpop.f32.mrf.mxu0
      %v1856 = vadd.f32 %v1254, %v1855
      %v1857 = vpop.f32.mrf.mxu0
      %v1858 = vadd.f32 %v1258, %v1857
      %v1859 = vpop.f32.mrf.mxu0
      %v1860 = vadd.f32 %v1254, %v1859
      %v1861 = vpop.f32.mrf.mxu0
      %v1862 = vadd.f32 %v1258, %v1861
      %1863 = vmatprep.mubr.bf16.mxu0 %v1170
      %1864 = vmatmul.mubr.bf16.gmra.mxu0 %v1169
      %v1865 = vpop.f32.mrf.mxu0
      %v1866 = vadd.f32 %v1254, %v1865
      %v1867 = vpop.f32.mrf.mxu0
      %v1868 = vadd.f32 %v1258, %v1867
      %v1869 = vpop.f32.mrf.mxu0
      %v1870 = vadd.f32 %v1254, %v1869
      %v1871 = vpop.f32.mrf.mxu0
      %v1872 = vadd.f32 %v1258, %v1871
      %1873 = vmatprep.mubr.bf16.mxu0 %v1172
      %1874 = vmatmul.mubr.bf16.gmra.mxu0 %v1171
      %v1875 = vpop.f32.mrf.mxu0
      %v1876 = vadd.f32 %v1254, %v1875
      %v1877 = vpop.f32.mrf.mxu0
      %v1878 = vadd.f32 %v1258, %v1877
      %v1879 = vpop.f32.mrf.mxu0
      %v1880 = vadd.f32 %v1254, %v1879
      %v1881 = vpop.f32.mrf.mxu0
      %v1882 = vadd.f32 %v1258, %v1881
      %1883 = vmatprep.mubr.bf16.mxu0 %v1174
      %1884 = vmatmul.mubr.bf16.gmra.mxu0 %v1173
      %v1885 = vpop.f32.mrf.mxu0
      %v1886 = vadd.f32 %v1254, %v1885
      %v1887 = vpop.f32.mrf.mxu0
      %v1888 = vadd.f32 %v1258, %v1887
      %v1889 = vpop.f32.mrf.mxu0
      %v1890 = vadd.f32 %v1254, %v1889
      %v1891 = vpop.f32.mrf.mxu0
      %v1892 = vadd.f32 %v1258, %v1891
      %1893 = vmatprep.mubr.bf16.mxu0 %v1176
      %1894 = vmatmul.mubr.bf16.gmra.mxu0 %v1175
      %v1895 = vpop.f32.mrf.mxu0
      %v1896 = vadd.f32 %v1254, %v1895
      %v1897 = vpop.f32.mrf.mxu0
      %v1898 = vadd.f32 %v1258, %v1897
      %v1899 = vpop.f32.mrf.mxu0
      %v1900 = vadd.f32 %v1254, %v1899
      %v1901 = vpop.f32.mrf.mxu0
      %v1902 = vadd.f32 %v1258, %v1901
      %1903 = vmatprep.mubr.bf16.mxu0 %v1178
      %1904 = vmatmul.mubr.bf16.gmra.mxu0 %v1177
      %v1905 = vpop.f32.mrf.mxu0
      %v1906 = vadd.f32 %v1254, %v1905
      %v1907 = vpop.f32.mrf.mxu0
      %v1908 = vadd.f32 %v1258, %v1907
      %v1909 = vpop.f32.mrf.mxu0
      %v1910 = vadd.f32 %v1254, %v1909
      %v1911 = vpop.f32.mrf.mxu0
      %v1912 = vadd.f32 %v1258, %v1911
      %1913 = vmatprep.mubr.bf16.mxu0 %v1180
      %1914 = vmatmul.mubr.bf16.gmra.mxu0 %v1179
      %v1915 = vpop.f32.mrf.mxu0
      %v1916 = vadd.f32 %v1254, %v1915
      %v1917 = vpop.f32.mrf.mxu0
      %v1918 = vadd.f32 %v1258, %v1917
      %v1919 = vpop.f32.mrf.mxu0
      %v1920 = vadd.f32 %v1254, %v1919
      %v1921 = vpop.f32.mrf.mxu0
      %v1922 = vadd.f32 %v1258, %v1921
      %1923 = vmatprep.mubr.bf16.mxu0 %v1182
      %1924 = vmatmul.mubr.bf16.gmra.mxu0 %v1181
      %v1925 = vpop.f32.mrf.mxu0
      %v1926 = vadd.f32 %v1254, %v1925
      %v1927 = vpop.f32.mrf.mxu0
      %v1928 = vadd.f32 %v1258, %v1927
      %v1929 = vpop.f32.mrf.mxu0
      %v1930 = vadd.f32 %v1254, %v1929
      %v1931 = vpop.f32.mrf.mxu0
      %v1932 = vadd.f32 %v1258, %v1931
      %1933 = vmatprep.mubr.bf16.mxu0 %v1184
      %1934 = vmatmul.mubr.bf16.gmra.mxu0 %v1183
      %v1935 = vpop.f32.mrf.mxu0
      %v1936 = vadd.f32 %v1254, %v1935
      %v1937 = vpop.f32.mrf.mxu0
      %v1938 = vadd.f32 %v1258, %v1937
      %v1939 = vpop.f32.mrf.mxu0
      %v1940 = vadd.f32 %v1254, %v1939
      %v1941 = vpop.f32.mrf.mxu0
      %v1942 = vadd.f32 %v1258, %v1941
      %1943 = vdwg.mxu0
      %1944 = vmatprep.subr.bf16.mxu0 %v1494
      %1945 = vmatpush1.bf16.msra.mxu0 %v1493
      %1946 = vmatprep.subr.bf16.mxu0 %v1490
      %1947 = vmatpush1.bf16.msra.mxu0 %v1489
      %1948 = vmatprep.subr.bf16.mxu0 %v1486
      %1949 = vmatpush1.bf16.msra.mxu0 %v1485
      %1950 = vmatprep.subr.bf16.mxu0 %v1482
      %1951 = vmatpush1.bf16.msra.mxu0 %v1481
      %1952 = vmatprep.subr.bf16.mxu0 %v1478
      %1953 = vmatpush1.bf16.msra.mxu0 %v1477
      %1954 = vmatprep.subr.bf16.mxu0 %v1474
      %1955 = vmatpush1.bf16.msra.mxu0 %v1473
      %1956 = vmatprep.subr.bf16.mxu0 %v1470
      %1957 = vmatpush1.bf16.msra.mxu0 %v1469
      %1958 = vmatprep.subr.bf16.mxu0 %v1466
      %1959 = vmatpush1.bf16.msra.mxu0 %v1465
      %1960 = vmatprep.subr.bf16.mxu0 %v1526
      %1961 = vmatpush2.bf16.msra.mxu0 %v1525
      %1962 = vmatprep.subr.bf16.mxu0 %v1522
      %1963 = vmatpush2.bf16.msra.mxu0 %v1521
      %1964 = vmatprep.subr.bf16.mxu0 %v1518
      %1965 = vmatpush2.bf16.msra.mxu0 %v1517
      %1966 = vmatprep.subr.bf16.mxu0 %v1514
      %1967 = vmatpush2.bf16.msra.mxu0 %v1513
      %1968 = vmatprep.subr.bf16.mxu0 %v1510
      %1969 = vmatpush2.bf16.msra.mxu0 %v1509
      %1970 = vmatprep.subr.bf16.mxu0 %v1506
      %1971 = vmatpush2.bf16.msra.mxu0 %v1505
      %1972 = vmatprep.subr.bf16.mxu0 %v1502
      %1973 = vmatpush2.bf16.msra.mxu0 %v1501
      %1974 = vmatprep.subr.bf16.mxu0 %v1498
      %1975 = vmatpush2.bf16.msra.mxu0 %v1497
      %1976 = vmatprep.mubr.bf16.mxu0 %v1122
      %1977 = vmatmul.mubr.bf16.gmra.mxu0 %v1121
      %v1978 = vpop.f32.mrf.mxu0
      %v1979 = vadd.f32 %v1262, %v1978
      %v1980 = vpop.f32.mrf.mxu0
      %v1981 = vadd.f32 %v1266, %v1980
      %v1982 = vpop.f32.mrf.mxu0
      %v1983 = vadd.f32 %v1262, %v1982
      %v1984 = vpop.f32.mrf.mxu0
      %v1985 = vadd.f32 %v1266, %v1984
      %1986 = vmatprep.mubr.bf16.mxu0 %v1124
      %1987 = vmatmul.mubr.bf16.gmra.mxu0 %v1123
      %v1988 = vpop.f32.mrf.mxu0
      %v1989 = vadd.f32 %v1262, %v1988
      %v1990 = vpop.f32.mrf.mxu0
      %v1991 = vadd.f32 %v1266, %v1990
      %v1992 = vpop.f32.mrf.mxu0
      %v1993 = vadd.f32 %v1262, %v1992
      %v1994 = vpop.f32.mrf.mxu0
      %v1995 = vadd.f32 %v1266, %v1994
      %1996 = vmatprep.mubr.bf16.mxu0 %v1126
      %1997 = vmatmul.mubr.bf16.gmra.mxu0 %v1125
      %v1998 = vpop.f32.mrf.mxu0
      %v1999 = vadd.f32 %v1262, %v1998
      %v2000 = vpop.f32.mrf.mxu0
      %v2001 = vadd.f32 %v1266, %v2000
      %v2002 = vpop.f32.mrf.mxu0
      %v2003 = vadd.f32 %v1262, %v2002
      %v2004 = vpop.f32.mrf.mxu0
      %v2005 = vadd.f32 %v1266, %v2004
      %2006 = vmatprep.mubr.bf16.mxu0 %v1128
      %2007 = vmatmul.mubr.bf16.gmra.mxu0 %v1127
      %v2008 = vpop.f32.mrf.mxu0
      %v2009 = vadd.f32 %v1262, %v2008
      %v2010 = vpop.f32.mrf.mxu0
      %v2011 = vadd.f32 %v1266, %v2010
      %v2012 = vpop.f32.mrf.mxu0
      %v2013 = vadd.f32 %v1262, %v2012
      %v2014 = vpop.f32.mrf.mxu0
      %v2015 = vadd.f32 %v1266, %v2014
      %2016 = vmatprep.mubr.bf16.mxu0 %v1130
      %2017 = vmatmul.mubr.bf16.gmra.mxu0 %v1129
      %v2018 = vpop.f32.mrf.mxu0
      %v2019 = vadd.f32 %v1262, %v2018
      %v2020 = vpop.f32.mrf.mxu0
      %v2021 = vadd.f32 %v1266, %v2020
      %v2022 = vpop.f32.mrf.mxu0
      %v2023 = vadd.f32 %v1262, %v2022
      %v2024 = vpop.f32.mrf.mxu0
      %v2025 = vadd.f32 %v1266, %v2024
      %2026 = vmatprep.mubr.bf16.mxu0 %v1132
      %2027 = vmatmul.mubr.bf16.gmra.mxu0 %v1131
      %v2028 = vpop.f32.mrf.mxu0
      %v2029 = vadd.f32 %v1262, %v2028
      %v2030 = vpop.f32.mrf.mxu0
      %v2031 = vadd.f32 %v1266, %v2030
      %v2032 = vpop.f32.mrf.mxu0
      %v2033 = vadd.f32 %v1262, %v2032
      %v2034 = vpop.f32.mrf.mxu0
      %v2035 = vadd.f32 %v1266, %v2034
      %2036 = vmatprep.mubr.bf16.mxu0 %v1134
      %2037 = vmatmul.mubr.bf16.gmra.mxu0 %v1133
      %v2038 = vpop.f32.mrf.mxu0
      %v2039 = vadd.f32 %v1262, %v2038
      %v2040 = vpop.f32.mrf.mxu0
      %v2041 = vadd.f32 %v1266, %v2040
      %v2042 = vpop.f32.mrf.mxu0
      %v2043 = vadd.f32 %v1262, %v2042
      %v2044 = vpop.f32.mrf.mxu0
      %v2045 = vadd.f32 %v1266, %v2044
      %2046 = vmatprep.mubr.bf16.mxu0 %v1136
      %2047 = vmatmul.mubr.bf16.gmra.mxu0 %v1135
      %v2048 = vpop.f32.mrf.mxu0
      %v2049 = vadd.f32 %v1262, %v2048
      %v2050 = vpop.f32.mrf.mxu0
      %v2051 = vadd.f32 %v1266, %v2050
      %v2052 = vpop.f32.mrf.mxu0
      %v2053 = vadd.f32 %v1262, %v2052
      %v2054 = vpop.f32.mrf.mxu0
      %v2055 = vadd.f32 %v1266, %v2054
      %2056 = vmatprep.mubr.bf16.mxu0 %v1138
      %2057 = vmatmul.mubr.bf16.gmra.mxu0 %v1137
      %v2058 = vpop.f32.mrf.mxu0
      %v2059 = vadd.f32 %v1262, %v2058
      %v2060 = vpop.f32.mrf.mxu0
      %v2061 = vadd.f32 %v1266, %v2060
      %v2062 = vpop.f32.mrf.mxu0
      %v2063 = vadd.f32 %v1262, %v2062
      %v2064 = vpop.f32.mrf.mxu0
      %v2065 = vadd.f32 %v1266, %v2064
      %2066 = vmatprep.mubr.bf16.mxu0 %v1140
      %2067 = vmatmul.mubr.bf16.gmra.mxu0 %v1139
      %v2068 = vpop.f32.mrf.mxu0
      %v2069 = vadd.f32 %v1262, %v2068
      %v2070 = vpop.f32.mrf.mxu0
      %v2071 = vadd.f32 %v1266, %v2070
      %v2072 = vpop.f32.mrf.mxu0
      %v2073 = vadd.f32 %v1262, %v2072
      %v2074 = vpop.f32.mrf.mxu0
      %v2075 = vadd.f32 %v1266, %v2074
      %2076 = vmatprep.mubr.bf16.mxu0 %v1142
      %2077 = vmatmul.mubr.bf16.gmra.mxu0 %v1141
      %v2078 = vpop.f32.mrf.mxu0
      %v2079 = vadd.f32 %v1262, %v2078
      %v2080 = vpop.f32.mrf.mxu0
      %v2081 = vadd.f32 %v1266, %v2080
      %v2082 = vpop.f32.mrf.mxu0
      %v2083 = vadd.f32 %v1262, %v2082
      %v2084 = vpop.f32.mrf.mxu0
      %v2085 = vadd.f32 %v1266, %v2084
      %2086 = vmatprep.mubr.bf16.mxu0 %v1144
      %2087 = vmatmul.mubr.bf16.gmra.mxu0 %v1143
      %v2088 = vpop.f32.mrf.mxu0
      %v2089 = vadd.f32 %v1262, %v2088
      %v2090 = vpop.f32.mrf.mxu0
      %v2091 = vadd.f32 %v1266, %v2090
      %v2092 = vpop.f32.mrf.mxu0
      %v2093 = vadd.f32 %v1262, %v2092
      %v2094 = vpop.f32.mrf.mxu0
      %v2095 = vadd.f32 %v1266, %v2094
      %2096 = vmatprep.mubr.bf16.mxu0 %v1146
      %2097 = vmatmul.mubr.bf16.gmra.mxu0 %v1145
      %v2098 = vpop.f32.mrf.mxu0
      %v2099 = vadd.f32 %v1262, %v2098
      %v2100 = vpop.f32.mrf.mxu0
      %v2101 = vadd.f32 %v1266, %v2100
      %v2102 = vpop.f32.mrf.mxu0
      %v2103 = vadd.f32 %v1262, %v2102
      %v2104 = vpop.f32.mrf.mxu0
      %v2105 = vadd.f32 %v1266, %v2104
      %2106 = vmatprep.mubr.bf16.mxu0 %v1148
      %2107 = vmatmul.mubr.bf16.gmra.mxu0 %v1147
      %v2108 = vpop.f32.mrf.mxu0
      %v2109 = vadd.f32 %v1262, %v2108
      %v2110 = vpop.f32.mrf.mxu0
      %v2111 = vadd.f32 %v1266, %v2110
      %v2112 = vpop.f32.mrf.mxu0
      %v2113 = vadd.f32 %v1262, %v2112
      %v2114 = vpop.f32.mrf.mxu0
      %v2115 = vadd.f32 %v1266, %v2114
      %2116 = vmatprep.mubr.bf16.mxu0 %v1150
      %2117 = vmatmul.mubr.bf16.gmra.mxu0 %v1149
      %v2118 = vpop.f32.mrf.mxu0
      %v2119 = vadd.f32 %v1262, %v2118
      %v2120 = vpop.f32.mrf.mxu0
      %v2121 = vadd.f32 %v1266, %v2120
      %v2122 = vpop.f32.mrf.mxu0
      %v2123 = vadd.f32 %v1262, %v2122
      %v2124 = vpop.f32.mrf.mxu0
      %v2125 = vadd.f32 %v1266, %v2124
      %2126 = vmatprep.mubr.bf16.mxu0 %v1152
      %2127 = vmatmul.mubr.bf16.gmra.mxu0 %v1151
      %v2128 = vpop.f32.mrf.mxu0
      %v2129 = vadd.f32 %v1262, %v2128
      %v2130 = vpop.f32.mrf.mxu0
      %v2131 = vadd.f32 %v1266, %v2130
      %v2132 = vpop.f32.mrf.mxu0
      %v2133 = vadd.f32 %v1262, %v2132
      %v2134 = vpop.f32.mrf.mxu0
      %v2135 = vadd.f32 %v1266, %v2134
      %2136 = vmatprep.mubr.bf16.mxu0 %v1154
      %2137 = vmatmul.mubr.bf16.gmra.mxu0 %v1153
      %v2138 = vpop.f32.mrf.mxu0
      %v2139 = vadd.f32 %v1262, %v2138
      %v2140 = vpop.f32.mrf.mxu0
      %v2141 = vadd.f32 %v1266, %v2140
      %v2142 = vpop.f32.mrf.mxu0
      %v2143 = vadd.f32 %v1262, %v2142
      %v2144 = vpop.f32.mrf.mxu0
      %v2145 = vadd.f32 %v1266, %v2144
      %2146 = vmatprep.mubr.bf16.mxu0 %v1156
      %2147 = vmatmul.mubr.bf16.gmra.mxu0 %v1155
      %v2148 = vpop.f32.mrf.mxu0
      %v2149 = vadd.f32 %v1262, %v2148
      %v2150 = vpop.f32.mrf.mxu0
      %v2151 = vadd.f32 %v1266, %v2150
      %v2152 = vpop.f32.mrf.mxu0
      %v2153 = vadd.f32 %v1262, %v2152
      %v2154 = vpop.f32.mrf.mxu0
      %v2155 = vadd.f32 %v1266, %v2154
      %2156 = vmatprep.mubr.bf16.mxu0 %v1158
      %2157 = vmatmul.mubr.bf16.gmra.mxu0 %v1157
      %v2158 = vpop.f32.mrf.mxu0
      %v2159 = vadd.f32 %v1262, %v2158
      %v2160 = vpop.f32.mrf.mxu0
      %v2161 = vadd.f32 %v1266, %v2160
      %v2162 = vpop.f32.mrf.mxu0
      %v2163 = vadd.f32 %v1262, %v2162
      %v2164 = vpop.f32.mrf.mxu0
      %v2165 = vadd.f32 %v1266, %v2164
      %2166 = vmatprep.mubr.bf16.mxu0 %v1160
      %2167 = vmatmul.mubr.bf16.gmra.mxu0 %v1159
      %v2168 = vpop.f32.mrf.mxu0
      %v2169 = vadd.f32 %v1262, %v2168
      %v2170 = vpop.f32.mrf.mxu0
      %v2171 = vadd.f32 %v1266, %v2170
      %v2172 = vpop.f32.mrf.mxu0
      %v2173 = vadd.f32 %v1262, %v2172
      %v2174 = vpop.f32.mrf.mxu0
      %v2175 = vadd.f32 %v1266, %v2174
      %2176 = vmatprep.mubr.bf16.mxu0 %v1162
      %2177 = vmatmul.mubr.bf16.gmra.mxu0 %v1161
      %v2178 = vpop.f32.mrf.mxu0
      %v2179 = vadd.f32 %v1262, %v2178
      %v2180 = vpop.f32.mrf.mxu0
      %v2181 = vadd.f32 %v1266, %v2180
      %v2182 = vpop.f32.mrf.mxu0
      %v2183 = vadd.f32 %v1262, %v2182
      %v2184 = vpop.f32.mrf.mxu0
      %v2185 = vadd.f32 %v1266, %v2184
      %2186 = vmatprep.mubr.bf16.mxu0 %v1164
      %2187 = vmatmul.mubr.bf16.gmra.mxu0 %v1163
      %v2188 = vpop.f32.mrf.mxu0
      %v2189 = vadd.f32 %v1262, %v2188
      %v2190 = vpop.f32.mrf.mxu0
      %v2191 = vadd.f32 %v1266, %v2190
      %v2192 = vpop.f32.mrf.mxu0
      %v2193 = vadd.f32 %v1262, %v2192
      %v2194 = vpop.f32.mrf.mxu0
      %v2195 = vadd.f32 %v1266, %v2194
      %2196 = vmatprep.mubr.bf16.mxu0 %v1166
      %2197 = vmatmul.mubr.bf16.gmra.mxu0 %v1165
      %v2198 = vpop.f32.mrf.mxu0
      %v2199 = vadd.f32 %v1262, %v2198
      %v2200 = vpop.f32.mrf.mxu0
      %v2201 = vadd.f32 %v1266, %v2200
      %v2202 = vpop.f32.mrf.mxu0
      %v2203 = vadd.f32 %v1262, %v2202
      %v2204 = vpop.f32.mrf.mxu0
      %v2205 = vadd.f32 %v1266, %v2204
      %2206 = vmatprep.mubr.bf16.mxu0 %v1168
      %2207 = vmatmul.mubr.bf16.gmra.mxu0 %v1167
      %v2208 = vpop.f32.mrf.mxu0
      %v2209 = vadd.f32 %v1262, %v2208
      %v2210 = vpop.f32.mrf.mxu0
      %v2211 = vadd.f32 %v1266, %v2210
      %v2212 = vpop.f32.mrf.mxu0
      %v2213 = vadd.f32 %v1262, %v2212
      %v2214 = vpop.f32.mrf.mxu0
      %v2215 = vadd.f32 %v1266, %v2214
      %2216 = vmatprep.mubr.bf16.mxu0 %v1170
      %2217 = vmatmul.mubr.bf16.gmra.mxu0 %v1169
      %v2218 = vpop.f32.mrf.mxu0
      %v2219 = vadd.f32 %v1262, %v2218
      %v2220 = vpop.f32.mrf.mxu0
      %v2221 = vadd.f32 %v1266, %v2220
      %v2222 = vpop.f32.mrf.mxu0
      %v2223 = vadd.f32 %v1262, %v2222
      %v2224 = vpop.f32.mrf.mxu0
      %v2225 = vadd.f32 %v1266, %v2224
      %2226 = vmatprep.mubr.bf16.mxu0 %v1172
      %2227 = vmatmul.mubr.bf16.gmra.mxu0 %v1171
      %v2228 = vpop.f32.mrf.mxu0
      %v2229 = vadd.f32 %v1262, %v2228
      %v2230 = vpop.f32.mrf.mxu0
      %v2231 = vadd.f32 %v1266, %v2230
      %v2232 = vpop.f32.mrf.mxu0
      %v2233 = vadd.f32 %v1262, %v2232
      %v2234 = vpop.f32.mrf.mxu0
      %v2235 = vadd.f32 %v1266, %v2234
      %2236 = vmatprep.mubr.bf16.mxu0 %v1174
      %2237 = vmatmul.mubr.bf16.gmra.mxu0 %v1173
      %v2238 = vpop.f32.mrf.mxu0
      %v2239 = vadd.f32 %v1262, %v2238
      %v2240 = vpop.f32.mrf.mxu0
      %v2241 = vadd.f32 %v1266, %v2240
      %v2242 = vpop.f32.mrf.mxu0
      %v2243 = vadd.f32 %v1262, %v2242
      %v2244 = vpop.f32.mrf.mxu0
      %v2245 = vadd.f32 %v1266, %v2244
      %2246 = vmatprep.mubr.bf16.mxu0 %v1176
      %2247 = vmatmul.mubr.bf16.gmra.mxu0 %v1175
      %v2248 = vpop.f32.mrf.mxu0
      %v2249 = vadd.f32 %v1262, %v2248
      %v2250 = vpop.f32.mrf.mxu0
      %v2251 = vadd.f32 %v1266, %v2250
      %v2252 = vpop.f32.mrf.mxu0
      %v2253 = vadd.f32 %v1262, %v2252
      %v2254 = vpop.f32.mrf.mxu0
      %v2255 = vadd.f32 %v1266, %v2254
      %2256 = vmatprep.mubr.bf16.mxu0 %v1178
      %2257 = vmatmul.mubr.bf16.gmra.mxu0 %v1177
      %v2258 = vpop.f32.mrf.mxu0
      %v2259 = vadd.f32 %v1262, %v2258
      %v2260 = vpop.f32.mrf.mxu0
      %v2261 = vadd.f32 %v1266, %v2260
      %v2262 = vpop.f32.mrf.mxu0
      %v2263 = vadd.f32 %v1262, %v2262
      %v2264 = vpop.f32.mrf.mxu0
      %v2265 = vadd.f32 %v1266, %v2264
      %2266 = vmatprep.mubr.bf16.mxu0 %v1180
      %2267 = vmatmul.mubr.bf16.gmra.mxu0 %v1179
      %v2268 = vpop.f32.mrf.mxu0
      %v2269 = vadd.f32 %v1262, %v2268
      %v2270 = vpop.f32.mrf.mxu0
      %v2271 = vadd.f32 %v1266, %v2270
      %v2272 = vpop.f32.mrf.mxu0
      %v2273 = vadd.f32 %v1262, %v2272
      %v2274 = vpop.f32.mrf.mxu0
      %v2275 = vadd.f32 %v1266, %v2274
      %2276 = vmatprep.mubr.bf16.mxu0 %v1182
      %2277 = vmatmul.mubr.bf16.gmra.mxu0 %v1181
      %v2278 = vpop.f32.mrf.mxu0
      %v2279 = vadd.f32 %v1262, %v2278
      %v2280 = vpop.f32.mrf.mxu0
      %v2281 = vadd.f32 %v1266, %v2280
      %v2282 = vpop.f32.mrf.mxu0
      %v2283 = vadd.f32 %v1262, %v2282
      %v2284 = vpop.f32.mrf.mxu0
      %v2285 = vadd.f32 %v1266, %v2284
      %2286 = vmatprep.mubr.bf16.mxu0 %v1184
      %2287 = vmatmul.mubr.bf16.gmra.mxu0 %v1183
      %v2288 = vpop.f32.mrf.mxu0
      %v2289 = vadd.f32 %v1262, %v2288
      %v2290 = vpop.f32.mrf.mxu0
      %v2291 = vadd.f32 %v1266, %v2290
      %v2292 = vpop.f32.mrf.mxu0
      %v2293 = vadd.f32 %v1262, %v2292
      %v2294 = vpop.f32.mrf.mxu0
      %v2295 = vadd.f32 %v1266, %v2294
      %2296 = vdwg.mxu0
      %v2297 = vmax.f32 %v1626, 0.0
      %v2298 = vmax.f32 %v1628, 0.0
      %v2299 = vmax.f32 %v1979, 0.0
      %v2300 = vmax.f32 %v1981, 0.0
      %v2301 = vmax.f32 %v1630, 0.0
      %v2302 = vmax.f32 %v1632, 0.0
      %v2303 = vmax.f32 %v1983, 0.0
      %v2304 = vmax.f32 %v1985, 0.0
      %v2305 = vmax.f32 %v1636, 0.0
      %v2306 = vmax.f32 %v1638, 0.0
      %v2307 = vmax.f32 %v1989, 0.0
      %v2308 = vmax.f32 %v1991, 0.0
      %v2309 = vmax.f32 %v1640, 0.0
      %v2310 = vmax.f32 %v1642, 0.0
      %v2311 = vmax.f32 %v1993, 0.0
      %v2312 = vmax.f32 %v1995, 0.0
      %v2313 = vmax.f32 %v1646, 0.0
      %v2314 = vmax.f32 %v1648, 0.0
      %v2315 = vmax.f32 %v1999, 0.0
      %v2316 = vmax.f32 %v2001, 0.0
      %v2317 = vmax.f32 %v1650, 0.0
      %v2318 = vmax.f32 %v1652, 0.0
      %v2319 = vmax.f32 %v2003, 0.0
      %v2320 = vmax.f32 %v2005, 0.0
      %v2321 = vmax.f32 %v1656, 0.0
      %v2322 = vmax.f32 %v1658, 0.0
      %v2323 = vmax.f32 %v2009, 0.0
      %v2324 = vmax.f32 %v2011, 0.0
      %v2325 = vmax.f32 %v1660, 0.0
      %v2326 = vmax.f32 %v1662, 0.0
      %v2327 = vmax.f32 %v2013, 0.0
      %v2328 = vmax.f32 %v2015, 0.0
      %v2329 = vmax.f32 %v1666, 0.0
      %v2330 = vmax.f32 %v1668, 0.0
      %v2331 = vmax.f32 %v2019, 0.0
      %v2332 = vmax.f32 %v2021, 0.0
      %v2333 = vmax.f32 %v1670, 0.0
      %v2334 = vmax.f32 %v1672, 0.0
      %v2335 = vmax.f32 %v2023, 0.0
      %v2336 = vmax.f32 %v2025, 0.0
      %v2337 = vmax.f32 %v1676, 0.0
      %v2338 = vmax.f32 %v1678, 0.0
      %v2339 = vmax.f32 %v2029, 0.0
      %v2340 = vmax.f32 %v2031, 0.0
      %v2341 = vmax.f32 %v1680, 0.0
      %v2342 = vmax.f32 %v1682, 0.0
      %v2343 = vmax.f32 %v2033, 0.0
      %v2344 = vmax.f32 %v2035, 0.0
      %v2345 = vmax.f32 %v1686, 0.0
      %v2346 = vmax.f32 %v1688, 0.0
      %v2347 = vmax.f32 %v2039, 0.0
      %v2348 = vmax.f32 %v2041, 0.0
      %v2349 = vmax.f32 %v1690, 0.0
      %v2350 = vmax.f32 %v1692, 0.0
      %v2351 = vmax.f32 %v2043, 0.0
      %v2352 = vmax.f32 %v2045, 0.0
      %v2353 = vmax.f32 %v1696, 0.0
      %v2354 = vmax.f32 %v1698, 0.0
      %v2355 = vmax.f32 %v2049, 0.0
      %v2356 = vmax.f32 %v2051, 0.0
      %v2357 = vmax.f32 %v1700, 0.0
      %v2358 = vmax.f32 %v1702, 0.0
      %v2359 = vmax.f32 %v2053, 0.0
      %v2360 = vmax.f32 %v2055, 0.0
      %v2361 = vmax.f32 %v1706, 0.0
      %v2362 = vmax.f32 %v1708, 0.0
      %v2363 = vmax.f32 %v2059, 0.0
      %v2364 = vmax.f32 %v2061, 0.0
      %v2365 = vmax.f32 %v1710, 0.0
      %v2366 = vmax.f32 %v1712, 0.0
      %v2367 = vmax.f32 %v2063, 0.0
      %v2368 = vmax.f32 %v2065, 0.0
      %v2369 = vmax.f32 %v1716, 0.0
      %v2370 = vmax.f32 %v1718, 0.0
      %v2371 = vmax.f32 %v2069, 0.0
      %v2372 = vmax.f32 %v2071, 0.0
      %v2373 = vmax.f32 %v1720, 0.0
      %v2374 = vmax.f32 %v1722, 0.0
      %v2375 = vmax.f32 %v2073, 0.0
      %v2376 = vmax.f32 %v2075, 0.0
      %v2377 = vmax.f32 %v1726, 0.0
      %v2378 = vmax.f32 %v1728, 0.0
      %v2379 = vmax.f32 %v2079, 0.0
      %v2380 = vmax.f32 %v2081, 0.0
      %v2381 = vmax.f32 %v1730, 0.0
      %v2382 = vmax.f32 %v1732, 0.0
      %v2383 = vmax.f32 %v2083, 0.0
      %v2384 = vmax.f32 %v2085, 0.0
      %v2385 = vmax.f32 %v1736, 0.0
      %v2386 = vmax.f32 %v1738, 0.0
      %v2387 = vmax.f32 %v2089, 0.0
      %v2388 = vmax.f32 %v2091, 0.0
      %v2389 = vmax.f32 %v1740, 0.0
      %v2390 = vmax.f32 %v1742, 0.0
      %v2391 = vmax.f32 %v2093, 0.0
      %v2392 = vmax.f32 %v2095, 0.0
      %v2393 = vmax.f32 %v1746, 0.0
      %v2394 = vmax.f32 %v1748, 0.0
      %v2395 = vmax.f32 %v2099, 0.0
      %v2396 = vmax.f32 %v2101, 0.0
      %v2397 = vmax.f32 %v1750, 0.0
      %v2398 = vmax.f32 %v1752, 0.0
      %v2399 = vmax.f32 %v2103, 0.0
      %v2400 = vmax.f32 %v2105, 0.0
      %v2401 = vmax.f32 %v1756, 0.0
      %v2402 = vmax.f32 %v1758, 0.0
      %v2403 = vmax.f32 %v2109, 0.0
      %v2404 = vmax.f32 %v2111, 0.0
      %v2405 = vmax.f32 %v1760, 0.0
      %v2406 = vmax.f32 %v1762, 0.0
      %v2407 = vmax.f32 %v2113, 0.0
      %v2408 = vmax.f32 %v2115, 0.0
      %v2409 = vmax.f32 %v1766, 0.0
      %v2410 = vmax.f32 %v1768, 0.0
      %v2411 = vmax.f32 %v2119, 0.0
      %v2412 = vmax.f32 %v2121, 0.0
      %v2413 = vmax.f32 %v1770, 0.0
      %v2414 = vmax.f32 %v1772, 0.0
      %v2415 = vmax.f32 %v2123, 0.0
      %v2416 = vmax.f32 %v2125, 0.0
      %v2417 = vmax.f32 %v1776, 0.0
      %v2418 = vmax.f32 %v1778, 0.0
      %v2419 = vmax.f32 %v2129, 0.0
      %v2420 = vmax.f32 %v2131, 0.0
      %v2421 = vmax.f32 %v1780, 0.0
      %v2422 = vmax.f32 %v1782, 0.0
      %v2423 = vmax.f32 %v2133, 0.0
      %v2424 = vmax.f32 %v2135, 0.0
      %v2425 = vmax.f32 %v1786, 0.0
      %v2426 = vmax.f32 %v1788, 0.0
      %v2427 = vmax.f32 %v2139, 0.0
      %v2428 = vmax.f32 %v2141, 0.0
      %v2429 = vmax.f32 %v1790, 0.0
      %v2430 = vmax.f32 %v1792, 0.0
      %v2431 = vmax.f32 %v2143, 0.0
      %v2432 = vmax.f32 %v2145, 0.0
      %v2433 = vmax.f32 %v1796, 0.0
      %v2434 = vmax.f32 %v1798, 0.0
      %v2435 = vmax.f32 %v2149, 0.0
      %v2436 = vmax.f32 %v2151, 0.0
      %v2437 = vmax.f32 %v1800, 0.0
      %v2438 = vmax.f32 %v1802, 0.0
      %v2439 = vmax.f32 %v2153, 0.0
      %v2440 = vmax.f32 %v2155, 0.0
      %v2441 = vmax.f32 %v1806, 0.0
      %v2442 = vmax.f32 %v1808, 0.0
      %v2443 = vmax.f32 %v2159, 0.0
      %v2444 = vmax.f32 %v2161, 0.0
      %v2445 = vmax.f32 %v1810, 0.0
      %v2446 = vmax.f32 %v1812, 0.0
      %v2447 = vmax.f32 %v2163, 0.0
      %v2448 = vmax.f32 %v2165, 0.0
      %v2449 = vmax.f32 %v1816, 0.0
      %v2450 = vmax.f32 %v1818, 0.0
      %v2451 = vmax.f32 %v2169, 0.0
      %v2452 = vmax.f32 %v2171, 0.0
      %v2453 = vmax.f32 %v1820, 0.0
      %v2454 = vmax.f32 %v1822, 0.0
      %v2455 = vmax.f32 %v2173, 0.0
      %v2456 = vmax.f32 %v2175, 0.0
      %v2457 = vmax.f32 %v1826, 0.0
      %v2458 = vmax.f32 %v1828, 0.0
      %v2459 = vmax.f32 %v2179, 0.0
      %v2460 = vmax.f32 %v2181, 0.0
      %v2461 = vmax.f32 %v1830, 0.0
      %v2462 = vmax.f32 %v1832, 0.0
      %v2463 = vmax.f32 %v2183, 0.0
      %v2464 = vmax.f32 %v2185, 0.0
      %v2465 = vmax.f32 %v1836, 0.0
      %v2466 = vmax.f32 %v1838, 0.0
      %v2467 = vmax.f32 %v2189, 0.0
      %v2468 = vmax.f32 %v2191, 0.0
      %v2469 = vmax.f32 %v1840, 0.0
      %v2470 = vmax.f32 %v1842, 0.0
      %v2471 = vmax.f32 %v2193, 0.0
      %v2472 = vmax.f32 %v2195, 0.0
      %v2473 = vmax.f32 %v1846, 0.0
      %v2474 = vmax.f32 %v1848, 0.0
      %v2475 = vmax.f32 %v2199, 0.0
      %v2476 = vmax.f32 %v2201, 0.0
      %v2477 = vmax.f32 %v1850, 0.0
      %v2478 = vmax.f32 %v1852, 0.0
      %v2479 = vmax.f32 %v2203, 0.0
      %v2480 = vmax.f32 %v2205, 0.0
      %v2481 = vmax.f32 %v1856, 0.0
      %v2482 = vmax.f32 %v1858, 0.0
      %v2483 = vmax.f32 %v2209, 0.0
      %v2484 = vmax.f32 %v2211, 0.0
      %v2485 = vmax.f32 %v1860, 0.0
      %v2486 = vmax.f32 %v1862, 0.0
      %v2487 = vmax.f32 %v2213, 0.0
      %v2488 = vmax.f32 %v2215, 0.0
      %v2489 = vmax.f32 %v1866, 0.0
      %v2490 = vmax.f32 %v1868, 0.0
      %v2491 = vmax.f32 %v2219, 0.0
      %v2492 = vmax.f32 %v2221, 0.0
      %v2493 = vmax.f32 %v1870, 0.0
      %v2494 = vmax.f32 %v1872, 0.0
      %v2495 = vmax.f32 %v2223, 0.0
      %v2496 = vmax.f32 %v2225, 0.0
      %v2497 = vmax.f32 %v1876, 0.0
      %v2498 = vmax.f32 %v1878, 0.0
      %v2499 = vmax.f32 %v2229, 0.0
      %v2500 = vmax.f32 %v2231, 0.0
      %v2501 = vmax.f32 %v1880, 0.0
      %v2502 = vmax.f32 %v1882, 0.0
      %v2503 = vmax.f32 %v2233, 0.0
      %v2504 = vmax.f32 %v2235, 0.0
      %v2505 = vmax.f32 %v1886, 0.0
      %v2506 = vmax.f32 %v1888, 0.0
      %v2507 = vmax.f32 %v2239, 0.0
      %v2508 = vmax.f32 %v2241, 0.0
      %v2509 = vmax.f32 %v1890, 0.0
      %v2510 = vmax.f32 %v1892, 0.0
      %v2511 = vmax.f32 %v2243, 0.0
      %v2512 = vmax.f32 %v2245, 0.0
      %v2513 = vmax.f32 %v1896, 0.0
      %v2514 = vmax.f32 %v1898, 0.0
      %v2515 = vmax.f32 %v2249, 0.0
      %v2516 = vmax.f32 %v2251, 0.0
      %v2517 = vmax.f32 %v1900, 0.0
      %v2518 = vmax.f32 %v1902, 0.0
      %v2519 = vmax.f32 %v2253, 0.0
      %v2520 = vmax.f32 %v2255, 0.0
      %v2521 = vmax.f32 %v1906, 0.0
      %v2522 = vmax.f32 %v1908, 0.0
      %v2523 = vmax.f32 %v2259, 0.0
      %v2524 = vmax.f32 %v2261, 0.0
      %v2525 = vmax.f32 %v1910, 0.0
      %v2526 = vmax.f32 %v1912, 0.0
      %v2527 = vmax.f32 %v2263, 0.0
      %v2528 = vmax.f32 %v2265, 0.0
      %v2529 = vmax.f32 %v1916, 0.0
      %v2530 = vmax.f32 %v1918, 0.0
      %v2531 = vmax.f32 %v2269, 0.0
      %v2532 = vmax.f32 %v2271, 0.0
      %v2533 = vmax.f32 %v1920, 0.0
      %v2534 = vmax.f32 %v1922, 0.0
      %v2535 = vmax.f32 %v2273, 0.0
      %v2536 = vmax.f32 %v2275, 0.0
      %v2537 = vmax.f32 %v1926, 0.0
      %v2538 = vmax.f32 %v1928, 0.0
      %v2539 = vmax.f32 %v2279, 0.0
      %v2540 = vmax.f32 %v2281, 0.0
      %v2541 = vmax.f32 %v1930, 0.0
      %v2542 = vmax.f32 %v1932, 0.0
      %v2543 = vmax.f32 %v2283, 0.0
      %v2544 = vmax.f32 %v2285, 0.0
      %v2545 = vmax.f32 %v1936, 0.0
      %v2546 = vmax.f32 %v1938, 0.0
      %v2547 = vmax.f32 %v2289, 0.0
      %v2548 = vmax.f32 %v2291, 0.0
      %v2549 = vmax.f32 %v1940, 0.0
      %v2550 = vmax.f32 %v1942, 0.0
      %v2551 = vmax.f32 %v2293, 0.0
      %v2552 = vmax.f32 %v2295, 0.0
      %v2553 = vpack.c.bf16 %v2301, %v2297
      %v2554 = vpack.c.bf16 %v2302, %v2298
      %v2555 = vpack.c.bf16 %v2303, %v2299
      %v2556 = vpack.c.bf16 %v2304, %v2300
      %v2557 = vpack.c.bf16 %v2309, %v2305
      %v2558 = vpack.c.bf16 %v2310, %v2306
      %v2559 = vpack.c.bf16 %v2311, %v2307
      %v2560 = vpack.c.bf16 %v2312, %v2308
      %v2561 = vpack.c.bf16 %v2317, %v2313
      %v2562 = vpack.c.bf16 %v2318, %v2314
      %v2563 = vpack.c.bf16 %v2319, %v2315
      %v2564 = vpack.c.bf16 %v2320, %v2316
      %v2565 = vpack.c.bf16 %v2325, %v2321
      %v2566 = vpack.c.bf16 %v2326, %v2322
      %v2567 = vpack.c.bf16 %v2327, %v2323
      %v2568 = vpack.c.bf16 %v2328, %v2324
      %v2569 = vpack.c.bf16 %v2333, %v2329
      %v2570 = vpack.c.bf16 %v2334, %v2330
      %v2571 = vpack.c.bf16 %v2335, %v2331
      %v2572 = vpack.c.bf16 %v2336, %v2332
      %v2573 = vpack.c.bf16 %v2341, %v2337
      %v2574 = vpack.c.bf16 %v2342, %v2338
      %v2575 = vpack.c.bf16 %v2343, %v2339
      %v2576 = vpack.c.bf16 %v2344, %v2340
      %v2577 = vpack.c.bf16 %v2349, %v2345
      %v2578 = vpack.c.bf16 %v2350, %v2346
      %v2579 = vpack.c.bf16 %v2351, %v2347
      %v2580 = vpack.c.bf16 %v2352, %v2348
      %v2581 = vpack.c.bf16 %v2357, %v2353
      %v2582 = vpack.c.bf16 %v2358, %v2354
      %v2583 = vpack.c.bf16 %v2359, %v2355
      %v2584 = vpack.c.bf16 %v2360, %v2356
      %v2585 = vpack.c.bf16 %v2365, %v2361
      %v2586 = vpack.c.bf16 %v2366, %v2362
      %v2587 = vpack.c.bf16 %v2367, %v2363
      %v2588 = vpack.c.bf16 %v2368, %v2364
      %v2589 = vpack.c.bf16 %v2373, %v2369
      %v2590 = vpack.c.bf16 %v2374, %v2370
      %v2591 = vpack.c.bf16 %v2375, %v2371
      %v2592 = vpack.c.bf16 %v2376, %v2372
      %v2593 = vpack.c.bf16 %v2381, %v2377
      %v2594 = vpack.c.bf16 %v2382, %v2378
      %v2595 = vpack.c.bf16 %v2383, %v2379
      %v2596 = vpack.c.bf16 %v2384, %v2380
      %v2597 = vpack.c.bf16 %v2389, %v2385
      %v2598 = vpack.c.bf16 %v2390, %v2386
      %v2599 = vpack.c.bf16 %v2391, %v2387
      %v2600 = vpack.c.bf16 %v2392, %v2388
      %v2601 = vpack.c.bf16 %v2397, %v2393
      %v2602 = vpack.c.bf16 %v2398, %v2394
      %v2603 = vpack.c.bf16 %v2399, %v2395
      %v2604 = vpack.c.bf16 %v2400, %v2396
      %v2605 = vpack.c.bf16 %v2405, %v2401
      %v2606 = vpack.c.bf16 %v2406, %v2402
      %v2607 = vpack.c.bf16 %v2407, %v2403
      %v2608 = vpack.c.bf16 %v2408, %v2404
      %v2609 = vpack.c.bf16 %v2413, %v2409
      %v2610 = vpack.c.bf16 %v2414, %v2410
      %v2611 = vpack.c.bf16 %v2415, %v2411
      %v2612 = vpack.c.bf16 %v2416, %v2412
      %v2613 = vpack.c.bf16 %v2421, %v2417
      %v2614 = vpack.c.bf16 %v2422, %v2418
      %v2615 = vpack.c.bf16 %v2423, %v2419
      %v2616 = vpack.c.bf16 %v2424, %v2420
      %v2617 = vpack.c.bf16 %v2429, %v2425
      %v2618 = vpack.c.bf16 %v2430, %v2426
      %v2619 = vpack.c.bf16 %v2431, %v2427
      %v2620 = vpack.c.bf16 %v2432, %v2428
      %v2621 = vpack.c.bf16 %v2437, %v2433
      %v2622 = vpack.c.bf16 %v2438, %v2434
      %v2623 = vpack.c.bf16 %v2439, %v2435
      %v2624 = vpack.c.bf16 %v2440, %v2436
      %v2625 = vpack.c.bf16 %v2445, %v2441
      %v2626 = vpack.c.bf16 %v2446, %v2442
      %v2627 = vpack.c.bf16 %v2447, %v2443
      %v2628 = vpack.c.bf16 %v2448, %v2444
      %v2629 = vpack.c.bf16 %v2453, %v2449
      %v2630 = vpack.c.bf16 %v2454, %v2450
      %v2631 = vpack.c.bf16 %v2455, %v2451
      %v2632 = vpack.c.bf16 %v2456, %v2452
      %v2633 = vpack.c.bf16 %v2461, %v2457
      %v2634 = vpack.c.bf16 %v2462, %v2458
      %v2635 = vpack.c.bf16 %v2463, %v2459
      %v2636 = vpack.c.bf16 %v2464, %v2460
      %v2637 = vpack.c.bf16 %v2469, %v2465
      %v2638 = vpack.c.bf16 %v2470, %v2466
      %v2639 = vpack.c.bf16 %v2471, %v2467
      %v2640 = vpack.c.bf16 %v2472, %v2468
      %v2641 = vpack.c.bf16 %v2477, %v2473
      %v2642 = vpack.c.bf16 %v2478, %v2474
      %v2643 = vpack.c.bf16 %v2479, %v2475
      %v2644 = vpack.c.bf16 %v2480, %v2476
      %v2645 = vpack.c.bf16 %v2485, %v2481
      %v2646 = vpack.c.bf16 %v2486, %v2482
      %v2647 = vpack.c.bf16 %v2487, %v2483
      %v2648 = vpack.c.bf16 %v2488, %v2484
      %v2649 = vpack.c.bf16 %v2493, %v2489
      %v2650 = vpack.c.bf16 %v2494, %v2490
      %v2651 = vpack.c.bf16 %v2495, %v2491
      %v2652 = vpack.c.bf16 %v2496, %v2492
      %v2653 = vpack.c.bf16 %v2501, %v2497
      %v2654 = vpack.c.bf16 %v2502, %v2498
      %v2655 = vpack.c.bf16 %v2503, %v2499
      %v2656 = vpack.c.bf16 %v2504, %v2500
      %v2657 = vpack.c.bf16 %v2509, %v2505
      %v2658 = vpack.c.bf16 %v2510, %v2506
      %v2659 = vpack.c.bf16 %v2511, %v2507
      %v2660 = vpack.c.bf16 %v2512, %v2508
      %v2661 = vpack.c.bf16 %v2517, %v2513
      %v2662 = vpack.c.bf16 %v2518, %v2514
      %v2663 = vpack.c.bf16 %v2519, %v2515
      %v2664 = vpack.c.bf16 %v2520, %v2516
      %v2665 = vpack.c.bf16 %v2525, %v2521
      %v2666 = vpack.c.bf16 %v2526, %v2522
      %v2667 = vpack.c.bf16 %v2527, %v2523
      %v2668 = vpack.c.bf16 %v2528, %v2524
      %v2669 = vpack.c.bf16 %v2533, %v2529
      %v2670 = vpack.c.bf16 %v2534, %v2530
      %v2671 = vpack.c.bf16 %v2535, %v2531
      %v2672 = vpack.c.bf16 %v2536, %v2532
      %v2673 = vpack.c.bf16 %v2541, %v2537
      %v2674 = vpack.c.bf16 %v2542, %v2538
      %v2675 = vpack.c.bf16 %v2543, %v2539
      %v2676 = vpack.c.bf16 %v2544, %v2540
      %v2677 = vpack.c.bf16 %v2549, %v2545
      %v2678 = vpack.c.bf16 %v2550, %v2546
      %v2679 = vpack.c.bf16 %v2551, %v2547
      %v2680 = vpack.c.bf16 %v2552, %v2548
      %v2681 = vld [vmem:[%s5] sm:$0xf]
      %v2682 = vld [vmem:[%s5 + $0x4] sm:$0xf]
      %v2683 = vld [vmem:[%s5 + $0x8] sm:$0xf]
      %v2684 = vld [vmem:[%s5 + $0xc] sm:$0xf]
      %v2685 = vld [vmem:[%s5 + $0x10] sm:$0xf]
      %v2686 = vld [vmem:[%s5 + $0x14] sm:$0xf]
      %v2687 = vld [vmem:[%s5 + $0x18] sm:$0xf]
      %v2688 = vld [vmem:[%s5 + $0x1c] sm:$0xf]
      %v2689 = vld [vmem:[%s5 + $0x20] sm:$0xf]
      %v2690 = vld [vmem:[%s5 + $0x24] sm:$0xf]
      %v2691 = vld [vmem:[%s5 + $0x28] sm:$0xf]
      %v2692 = vld [vmem:[%s5 + $0x2c] sm:$0xf]
      %v2693 = vld [vmem:[%s5 + $0x30] sm:$0xf]
      %v2694 = vld [vmem:[%s5 + $0x34] sm:$0xf]
      %v2695 = vld [vmem:[%s5 + $0x38] sm:$0xf]
      %v2696 = vld [vmem:[%s5 + $0x3c] sm:$0xf]
      %v2697 = vld [vmem:[%s5 + $0x40] sm:$0xf]
      %v2698 = vld [vmem:[%s5 + $0x44] sm:$0xf]
      %v2699 = vld [vmem:[%s5 + $0x48] sm:$0xf]
      %v2700 = vld [vmem:[%s5 + $0x4c] sm:$0xf]
      %v2701 = vld [vmem:[%s5 + $0x50] sm:$0xf]
      %v2702 = vld [vmem:[%s5 + $0x54] sm:$0xf]
      %v2703 = vld [vmem:[%s5 + $0x58] sm:$0xf]
      %v2704 = vld [vmem:[%s5 + $0x5c] sm:$0xf]
      %v2705 = vld [vmem:[%s5 + $0x60] sm:$0xf]
      %v2706 = vld [vmem:[%s5 + $0x64] sm:$0xf]
      %v2707 = vld [vmem:[%s5 + $0x68] sm:$0xf]
      %v2708 = vld [vmem:[%s5 + $0x6c] sm:$0xf]
      %v2709 = vld [vmem:[%s5 + $0x70] sm:$0xf]
      %v2710 = vld [vmem:[%s5 + $0x74] sm:$0xf]
      %v2711 = vld [vmem:[%s5 + $0x78] sm:$0xf]
      %v2712 = vld [vmem:[%s5 + $0x7c] sm:$0xf]
      %v2713 = vld [vmem:[%s5 + $0x80] sm:$0xf]
      %v2714 = vld [vmem:[%s5 + $0x84] sm:$0xf]
      %v2715 = vld [vmem:[%s5 + $0x88] sm:$0xf]
      %v2716 = vld [vmem:[%s5 + $0x8c] sm:$0xf]
      %v2717 = vld [vmem:[%s5 + $0x90] sm:$0xf]
      %v2718 = vld [vmem:[%s5 + $0x94] sm:$0xf]
      %v2719 = vld [vmem:[%s5 + $0x98] sm:$0xf]
      %v2720 = vld [vmem:[%s5 + $0x9c] sm:$0xf]
      %v2721 = vld [vmem:[%s5 + $0xa0] sm:$0xf]
      %v2722 = vld [vmem:[%s5 + $0xa4] sm:$0xf]
      %v2723 = vld [vmem:[%s5 + $0xa8] sm:$0xf]
      %v2724 = vld [vmem:[%s5 + $0xac] sm:$0xf]
      %v2725 = vld [vmem:[%s5 + $0xb0] sm:$0xf]
      %v2726 = vld [vmem:[%s5 + $0xb4] sm:$0xf]
      %v2727 = vld [vmem:[%s5 + $0xb8] sm:$0xf]
      %v2728 = vld [vmem:[%s5 + $0xbc] sm:$0xf]
      %v2729 = vld [vmem:[%s5 + $0xc0] sm:$0xf]
      %v2730 = vld [vmem:[%s5 + $0xc4] sm:$0xf]
      %v2731 = vld [vmem:[%s5 + $0xc8] sm:$0xf]
      %v2732 = vld [vmem:[%s5 + $0xcc] sm:$0xf]
      %v2733 = vld [vmem:[%s5 + $0xd0] sm:$0xf]
      %v2734 = vld [vmem:[%s5 + $0xd4] sm:$0xf]
      %v2735 = vld [vmem:[%s5 + $0xd8] sm:$0xf]
      %v2736 = vld [vmem:[%s5 + $0xdc] sm:$0xf]
      %v2737 = vld [vmem:[%s5 + $0xe0] sm:$0xf]
      %v2738 = vld [vmem:[%s5 + $0xe4] sm:$0xf]
      %v2739 = vld [vmem:[%s5 + $0xe8] sm:$0xf]
      %v2740 = vld [vmem:[%s5 + $0xec] sm:$0xf]
      %v2741 = vld [vmem:[%s5 + $0xf0] sm:$0xf]
      %v2742 = vld [vmem:[%s5 + $0xf4] sm:$0xf]
      %v2743 = vld [vmem:[%s5 + $0xf8] sm:$0xf]
      %v2744 = vld [vmem:[%s5 + $0xfc] sm:$0xf]
      %v2745 = vld [vmem:[%s6] sm:$0x1]
      %v2747 = vlaneseq
      %v2748 = vshrl.u32 %v2747, 7
      %v2749 = vsub.s32 0, %v2748
      %v2750 = vrot.slane %v2745, %v2749
      %v2816 = vunpack.c.l.b16 %v2681
      %v2817 = vunpack.c.l.b16 %v2682
      %v2818 = vunpack.c.l.b16 %v2683
      %v2819 = vunpack.c.l.b16 %v2684
      %v2820 = vunpack.c.l.b16 %v2685
      %v2821 = vunpack.c.l.b16 %v2686
      %v2822 = vunpack.c.l.b16 %v2687
      %v2823 = vunpack.c.l.b16 %v2688
      %v2824 = vunpack.c.l.b16 %v2689
      %v2825 = vunpack.c.l.b16 %v2690
      %v2826 = vunpack.c.l.b16 %v2691
      %v2827 = vunpack.c.l.b16 %v2692
      %v2828 = vunpack.c.l.b16 %v2693
      %v2829 = vunpack.c.l.b16 %v2694
      %v2830 = vunpack.c.l.b16 %v2695
      %v2831 = vunpack.c.l.b16 %v2696
      %v2832 = vunpack.c.l.b16 %v2697
      %v2833 = vunpack.c.l.b16 %v2698
      %v2834 = vunpack.c.l.b16 %v2699
      %v2835 = vunpack.c.l.b16 %v2700
      %v2836 = vunpack.c.l.b16 %v2701
      %v2837 = vunpack.c.l.b16 %v2702
      %v2838 = vunpack.c.l.b16 %v2703
      %v2839 = vunpack.c.l.b16 %v2704
      %v2840 = vunpack.c.l.b16 %v2705
      %v2841 = vunpack.c.l.b16 %v2706
      %v2842 = vunpack.c.l.b16 %v2707
      %v2843 = vunpack.c.l.b16 %v2708
      %v2844 = vunpack.c.l.b16 %v2709
      %v2845 = vunpack.c.l.b16 %v2710
      %v2846 = vunpack.c.l.b16 %v2711
      %v2847 = vunpack.c.l.b16 %v2712
      %v2848 = vunpack.c.l.b16 %v2713
      %v2849 = vunpack.c.l.b16 %v2714
      %v2850 = vunpack.c.l.b16 %v2715
      %v2851 = vunpack.c.l.b16 %v2716
      %v2852 = vunpack.c.l.b16 %v2717
      %v2853 = vunpack.c.l.b16 %v2718
      %v2854 = vunpack.c.l.b16 %v2719
      %v2855 = vunpack.c.l.b16 %v2720
      %v2856 = vunpack.c.l.b16 %v2721
      %v2857 = vunpack.c.l.b16 %v2722
      %v2858 = vunpack.c.l.b16 %v2723
      %v2859 = vunpack.c.l.b16 %v2724
      %v2860 = vunpack.c.l.b16 %v2725
      %v2861 = vunpack.c.l.b16 %v2726
      %v2862 = vunpack.c.l.b16 %v2727
      %v2863 = vunpack.c.l.b16 %v2728
      %v2864 = vunpack.c.l.b16 %v2729
      %v2865 = vunpack.c.l.b16 %v2730
      %v2866 = vunpack.c.l.b16 %v2731
      %v2867 = vunpack.c.l.b16 %v2732
      %v2868 = vunpack.c.l.b16 %v2733
      %v2869 = vunpack.c.l.b16 %v2734
      %v2870 = vunpack.c.l.b16 %v2735
      %v2871 = vunpack.c.l.b16 %v2736
      %v2872 = vunpack.c.l.b16 %v2737
      %v2873 = vunpack.c.l.b16 %v2738
      %v2874 = vunpack.c.l.b16 %v2739
      %v2875 = vunpack.c.l.b16 %v2740
      %v2876 = vunpack.c.l.b16 %v2741
      %v2877 = vunpack.c.l.b16 %v2742
      %v2878 = vunpack.c.l.b16 %v2743
      %v2879 = vunpack.c.l.b16 %v2744
      %v2880 = vpack.c.b16 %v2817, %v2816
      %v2881 = vpack.c.b16 %v2819, %v2818
      %v2882 = vpack.c.b16 %v2821, %v2820
      %v2883 = vpack.c.b16 %v2823, %v2822
      %v2884 = vpack.c.b16 %v2825, %v2824
      %v2885 = vpack.c.b16 %v2827, %v2826
      %v2886 = vpack.c.b16 %v2829, %v2828
      %v2887 = vpack.c.b16 %v2831, %v2830
      %v2888 = vpack.c.b16 %v2833, %v2832
      %v2889 = vpack.c.b16 %v2835, %v2834
      %v2890 = vpack.c.b16 %v2837, %v2836
      %v2891 = vpack.c.b16 %v2839, %v2838
      %v2892 = vpack.c.b16 %v2841, %v2840
      %v2893 = vpack.c.b16 %v2843, %v2842
      %v2894 = vpack.c.b16 %v2845, %v2844
      %v2895 = vpack.c.b16 %v2847, %v2846
      %v2896 = vpack.c.b16 %v2849, %v2848
      %v2897 = vpack.c.b16 %v2851, %v2850
      %v2898 = vpack.c.b16 %v2853, %v2852
      %v2899 = vpack.c.b16 %v2855, %v2854
      %v2900 = vpack.c.b16 %v2857, %v2856
      %v2901 = vpack.c.b16 %v2859, %v2858
      %v2902 = vpack.c.b16 %v2861, %v2860
      %v2903 = vpack.c.b16 %v2863, %v2862
      %v2904 = vpack.c.b16 %v2865, %v2864
      %v2905 = vpack.c.b16 %v2867, %v2866
      %v2906 = vpack.c.b16 %v2869, %v2868
      %v2907 = vpack.c.b16 %v2871, %v2870
      %v2908 = vpack.c.b16 %v2873, %v2872
      %v2909 = vpack.c.b16 %v2875, %v2874
      %v2910 = vpack.c.b16 %v2877, %v2876
      %v2911 = vpack.c.b16 %v2879, %v2878
      %2944 = vmatprep.subr.bf16.mxu0 0
      %2945 = vmatpush1.bf16.msra.mxu0 %v2887
      %2946 = vmatprep.subr.bf16.mxu0 0
      %2947 = vmatpush1.bf16.msra.mxu0 %v2886
      %2948 = vmatprep.subr.bf16.mxu0 0
      %2949 = vmatpush1.bf16.msra.mxu0 %v2885
      %2950 = vmatprep.subr.bf16.mxu0 0
      %2951 = vmatpush1.bf16.msra.mxu0 %v2884
      %2952 = vmatprep.subr.bf16.mxu0 0
      %2953 = vmatpush1.bf16.msra.mxu0 %v2883
      %2954 = vmatprep.subr.bf16.mxu0 0
      %2955 = vmatpush1.bf16.msra.mxu0 %v2882
      %2956 = vmatprep.subr.bf16.mxu0 0
      %2957 = vmatpush1.bf16.msra.mxu0 %v2881
      %2958 = vmatprep.subr.bf16.mxu0 0
      %2959 = vmatpush1.bf16.msra.mxu0 %v2880
      %2960 = vmatprep.subr.bf16.mxu0 0
      %2961 = vmatpush2.bf16.msra.mxu0 %v2895
      %2962 = vmatprep.subr.bf16.mxu0 0
      %2963 = vmatpush2.bf16.msra.mxu0 %v2894
      %2964 = vmatprep.subr.bf16.mxu0 0
      %2965 = vmatpush2.bf16.msra.mxu0 %v2893
      %2966 = vmatprep.subr.bf16.mxu0 0
      %2967 = vmatpush2.bf16.msra.mxu0 %v2892
      %2968 = vmatprep.subr.bf16.mxu0 0
      %2969 = vmatpush2.bf16.msra.mxu0 %v2891
      %2970 = vmatprep.subr.bf16.mxu0 0
      %2971 = vmatpush2.bf16.msra.mxu0 %v2890
      %2972 = vmatprep.subr.bf16.mxu0 0
      %2973 = vmatpush2.bf16.msra.mxu0 %v2889
      %2974 = vmatprep.subr.bf16.mxu0 0
      %2975 = vmatpush2.bf16.msra.mxu0 %v2888
      %2976 = vmatprep.mubr.bf16.mxu0 %v2554
      %2977 = vmatmul.mubr.bf16.gmra.mxu0 %v2553
      %v2978 = vpop.f32.mrf.mxu0
      %v2979 = vadd.f32 %v2750, %v2978
      %v2980 = vpop.f32.mrf.mxu0
      %v2981 = vpop.f32.mrf.mxu0
      %v2982 = vadd.f32 %v2750, %v2981
      %v2983 = vpop.f32.mrf.mxu0
      %2984 = vmatprep.mubr.bf16.mxu0 %v2558
      %2985 = vmatmul.mubr.bf16.gmra.mxu0 %v2557
      %v2986 = vpop.f32.mrf.mxu0
      %v2987 = vadd.f32 %v2750, %v2986
      %v2988 = vpop.f32.mrf.mxu0
      %v2989 = vpop.f32.mrf.mxu0
      %v2990 = vadd.f32 %v2750, %v2989
      %v2991 = vpop.f32.mrf.mxu0
      %2992 = vmatprep.mubr.bf16.mxu0 %v2562
      %2993 = vmatmul.mubr.bf16.gmra.mxu0 %v2561
      %v2994 = vpop.f32.mrf.mxu0
      %v2995 = vadd.f32 %v2750, %v2994
      %v2996 = vpop.f32.mrf.mxu0
      %v2997 = vpop.f32.mrf.mxu0
      %v2998 = vadd.f32 %v2750, %v2997
      %v2999 = vpop.f32.mrf.mxu0
      %3000 = vmatprep.mubr.bf16.mxu0 %v2566
      %3001 = vmatmul.mubr.bf16.gmra.mxu0 %v2565
      %v3002 = vpop.f32.mrf.mxu0
      %v3003 = vadd.f32 %v2750, %v3002
      %v3004 = vpop.f32.mrf.mxu0
      %v3005 = vpop.f32.mrf.mxu0
      %v3006 = vadd.f32 %v2750, %v3005
      %v3007 = vpop.f32.mrf.mxu0
      %3008 = vmatprep.mubr.bf16.mxu0 %v2570
      %3009 = vmatmul.mubr.bf16.gmra.mxu0 %v2569
      %v3010 = vpop.f32.mrf.mxu0
      %v3011 = vadd.f32 %v2750, %v3010
      %v3012 = vpop.f32.mrf.mxu0
      %v3013 = vpop.f32.mrf.mxu0
      %v3014 = vadd.f32 %v2750, %v3013
      %v3015 = vpop.f32.mrf.mxu0
      %3016 = vmatprep.mubr.bf16.mxu0 %v2574
      %3017 = vmatmul.mubr.bf16.gmra.mxu0 %v2573
      %v3018 = vpop.f32.mrf.mxu0
      %v3019 = vadd.f32 %v2750, %v3018
      %v3020 = vpop.f32.mrf.mxu0
      %v3021 = vpop.f32.mrf.mxu0
      %v3022 = vadd.f32 %v2750, %v3021
      %v3023 = vpop.f32.mrf.mxu0
      %3024 = vmatprep.mubr.bf16.mxu0 %v2578
      %3025 = vmatmul.mubr.bf16.gmra.mxu0 %v2577
      %v3026 = vpop.f32.mrf.mxu0
      %v3027 = vadd.f32 %v2750, %v3026
      %v3028 = vpop.f32.mrf.mxu0
      %v3029 = vpop.f32.mrf.mxu0
      %v3030 = vadd.f32 %v2750, %v3029
      %v3031 = vpop.f32.mrf.mxu0
      %3032 = vmatprep.mubr.bf16.mxu0 %v2582
      %3033 = vmatmul.mubr.bf16.gmra.mxu0 %v2581
      %v3034 = vpop.f32.mrf.mxu0
      %v3035 = vadd.f32 %v2750, %v3034
      %v3036 = vpop.f32.mrf.mxu0
      %v3037 = vpop.f32.mrf.mxu0
      %v3038 = vadd.f32 %v2750, %v3037
      %v3039 = vpop.f32.mrf.mxu0
      %3040 = vmatprep.mubr.bf16.mxu0 %v2586
      %3041 = vmatmul.mubr.bf16.gmra.mxu0 %v2585
      %v3042 = vpop.f32.mrf.mxu0
      %v3043 = vadd.f32 %v2750, %v3042
      %v3044 = vpop.f32.mrf.mxu0
      %v3045 = vpop.f32.mrf.mxu0
      %v3046 = vadd.f32 %v2750, %v3045
      %v3047 = vpop.f32.mrf.mxu0
      %3048 = vmatprep.mubr.bf16.mxu0 %v2590
      %3049 = vmatmul.mubr.bf16.gmra.mxu0 %v2589
      %v3050 = vpop.f32.mrf.mxu0
      %v3051 = vadd.f32 %v2750, %v3050
      %v3052 = vpop.f32.mrf.mxu0
      %v3053 = vpop.f32.mrf.mxu0
      %v3054 = vadd.f32 %v2750, %v3053
      %v3055 = vpop.f32.mrf.mxu0
      %3056 = vmatprep.mubr.bf16.mxu0 %v2594
      %3057 = vmatmul.mubr.bf16.gmra.mxu0 %v2593
      %v3058 = vpop.f32.mrf.mxu0
      %v3059 = vadd.f32 %v2750, %v3058
      %v3060 = vpop.f32.mrf.mxu0
      %v3061 = vpop.f32.mrf.mxu0
      %v3062 = vadd.f32 %v2750, %v3061
      %v3063 = vpop.f32.mrf.mxu0
      %3064 = vmatprep.mubr.bf16.mxu0 %v2598
      %3065 = vmatmul.mubr.bf16.gmra.mxu0 %v2597
      %v3066 = vpop.f32.mrf.mxu0
      %v3067 = vadd.f32 %v2750, %v3066
      %v3068 = vpop.f32.mrf.mxu0
      %v3069 = vpop.f32.mrf.mxu0
      %v3070 = vadd.f32 %v2750, %v3069
      %v3071 = vpop.f32.mrf.mxu0
      %3072 = vmatprep.mubr.bf16.mxu0 %v2602
      %3073 = vmatmul.mubr.bf16.gmra.mxu0 %v2601
      %v3074 = vpop.f32.mrf.mxu0
      %v3075 = vadd.f32 %v2750, %v3074
      %v3076 = vpop.f32.mrf.mxu0
      %v3077 = vpop.f32.mrf.mxu0
      %v3078 = vadd.f32 %v2750, %v3077
      %v3079 = vpop.f32.mrf.mxu0
      %3080 = vmatprep.mubr.bf16.mxu0 %v2606
      %3081 = vmatmul.mubr.bf16.gmra.mxu0 %v2605
      %v3082 = vpop.f32.mrf.mxu0
      %v3083 = vadd.f32 %v2750, %v3082
      %v3084 = vpop.f32.mrf.mxu0
      %v3085 = vpop.f32.mrf.mxu0
      %v3086 = vadd.f32 %v2750, %v3085
      %v3087 = vpop.f32.mrf.mxu0
      %3088 = vmatprep.mubr.bf16.mxu0 %v2610
      %3089 = vmatmul.mubr.bf16.gmra.mxu0 %v2609
      %v3090 = vpop.f32.mrf.mxu0
      %v3091 = vadd.f32 %v2750, %v3090
      %v3092 = vpop.f32.mrf.mxu0
      %v3093 = vpop.f32.mrf.mxu0
      %v3094 = vadd.f32 %v2750, %v3093
      %v3095 = vpop.f32.mrf.mxu0
      %3096 = vmatprep.mubr.bf16.mxu0 %v2614
      %3097 = vmatmul.mubr.bf16.gmra.mxu0 %v2613
      %v3098 = vpop.f32.mrf.mxu0
      %v3099 = vadd.f32 %v2750, %v3098
      %v3100 = vpop.f32.mrf.mxu0
      %v3101 = vpop.f32.mrf.mxu0
      %v3102 = vadd.f32 %v2750, %v3101
      %v3103 = vpop.f32.mrf.mxu0
      %3104 = vmatprep.mubr.bf16.mxu0 %v2618
      %3105 = vmatmul.mubr.bf16.gmra.mxu0 %v2617
      %v3106 = vpop.f32.mrf.mxu0
      %v3107 = vadd.f32 %v2750, %v3106
      %v3108 = vpop.f32.mrf.mxu0
      %v3109 = vpop.f32.mrf.mxu0
      %v3110 = vadd.f32 %v2750, %v3109
      %v3111 = vpop.f32.mrf.mxu0
      %3112 = vmatprep.mubr.bf16.mxu0 %v2622
      %3113 = vmatmul.mubr.bf16.gmra.mxu0 %v2621
      %v3114 = vpop.f32.mrf.mxu0
      %v3115 = vadd.f32 %v2750, %v3114
      %v3116 = vpop.f32.mrf.mxu0
      %v3117 = vpop.f32.mrf.mxu0
      %v3118 = vadd.f32 %v2750, %v3117
      %v3119 = vpop.f32.mrf.mxu0
      %3120 = vmatprep.mubr.bf16.mxu0 %v2626
      %3121 = vmatmul.mubr.bf16.gmra.mxu0 %v2625
      %v3122 = vpop.f32.mrf.mxu0
      %v3123 = vadd.f32 %v2750, %v3122
      %v3124 = vpop.f32.mrf.mxu0
      %v3125 = vpop.f32.mrf.mxu0
      %v3126 = vadd.f32 %v2750, %v3125
      %v3127 = vpop.f32.mrf.mxu0
      %3128 = vmatprep.mubr.bf16.mxu0 %v2630
      %3129 = vmatmul.mubr.bf16.gmra.mxu0 %v2629
      %v3130 = vpop.f32.mrf.mxu0
      %v3131 = vadd.f32 %v2750, %v3130
      %v3132 = vpop.f32.mrf.mxu0
      %v3133 = vpop.f32.mrf.mxu0
      %v3134 = vadd.f32 %v2750, %v3133
      %v3135 = vpop.f32.mrf.mxu0
      %3136 = vmatprep.mubr.bf16.mxu0 %v2634
      %3137 = vmatmul.mubr.bf16.gmra.mxu0 %v2633
      %v3138 = vpop.f32.mrf.mxu0
      %v3139 = vadd.f32 %v2750, %v3138
      %v3140 = vpop.f32.mrf.mxu0
      %v3141 = vpop.f32.mrf.mxu0
      %v3142 = vadd.f32 %v2750, %v3141
      %v3143 = vpop.f32.mrf.mxu0
      %3144 = vmatprep.mubr.bf16.mxu0 %v2638
      %3145 = vmatmul.mubr.bf16.gmra.mxu0 %v2637
      %v3146 = vpop.f32.mrf.mxu0
      %v3147 = vadd.f32 %v2750, %v3146
      %v3148 = vpop.f32.mrf.mxu0
      %v3149 = vpop.f32.mrf.mxu0
      %v3150 = vadd.f32 %v2750, %v3149
      %v3151 = vpop.f32.mrf.mxu0
      %3152 = vmatprep.mubr.bf16.mxu0 %v2642
      %3153 = vmatmul.mubr.bf16.gmra.mxu0 %v2641
      %v3154 = vpop.f32.mrf.mxu0
      %v3155 = vadd.f32 %v2750, %v3154
      %v3156 = vpop.f32.mrf.mxu0
      %v3157 = vpop.f32.mrf.mxu0
      %v3158 = vadd.f32 %v2750, %v3157
      %v3159 = vpop.f32.mrf.mxu0
      %3160 = vmatprep.mubr.bf16.mxu0 %v2646
      %3161 = vmatmul.mubr.bf16.gmra.mxu0 %v2645
      %v3162 = vpop.f32.mrf.mxu0
      %v3163 = vadd.f32 %v2750, %v3162
      %v3164 = vpop.f32.mrf.mxu0
      %v3165 = vpop.f32.mrf.mxu0
      %v3166 = vadd.f32 %v2750, %v3165
      %v3167 = vpop.f32.mrf.mxu0
      %3168 = vmatprep.mubr.bf16.mxu0 %v2650
      %3169 = vmatmul.mubr.bf16.gmra.mxu0 %v2649
      %v3170 = vpop.f32.mrf.mxu0
      %v3171 = vadd.f32 %v2750, %v3170
      %v3172 = vpop.f32.mrf.mxu0
      %v3173 = vpop.f32.mrf.mxu0
      %v3174 = vadd.f32 %v2750, %v3173
      %v3175 = vpop.f32.mrf.mxu0
      %3176 = vmatprep.mubr.bf16.mxu0 %v2654
      %3177 = vmatmul.mubr.bf16.gmra.mxu0 %v2653
      %v3178 = vpop.f32.mrf.mxu0
      %v3179 = vadd.f32 %v2750, %v3178
      %v3180 = vpop.f32.mrf.mxu0
      %v3181 = vpop.f32.mrf.mxu0
      %v3182 = vadd.f32 %v2750, %v3181
      %v3183 = vpop.f32.mrf.mxu0
      %3184 = vmatprep.mubr.bf16.mxu0 %v2658
      %3185 = vmatmul.mubr.bf16.gmra.mxu0 %v2657
      %v3186 = vpop.f32.mrf.mxu0
      %v3187 = vadd.f32 %v2750, %v3186
      %v3188 = vpop.f32.mrf.mxu0
      %v3189 = vpop.f32.mrf.mxu0
      %v3190 = vadd.f32 %v2750, %v3189
      %v3191 = vpop.f32.mrf.mxu0
      %3192 = vmatprep.mubr.bf16.mxu0 %v2662
      %3193 = vmatmul.mubr.bf16.gmra.mxu0 %v2661
      %v3194 = vpop.f32.mrf.mxu0
      %v3195 = vadd.f32 %v2750, %v3194
      %v3196 = vpop.f32.mrf.mxu0
      %v3197 = vpop.f32.mrf.mxu0
      %v3198 = vadd.f32 %v2750, %v3197
      %v3199 = vpop.f32.mrf.mxu0
      %3200 = vmatprep.mubr.bf16.mxu0 %v2666
      %3201 = vmatmul.mubr.bf16.gmra.mxu0 %v2665
      %v3202 = vpop.f32.mrf.mxu0
      %v3203 = vadd.f32 %v2750, %v3202
      %v3204 = vpop.f32.mrf.mxu0
      %v3205 = vpop.f32.mrf.mxu0
      %v3206 = vadd.f32 %v2750, %v3205
      %v3207 = vpop.f32.mrf.mxu0
      %3208 = vmatprep.mubr.bf16.mxu0 %v2670
      %3209 = vmatmul.mubr.bf16.gmra.mxu0 %v2669
      %v3210 = vpop.f32.mrf.mxu0
      %v3211 = vadd.f32 %v2750, %v3210
      %v3212 = vpop.f32.mrf.mxu0
      %v3213 = vpop.f32.mrf.mxu0
      %v3214 = vadd.f32 %v2750, %v3213
      %v3215 = vpop.f32.mrf.mxu0
      %3216 = vmatprep.mubr.bf16.mxu0 %v2674
      %3217 = vmatmul.mubr.bf16.gmra.mxu0 %v2673
      %v3218 = vpop.f32.mrf.mxu0
      %v3219 = vadd.f32 %v2750, %v3218
      %v3220 = vpop.f32.mrf.mxu0
      %v3221 = vpop.f32.mrf.mxu0
      %v3222 = vadd.f32 %v2750, %v3221
      %v3223 = vpop.f32.mrf.mxu0
      %3224 = vmatprep.mubr.bf16.mxu0 %v2678
      %3225 = vmatmul.mubr.bf16.gmra.mxu0 %v2677
      %v3226 = vpop.f32.mrf.mxu0
      %v3227 = vadd.f32 %v2750, %v3226
      %v3228 = vpop.f32.mrf.mxu0
      %v3229 = vpop.f32.mrf.mxu0
      %v3230 = vadd.f32 %v2750, %v3229
      %v3231 = vpop.f32.mrf.mxu0
      %3232 = vdwg.mxu0
      %3233 = vmatprep.subr.bf16.mxu0 0
      %3234 = vmatpush1.bf16.msra.mxu0 %v2903
      %3235 = vmatprep.subr.bf16.mxu0 0
      %3236 = vmatpush1.bf16.msra.mxu0 %v2902
      %3237 = vmatprep.subr.bf16.mxu0 0
      %3238 = vmatpush1.bf16.msra.mxu0 %v2901
      %3239 = vmatprep.subr.bf16.mxu0 0
      %3240 = vmatpush1.bf16.msra.mxu0 %v2900
      %3241 = vmatprep.subr.bf16.mxu0 0
      %3242 = vmatpush1.bf16.msra.mxu0 %v2899
      %3243 = vmatprep.subr.bf16.mxu0 0
      %3244 = vmatpush1.bf16.msra.mxu0 %v2898
      %3245 = vmatprep.subr.bf16.mxu0 0
      %3246 = vmatpush1.bf16.msra.mxu0 %v2897
      %3247 = vmatprep.subr.bf16.mxu0 0
      %3248 = vmatpush1.bf16.msra.mxu0 %v2896
      %3249 = vmatprep.subr.bf16.mxu0 0
      %3250 = vmatpush2.bf16.msra.mxu0 %v2911
      %3251 = vmatprep.subr.bf16.mxu0 0
      %3252 = vmatpush2.bf16.msra.mxu0 %v2910
      %3253 = vmatprep.subr.bf16.mxu0 0
      %3254 = vmatpush2.bf16.msra.mxu0 %v2909
      %3255 = vmatprep.subr.bf16.mxu0 0
      %3256 = vmatpush2.bf16.msra.mxu0 %v2908
      %3257 = vmatprep.subr.bf16.mxu0 0
      %3258 = vmatpush2.bf16.msra.mxu0 %v2907
      %3259 = vmatprep.subr.bf16.mxu0 0
      %3260 = vmatpush2.bf16.msra.mxu0 %v2906
      %3261 = vmatprep.subr.bf16.mxu0 0
      %3262 = vmatpush2.bf16.msra.mxu0 %v2905
      %3263 = vmatprep.subr.bf16.mxu0 0
      %3264 = vmatpush2.bf16.msra.mxu0 %v2904
      %3265 = vmatprep.mubr.bf16.mxu0 %v2556
      %3266 = vmatmul.mubr.bf16.gmra.mxu0 %v2555
      %v3267 = vpop.f32.mrf.mxu0
      %v3268 = vadd.f32 %v2979, %v3267
      %v3269 = vpop.f32.mrf.mxu0
      %v3270 = vpop.f32.mrf.mxu0
      %v3271 = vadd.f32 %v2982, %v3270
      %v3272 = vpop.f32.mrf.mxu0
      %3273 = vmatprep.mubr.bf16.mxu0 %v2560
      %3274 = vmatmul.mubr.bf16.gmra.mxu0 %v2559
      %v3275 = vpop.f32.mrf.mxu0
      %v3276 = vadd.f32 %v2987, %v3275
      %v3277 = vpop.f32.mrf.mxu0
      %v3278 = vpop.f32.mrf.mxu0
      %v3279 = vadd.f32 %v2990, %v3278
      %v3280 = vpop.f32.mrf.mxu0
      %3281 = vmatprep.mubr.bf16.mxu0 %v2564
      %3282 = vmatmul.mubr.bf16.gmra.mxu0 %v2563
      %v3283 = vpop.f32.mrf.mxu0
      %v3284 = vadd.f32 %v2995, %v3283
      %v3285 = vpop.f32.mrf.mxu0
      %v3286 = vpop.f32.mrf.mxu0
      %v3287 = vadd.f32 %v2998, %v3286
      %v3288 = vpop.f32.mrf.mxu0
      %3289 = vmatprep.mubr.bf16.mxu0 %v2568
      %3290 = vmatmul.mubr.bf16.gmra.mxu0 %v2567
      %v3291 = vpop.f32.mrf.mxu0
      %v3292 = vadd.f32 %v3003, %v3291
      %v3293 = vpop.f32.mrf.mxu0
      %v3294 = vpop.f32.mrf.mxu0
      %v3295 = vadd.f32 %v3006, %v3294
      %v3296 = vpop.f32.mrf.mxu0
      %3297 = vmatprep.mubr.bf16.mxu0 %v2572
      %3298 = vmatmul.mubr.bf16.gmra.mxu0 %v2571
      %v3299 = vpop.f32.mrf.mxu0
      %v3300 = vadd.f32 %v3011, %v3299
      %v3301 = vpop.f32.mrf.mxu0
      %v3302 = vpop.f32.mrf.mxu0
      %v3303 = vadd.f32 %v3014, %v3302
      %v3304 = vpop.f32.mrf.mxu0
      %3305 = vmatprep.mubr.bf16.mxu0 %v2576
      %3306 = vmatmul.mubr.bf16.gmra.mxu0 %v2575
      %v3307 = vpop.f32.mrf.mxu0
      %v3308 = vadd.f32 %v3019, %v3307
      %v3309 = vpop.f32.mrf.mxu0
      %v3310 = vpop.f32.mrf.mxu0
      %v3311 = vadd.f32 %v3022, %v3310
      %v3312 = vpop.f32.mrf.mxu0
      %3313 = vmatprep.mubr.bf16.mxu0 %v2580
      %3314 = vmatmul.mubr.bf16.gmra.mxu0 %v2579
      %v3315 = vpop.f32.mrf.mxu0
      %v3316 = vadd.f32 %v3027, %v3315
      %v3317 = vpop.f32.mrf.mxu0
      %v3318 = vpop.f32.mrf.mxu0
      %v3319 = vadd.f32 %v3030, %v3318
      %v3320 = vpop.f32.mrf.mxu0
      %3321 = vmatprep.mubr.bf16.mxu0 %v2584
      %3322 = vmatmul.mubr.bf16.gmra.mxu0 %v2583
      %v3323 = vpop.f32.mrf.mxu0
      %v3324 = vadd.f32 %v3035, %v3323
      %v3325 = vpop.f32.mrf.mxu0
      %v3326 = vpop.f32.mrf.mxu0
      %v3327 = vadd.f32 %v3038, %v3326
      %v3328 = vpop.f32.mrf.mxu0
      %3329 = vmatprep.mubr.bf16.mxu0 %v2588
      %3330 = vmatmul.mubr.bf16.gmra.mxu0 %v2587
      %v3331 = vpop.f32.mrf.mxu0
      %v3332 = vadd.f32 %v3043, %v3331
      %v3333 = vpop.f32.mrf.mxu0
      %v3334 = vpop.f32.mrf.mxu0
      %v3335 = vadd.f32 %v3046, %v3334
      %v3336 = vpop.f32.mrf.mxu0
      %3337 = vmatprep.mubr.bf16.mxu0 %v2592
      %3338 = vmatmul.mubr.bf16.gmra.mxu0 %v2591
      %v3339 = vpop.f32.mrf.mxu0
      %v3340 = vadd.f32 %v3051, %v3339
      %v3341 = vpop.f32.mrf.mxu0
      %v3342 = vpop.f32.mrf.mxu0
      %v3343 = vadd.f32 %v3054, %v3342
      %v3344 = vpop.f32.mrf.mxu0
      %3345 = vmatprep.mubr.bf16.mxu0 %v2596
      %3346 = vmatmul.mubr.bf16.gmra.mxu0 %v2595
      %v3347 = vpop.f32.mrf.mxu0
      %v3348 = vadd.f32 %v3059, %v3347
      %v3349 = vpop.f32.mrf.mxu0
      %v3350 = vpop.f32.mrf.mxu0
      %v3351 = vadd.f32 %v3062, %v3350
      %v3352 = vpop.f32.mrf.mxu0
      %3353 = vmatprep.mubr.bf16.mxu0 %v2600
      %3354 = vmatmul.mubr.bf16.gmra.mxu0 %v2599
      %v3355 = vpop.f32.mrf.mxu0
      %v3356 = vadd.f32 %v3067, %v3355
      %v3357 = vpop.f32.mrf.mxu0
      %v3358 = vpop.f32.mrf.mxu0
      %v3359 = vadd.f32 %v3070, %v3358
      %v3360 = vpop.f32.mrf.mxu0
      %3361 = vmatprep.mubr.bf16.mxu0 %v2604
      %3362 = vmatmul.mubr.bf16.gmra.mxu0 %v2603
      %v3363 = vpop.f32.mrf.mxu0
      %v3364 = vadd.f32 %v3075, %v3363
      %v3365 = vpop.f32.mrf.mxu0
      %v3366 = vpop.f32.mrf.mxu0
      %v3367 = vadd.f32 %v3078, %v3366
      %v3368 = vpop.f32.mrf.mxu0
      %3369 = vmatprep.mubr.bf16.mxu0 %v2608
      %3370 = vmatmul.mubr.bf16.gmra.mxu0 %v2607
      %v3371 = vpop.f32.mrf.mxu0
      %v3372 = vadd.f32 %v3083, %v3371
      %v3373 = vpop.f32.mrf.mxu0
      %v3374 = vpop.f32.mrf.mxu0
      %v3375 = vadd.f32 %v3086, %v3374
      %v3376 = vpop.f32.mrf.mxu0
      %3377 = vmatprep.mubr.bf16.mxu0 %v2612
      %3378 = vmatmul.mubr.bf16.gmra.mxu0 %v2611
      %v3379 = vpop.f32.mrf.mxu0
      %v3380 = vadd.f32 %v3091, %v3379
      %v3381 = vpop.f32.mrf.mxu0
      %v3382 = vpop.f32.mrf.mxu0
      %v3383 = vadd.f32 %v3094, %v3382
      %v3384 = vpop.f32.mrf.mxu0
      %3385 = vmatprep.mubr.bf16.mxu0 %v2616
      %3386 = vmatmul.mubr.bf16.gmra.mxu0 %v2615
      %v3387 = vpop.f32.mrf.mxu0
      %v3388 = vadd.f32 %v3099, %v3387
      %v3389 = vpop.f32.mrf.mxu0
      %v3390 = vpop.f32.mrf.mxu0
      %v3391 = vadd.f32 %v3102, %v3390
      %v3392 = vpop.f32.mrf.mxu0
      %3393 = vmatprep.mubr.bf16.mxu0 %v2620
      %3394 = vmatmul.mubr.bf16.gmra.mxu0 %v2619
      %v3395 = vpop.f32.mrf.mxu0
      %v3396 = vadd.f32 %v3107, %v3395
      %v3397 = vpop.f32.mrf.mxu0
      %v3398 = vpop.f32.mrf.mxu0
      %v3399 = vadd.f32 %v3110, %v3398
      %v3400 = vpop.f32.mrf.mxu0
      %3401 = vmatprep.mubr.bf16.mxu0 %v2624
      %3402 = vmatmul.mubr.bf16.gmra.mxu0 %v2623
      %v3403 = vpop.f32.mrf.mxu0
      %v3404 = vadd.f32 %v3115, %v3403
      %v3405 = vpop.f32.mrf.mxu0
      %v3406 = vpop.f32.mrf.mxu0
      %v3407 = vadd.f32 %v3118, %v3406
      %v3408 = vpop.f32.mrf.mxu0
      %3409 = vmatprep.mubr.bf16.mxu0 %v2628
      %3410 = vmatmul.mubr.bf16.gmra.mxu0 %v2627
      %v3411 = vpop.f32.mrf.mxu0
      %v3412 = vadd.f32 %v3123, %v3411
      %v3413 = vpop.f32.mrf.mxu0
      %v3414 = vpop.f32.mrf.mxu0
      %v3415 = vadd.f32 %v3126, %v3414
      %v3416 = vpop.f32.mrf.mxu0
      %3417 = vmatprep.mubr.bf16.mxu0 %v2632
      %3418 = vmatmul.mubr.bf16.gmra.mxu0 %v2631
      %v3419 = vpop.f32.mrf.mxu0
      %v3420 = vadd.f32 %v3131, %v3419
      %v3421 = vpop.f32.mrf.mxu0
      %v3422 = vpop.f32.mrf.mxu0
      %v3423 = vadd.f32 %v3134, %v3422
      %v3424 = vpop.f32.mrf.mxu0
      %3425 = vmatprep.mubr.bf16.mxu0 %v2636
      %3426 = vmatmul.mubr.bf16.gmra.mxu0 %v2635
      %v3427 = vpop.f32.mrf.mxu0
      %v3428 = vadd.f32 %v3139, %v3427
      %v3429 = vpop.f32.mrf.mxu0
      %v3430 = vpop.f32.mrf.mxu0
      %v3431 = vadd.f32 %v3142, %v3430
      %v3432 = vpop.f32.mrf.mxu0
      %3433 = vmatprep.mubr.bf16.mxu0 %v2640
      %3434 = vmatmul.mubr.bf16.gmra.mxu0 %v2639
      %v3435 = vpop.f32.mrf.mxu0
      %v3436 = vadd.f32 %v3147, %v3435
      %v3437 = vpop.f32.mrf.mxu0
      %v3438 = vpop.f32.mrf.mxu0
      %v3439 = vadd.f32 %v3150, %v3438
      %v3440 = vpop.f32.mrf.mxu0
      %3441 = vmatprep.mubr.bf16.mxu0 %v2644
      %3442 = vmatmul.mubr.bf16.gmra.mxu0 %v2643
      %v3443 = vpop.f32.mrf.mxu0
      %v3444 = vadd.f32 %v3155, %v3443
      %v3445 = vpop.f32.mrf.mxu0
      %v3446 = vpop.f32.mrf.mxu0
      %v3447 = vadd.f32 %v3158, %v3446
      %v3448 = vpop.f32.mrf.mxu0
      %3449 = vmatprep.mubr.bf16.mxu0 %v2648
      %3450 = vmatmul.mubr.bf16.gmra.mxu0 %v2647
      %v3451 = vpop.f32.mrf.mxu0
      %v3452 = vadd.f32 %v3163, %v3451
      %v3453 = vpop.f32.mrf.mxu0
      %v3454 = vpop.f32.mrf.mxu0
      %v3455 = vadd.f32 %v3166, %v3454
      %v3456 = vpop.f32.mrf.mxu0
      %3457 = vmatprep.mubr.bf16.mxu0 %v2652
      %3458 = vmatmul.mubr.bf16.gmra.mxu0 %v2651
      %v3459 = vpop.f32.mrf.mxu0
      %v3460 = vadd.f32 %v3171, %v3459
      %v3461 = vpop.f32.mrf.mxu0
      %v3462 = vpop.f32.mrf.mxu0
      %v3463 = vadd.f32 %v3174, %v3462
      %v3464 = vpop.f32.mrf.mxu0
      %3465 = vmatprep.mubr.bf16.mxu0 %v2656
      %3466 = vmatmul.mubr.bf16.gmra.mxu0 %v2655
      %v3467 = vpop.f32.mrf.mxu0
      %v3468 = vadd.f32 %v3179, %v3467
      %v3469 = vpop.f32.mrf.mxu0
      %v3470 = vpop.f32.mrf.mxu0
      %v3471 = vadd.f32 %v3182, %v3470
      %v3472 = vpop.f32.mrf.mxu0
      %3473 = vmatprep.mubr.bf16.mxu0 %v2660
      %3474 = vmatmul.mubr.bf16.gmra.mxu0 %v2659
      %v3475 = vpop.f32.mrf.mxu0
      %v3476 = vadd.f32 %v3187, %v3475
      %v3477 = vpop.f32.mrf.mxu0
      %v3478 = vpop.f32.mrf.mxu0
      %v3479 = vadd.f32 %v3190, %v3478
      %v3480 = vpop.f32.mrf.mxu0
      %3481 = vmatprep.mubr.bf16.mxu0 %v2664
      %3482 = vmatmul.mubr.bf16.gmra.mxu0 %v2663
      %v3483 = vpop.f32.mrf.mxu0
      %v3484 = vadd.f32 %v3195, %v3483
      %v3485 = vpop.f32.mrf.mxu0
      %v3486 = vpop.f32.mrf.mxu0
      %v3487 = vadd.f32 %v3198, %v3486
      %v3488 = vpop.f32.mrf.mxu0
      %3489 = vmatprep.mubr.bf16.mxu0 %v2668
      %3490 = vmatmul.mubr.bf16.gmra.mxu0 %v2667
      %v3491 = vpop.f32.mrf.mxu0
      %v3492 = vadd.f32 %v3203, %v3491
      %v3493 = vpop.f32.mrf.mxu0
      %v3494 = vpop.f32.mrf.mxu0
      %v3495 = vadd.f32 %v3206, %v3494
      %v3496 = vpop.f32.mrf.mxu0
      %3497 = vmatprep.mubr.bf16.mxu0 %v2672
      %3498 = vmatmul.mubr.bf16.gmra.mxu0 %v2671
      %v3499 = vpop.f32.mrf.mxu0
      %v3500 = vadd.f32 %v3211, %v3499
      %v3501 = vpop.f32.mrf.mxu0
      %v3502 = vpop.f32.mrf.mxu0
      %v3503 = vadd.f32 %v3214, %v3502
      %v3504 = vpop.f32.mrf.mxu0
      %3505 = vmatprep.mubr.bf16.mxu0 %v2676
      %3506 = vmatmul.mubr.bf16.gmra.mxu0 %v2675
      %v3507 = vpop.f32.mrf.mxu0
      %v3508 = vadd.f32 %v3219, %v3507
      %v3509 = vpop.f32.mrf.mxu0
      %v3510 = vpop.f32.mrf.mxu0
      %v3511 = vadd.f32 %v3222, %v3510
      %v3512 = vpop.f32.mrf.mxu0
      %3513 = vmatprep.mubr.bf16.mxu0 %v2680
      %3514 = vmatmul.mubr.bf16.gmra.mxu0 %v2679
      %v3515 = vpop.f32.mrf.mxu0
      %v3516 = vadd.f32 %v3227, %v3515
      %v3517 = vpop.f32.mrf.mxu0
      %v3518 = vpop.f32.mrf.mxu0
      %v3519 = vadd.f32 %v3230, %v3518
      %v3520 = vpop.f32.mrf.mxu0
      %3521 = vdwg.mxu0
      %v3522 = vtanh.pop %v3268
      %v3523 = vtanh.pop %v3271
      %v3524 = vtanh.pop %v3276
      %v3525 = vtanh.pop %v3279
      %v3526 = vtanh.pop %v3284
      %v3527 = vtanh.pop %v3287
      %v3528 = vtanh.pop %v3292
      %v3529 = vtanh.pop %v3295
      %v3530 = vtanh.pop %v3300
      %v3531 = vtanh.pop %v3303
      %v3532 = vtanh.pop %v3308
      %v3533 = vtanh.pop %v3311
      %v3534 = vtanh.pop %v3316
      %v3535 = vtanh.pop %v3319
      %v3536 = vtanh.pop %v3324
      %v3537 = vtanh.pop %v3327
      %v3538 = vtanh.pop %v3332
      %v3539 = vtanh.pop %v3335
      %v3540 = vtanh.pop %v3340
      %v3541 = vtanh.pop %v3343
      %v3542 = vtanh.pop %v3348
      %v3543 = vtanh.pop %v3351
      %v3544 = vtanh.pop %v3356
      %v3545 = vtanh.pop %v3359
      %v3546 = vtanh.pop %v3364
      %v3547 = vtanh.pop %v3367
      %v3548 = vtanh.pop %v3372
      %v3549 = vtanh.pop %v3375
      %v3550 = vtanh.pop %v3380
      %v3551 = vtanh.pop %v3383
      %v3552 = vtanh.pop %v3388
      %v3553 = vtanh.pop %v3391
      %v3554 = vtanh.pop %v3396
      %v3555 = vtanh.pop %v3399
      %v3556 = vtanh.pop %v3404
      %v3557 = vtanh.pop %v3407
      %v3558 = vtanh.pop %v3412
      %v3559 = vtanh.pop %v3415
      %v3560 = vtanh.pop %v3420
      %v3561 = vtanh.pop %v3423
      %v3562 = vtanh.pop %v3428
      %v3563 = vtanh.pop %v3431
      %v3564 = vtanh.pop %v3436
      %v3565 = vtanh.pop %v3439
      %v3566 = vtanh.pop %v3444
      %v3567 = vtanh.pop %v3447
      %v3568 = vtanh.pop %v3452
      %v3569 = vtanh.pop %v3455
      %v3570 = vtanh.pop %v3460
      %v3571 = vtanh.pop %v3463
      %v3572 = vtanh.pop %v3468
      %v3573 = vtanh.pop %v3471
      %v3574 = vtanh.pop %v3476
      %v3575 = vtanh.pop %v3479
      %v3576 = vtanh.pop %v3484
      %v3577 = vtanh.pop %v3487
      %v3578 = vtanh.pop %v3492
      %v3579 = vtanh.pop %v3495
      %v3580 = vtanh.pop %v3500
      %v3581 = vtanh.pop %v3503
      %v3582 = vtanh.pop %v3508
      %v3583 = vtanh.pop %v3511
      %v3584 = vtanh.pop %v3516
      %v3585 = vtanh.pop %v3519
      %3586 = vst [vmem:[%s280] sm:$0xff] %v3522
      %3587 = vst [vmem:[%s280 + $0x8] sm:$0xff] %v3523
      %3588 = vst [vmem:[%s280 + $0x10] sm:$0xff] %v3524
      %3589 = vst [vmem:[%s280 + $0x18] sm:$0xff] %v3525
      %3590 = vst [vmem:[%s280 + $0x20] sm:$0xff] %v3526
      %3591 = vst [vmem:[%s280 + $0x28] sm:$0xff] %v3527
      %3592 = vst [vmem:[%s280 + $0x30] sm:$0xff] %v3528
      %3593 = vst [vmem:[%s280 + $0x38] sm:$0xff] %v3529
      %3594 = vst [vmem:[%s280 + $0x40] sm:$0xff] %v3530
      %3595 = vst [vmem:[%s280 + $0x48] sm:$0xff] %v3531
      %3596 = vst [vmem:[%s280 + $0x50] sm:$0xff] %v3532
      %3597 = vst [vmem:[%s280 + $0x58] sm:$0xff] %v3533
      %3598 = vst [vmem:[%s280 + $0x60] sm:$0xff] %v3534
      %3599 = vst [vmem:[%s280 + $0x68] sm:$0xff] %v3535
      %3600 = vst [vmem:[%s280 + $0x70] sm:$0xff] %v3536
      %3601 = vst [vmem:[%s280 + $0x78] sm:$0xff] %v3537
      %3602 = vst [vmem:[%s280 + $0x80] sm:$0xff] %v3538
      %3603 = vst [vmem:[%s280 + $0x88] sm:$0xff] %v3539
      %3604 = vst [vmem:[%s280 + $0x90] sm:$0xff] %v3540
      %3605 = vst [vmem:[%s280 + $0x98] sm:$0xff] %v3541
      %3606 = vst [vmem:[%s280 + $0xa0] sm:$0xff] %v3542
      %3607 = vst [vmem:[%s280 + $0xa8] sm:$0xff] %v3543
      %3608 = vst [vmem:[%s280 + $0xb0] sm:$0xff] %v3544
      %3609 = vst [vmem:[%s280 + $0xb8] sm:$0xff] %v3545
      %3610 = vst [vmem:[%s280 + $0xc0] sm:$0xff] %v3546
      %3611 = vst [vmem:[%s280 + $0xc8] sm:$0xff] %v3547
      %3612 = vst [vmem:[%s280 + $0xd0] sm:$0xff] %v3548
      %3613 = vst [vmem:[%s280 + $0xd8] sm:$0xff] %v3549
      %3614 = vst [vmem:[%s280 + $0xe0] sm:$0xff] %v3550
      %3615 = vst [vmem:[%s280 + $0xe8] sm:$0xff] %v3551
      %3616 = vst [vmem:[%s280 + $0xf0] sm:$0xff] %v3552
      %3617 = vst [vmem:[%s280 + $0xf8] sm:$0xff] %v3553
      %3618 = vst [vmem:[%s280 + $0x100] sm:$0xff] %v3554
      %3619 = vst [vmem:[%s280 + $0x108] sm:$0xff] %v3555
      %3620 = vst [vmem:[%s280 + $0x110] sm:$0xff] %v3556
      %3621 = vst [vmem:[%s280 + $0x118] sm:$0xff] %v3557
      %3622 = vst [vmem:[%s280 + $0x120] sm:$0xff] %v3558
      %3623 = vst [vmem:[%s280 + $0x128] sm:$0xff] %v3559
      %3624 = vst [vmem:[%s280 + $0x130] sm:$0xff] %v3560
      %3625 = vst [vmem:[%s280 + $0x138] sm:$0xff] %v3561
      %3626 = vst [vmem:[%s280 + $0x140] sm:$0xff] %v3562
      %3627 = vst [vmem:[%s280 + $0x148] sm:$0xff] %v3563
      %3628 = vst [vmem:[%s280 + $0x150] sm:$0xff] %v3564
      %3629 = vst [vmem:[%s280 + $0x158] sm:$0xff] %v3565
      %3630 = vst [vmem:[%s280 + $0x160] sm:$0xff] %v3566
      %3631 = vst [vmem:[%s280 + $0x168] sm:$0xff] %v3567
      %3632 = vst [vmem:[%s280 + $0x170] sm:$0xff] %v3568
      %3633 = vst [vmem:[%s280 + $0x178] sm:$0xff] %v3569
      %3634 = vst [vmem:[%s280 + $0x180] sm:$0xff] %v3570
      %3635 = vst [vmem:[%s280 + $0x188] sm:$0xff] %v3571
      %3636 = vst [vmem:[%s280 + $0x190] sm:$0xff] %v3572
      %3637 = vst [vmem:[%s280 + $0x198] sm:$0xff] %v3573
      %3638 = vst [vmem:[%s280 + $0x1a0] sm:$0xff] %v3574
      %3639 = vst [vmem:[%s280 + $0x1a8] sm:$0xff] %v3575
      %3640 = vst [vmem:[%s280 + $0x1b0] sm:$0xff] %v3576
      %3641 = vst [vmem:[%s280 + $0x1b8] sm:$0xff] %v3577
      %3642 = vst [vmem:[%s280 + $0x1c0] sm:$0xff] %v3578
      %3643 = vst [vmem:[%s280 + $0x1c8] sm:$0xff] %v3579
      %3644 = vst [vmem:[%s280 + $0x1d0] sm:$0xff] %v3580
      %3645 = vst [vmem:[%s280 + $0x1d8] sm:$0xff] %v3581
      %3646 = vst [vmem:[%s280 + $0x1e0] sm:$0xff] %v3582
      %3647 = vst [vmem:[%s280 + $0x1e8] sm:$0xff] %v3583
      %3648 = vst [vmem:[%s280 + $0x1f0] sm:$0xff] %v3584
      %3649 = vst [vmem:[%s280 + $0x1f8] sm:$0xff] %v3585
      %s3650 = smul.u32 64, %s18
      %p3651 = scmp.lt.s32.totalorder %s3650, 127
      %s3652 = scalar_select %p3651, %s3650, 127
      %s3653 = smul.addr %s3652, 8
      %s3654 = scalar_lea.vmem %s7, %s3653
      // Predicated region
      $region49: #{generator_forward.1} parent=47 // pred_check
        %p3655 = pneg %p188
      $region50: #{generator_forward.1} parent=47 // pred_check_branch
        %3657 = sbr.rel (%p3655) target = $region52
      $region51: #{generator_forward.1} parent=47 // pred_region
        %s3658 = smul.u32 64, %s18
      $region52: #{generator_forward.1} parent=47 // pred_fallthru
        _
    $region48: #{generator_forward.1} parent=5 // pred_fallthru
      _
    %p3659 = scmp.le.s32.totalorder 2, %s13
    // Predicated region
    $region53: #{generator_forward.1} parent=5 // pred_check
      %p3660 = pneg %p3659
    $region54: #{generator_forward.1} parent=5 // pred_check_branch
      %3662 = sbr.rel (%p3660) target = $region56
    $region55: #{generator_forward.1} parent=5 // pred_region
      %s3663 = ssub.s32 %s13, 2
      // Predicated region
      $region57: #{generator_forward.1} parent=55 // pred_check
        %p3664 = pneg %p194
      $region58: #{generator_forward.1} parent=55 // pred_check_branch
        %3666 = sbr.rel (%p3664) target = $region60
      $region59: #{generator_forward.1} parent=55 // pred_region
        %s3667 = smul.u32 64, %s19
        %p3668 = scmp.lt.s32.totalorder %s3667, 127
        %s3669 = scalar_select %p3668, %s3667, 127
        %s3670 = smul.addr %s3669, 8
        %s3671 = scalar_lea.vmem %s7, %s3670
      $region60: #{generator_forward.1} parent=55 // pred_fallthru
        _
    $region56: #{generator_forward.1} parent=5 // pred_fallthru
      _
  $region6: #{generator_forward.1} parent=0 // loop_footer
    %s17 = sadd.s32 1, %s13
  $region7: #{generator_forward.1} parent=0 // loop_footer_branch
    %12 = sbr.rel target = $region3
  $region8: #{generator_forward.1} parent=0 // loop_exit
    _

</llo_original>
